<compile_context>
chip_gen: v7x
topology: tpu7x:2x2x1
jax: 0.10.0
libtpu: 0.0.40
codegen_flags: <defaults>
</compile_context>

<pallas_src>
import functools

import jax
import jax.numpy as jnp
from jax.experimental import pallas as pl
from jax.experimental.pallas import tpu as pltpu


def _silu(v):
    return v * jax.nn.sigmoid(v)


def _round_up(n, m):
    return ((n + m - 1) // m) * m


def _edge_kernel(xi_ref, xj_ref, rbf_ref, t_hi_ref, t_lo_ref,
                 w_rbf_ref, b_rbf_ref, w3_ref, b_ref, out_ref):
    tile_e = out_ref.shape[0]
    two_tables = t_hi_ref.shape[0]                    # 256 = rows of [t1; t2]

    # Fused i/j gather: combined one-hot [oh_i | oh_j] hits the resident (256, H) table on
    # the MXU.  xi selects rows [0,128) (the W1 projection), xj selects rows [128,256)
    # (the W2 projection), so a single dot yields t1[x_i] + t2[x_j].  Padded tail rows
    # carry garbage indices -> all-false rows -> zeros; their stores are clipped anyway.
    lane = jax.lax.broadcasted_iota(jnp.int32, (tile_e, two_tables), 1)
    sel = jnp.logical_or(lane == xi_ref[...], lane == xj_ref[...] + 128)
    oh = jnp.where(sel, 1.0, 0.0).astype(jnp.bfloat16)          # exact 0/1 values
    # f32-accurate gather at bf16 MXU speed: table split as t = t_hi + t_lo (both bf16),
    # f32 accumulation.
    gathered = (jnp.dot(oh, t_hi_ref[...], preferred_element_type=jnp.float32)
                + jnp.dot(oh, t_lo_ref[...], preferred_element_type=jnp.float32))

    # rbf branch: silu(lin_rbf(rbf)); rbf arrives in its producer dtype, compute in f32.
    rbf_h = _silu(jnp.dot(rbf_ref[...].astype(jnp.float32), w_rbf_ref[...],
                          preferred_element_type=jnp.float32) + b_rbf_ref[...])

    # lin(cat([x_i, x_j, rbf_h])) with the concat never materialized:
    #     out = silu(t1[x_i] + t2[x_j] + rbf_h @ W3 + b)
    h = (gathered
         + jnp.dot(rbf_h, w3_ref[...], preferred_element_type=jnp.float32)
         + b_ref[...])
    out_ref[...] = _silu(h).astype(out_ref.dtype)


def symbolic_embedding_edges(xi, xj, rbf, t_hi, t_lo, w_rbf, b_rbf, w3, b,
                             *, tile_e=4096, out_dtype=jnp.bfloat16):
    """Fused edge hot path.

    xi, xj     : (E, 1) int32  per-edge atom types x[i], x[j] (values in [0, 128))
    rbf        : (E, R)        producer dtype (f32 or bf16)
    t_hi, t_lo : (256, H) bf16 hi/lo split of [emb_table@W1 ; emb_table@W2]
    w_rbf      : (R, H) f32    w3 : (H, H) f32    b_rbf, b : (1, H) f32
    returns (E, H) `out_dtype`
    """
    E = xi.shape[0]
    R = rbf.shape[-1]
    H = w3.shape[0]
    T2 = t_hi.shape[0]

    # Tile choice: multiple of 16 (bf16 sublane packing); big enough to amortize the
    # ~0.35us/grid-step overhead (sweep 2048-8192 at scale), clamped so the 'parallel'
    # axis keeps >= 4 steps when E allows (v7x dual-TensorCore sharding).
    cap = _round_up(pl.cdiv(E, 4), 16)
    tile_e = max(16, min(_round_up(tile_e, 16), cap))
    grid = (pl.cdiv(E, tile_e),)

    edge = lambda w: pl.BlockSpec((tile_e, w), lambda e: (e, 0))
    resident = lambda shape: pl.BlockSpec(shape, lambda e: (0, 0))

    out_bytes = jnp.dtype(out_dtype).itemsize
    # Advisory hint so XLA schedules the remaining int32 glue around the custom call.
    cost = pl.CostEstimate(
        flops=2 * E * H * (2 * T2 + R + H) + 10 * E * H,
        transcendentals=2 * E * H,
        bytes_accessed=(2 * E * 4                         # xi, xj int32 columns
                        + E * R * rbf.dtype.itemsize      # rbf (producer dtype)
                        + E * H * out_bytes               # output
                        + 2 * T2 * H * 2                  # resident bf16 hi/lo tables
                        + (R * H + H * H + 2 * H) * 4),   # resident f32 weights/biases
    )

    # Per-step double-buffered VMEM ~ 2*tile_e*(8 + R*4 + H*out_bytes) B plus the
    # (tile_e,256) bf16 one-hot temporary: ~3 MiB at tile_e=4096 -> well under the scoped
    # default on v5e/v6e/v7x.
    return pl.pallas_call(
        _edge_kernel,
        out_shape=jax.ShapeDtypeStruct((E, H), out_dtype),
        grid_spec=pltpu.PrefetchScalarGridSpec(
            num_scalar_prefetch=0,
            grid=grid,
            in_specs=[
                edge(1),            # xi
                edge(1),            # xj
                edge(R),            # rbf
                resident((T2, H)),  # t_hi (bf16)
                resident((T2, H)),  # t_lo (bf16)
                resident((R, H)),   # w_rbf (f32)
                resident((1, H)),   # b_rbf (f32)
                resident((H, H)),   # w3    (f32)
                resident((1, H)),   # b     (f32)
            ],
            out_specs=edge(H),
        ),
        compiler_params=pltpu.CompilerParams(
            dimension_semantics=("parallel",)),
        cost_estimate=cost,
    )(xi, xj, rbf, t_hi, t_lo, w_rbf, b_rbf, w3, b)


def make_params(key, *, n_symbols, pattern_length, symbol_dim, num_radial):
    """Deterministic parameter init (synthetic, not a checkpoint load)."""
    H = pattern_length * symbol_dim   # emb.dim in 'concat' mode
    ks = jax.random.split(key, 4)

    # SymbolicEmbeddingsVQ: codebook of n_symbols symbol vectors; each of the 128 atom
    # types has a fixed pattern of pattern_length symbol indices; embedding is the concat.
    codebook = jax.random.normal(ks[0], (n_symbols, symbol_dim), jnp.float32)
    patterns = jax.random.randint(ks[1], (128, pattern_length), 0, n_symbols)
    emb_table = codebook[patterns].reshape(128, H)            # (128, H)

    def uniform(k, shape, fan_in):
        bound = 1.0 / jnp.sqrt(fan_in)
        return jax.random.uniform(k, shape, jnp.float32, -bound, bound)

    w_rbf = uniform(ks[2], (num_radial, H), num_radial)       # (in, out) layout
    b_rbf = jnp.zeros((1, H), jnp.float32)
    w_lin = uniform(ks[3], (3 * H, H), 3 * H)                 # (3H, H)
    b_lin = jnp.zeros((1, H), jnp.float32)

    return {
        "emb_table": emb_table,
        "w_rbf": w_rbf, "b_rbf": b_rbf,
        # row-slices of the (3H, H) `lin` weight so the concat is never materialized
        "w1": w_lin[:H], "w2": w_lin[H:2 * H], "w3": w_lin[2 * H:],
        "b": b_lin,
    }


def forward(params, x, rbf, i, j, *, tile_e=4096, out_dtype=jnp.bfloat16):
    """Full SymbolicEmbeddingBlock.forward.  x: (N,) int atom types, rbf: (E, R),
    i/j: (E,) int edge endpoints -> (E, H) `out_dtype`."""
    # Hoist W1/W2 out of the edge loop: project the 128-row atom-type table once in f32,
    # then hi/lo-split to bf16 so the in-kernel gather matmul runs at bf16 MXU speed while
    # staying f32-accurate (no bf16 pre-projection quantization).
    t1 = params["emb_table"] @ params["w1"]                   # (128, H) f32
    t2 = params["emb_table"] @ params["w2"]                   # (128, H) f32
    t_cat = jnp.concatenate([t1, t2], axis=0)                 # (256, H) f32
    t_hi = t_cat.astype(jnp.bfloat16)
    t_lo = (t_cat - t_hi.astype(jnp.float32)).astype(jnp.bfloat16)

    # Only int32 glue stays outside the kernel: per-edge atom types (4 B/edge each),
    # replacing the previous two (E, H) bf16 gather materializations.
    xi = x[i].astype(jnp.int32).reshape(-1, 1)                # (E, 1)
    xj = x[j].astype(jnp.int32).reshape(-1, 1)                # (E, 1)

    return symbolic_embedding_edges(
        xi, xj, rbf, t_hi, t_lo,
        params["w_rbf"], params["b_rbf"], params["w3"], params["b"],
        tile_e=tile_e, out_dtype=out_dtype)


def _reference(params, x, rbf, i, j):
    """Pure-JAX, module-faithful f32 reference for correctness check."""
    x_emb = params["emb_table"][x]
    rbf_h = _silu(rbf @ params["w_rbf"] + params["b_rbf"])
    w_lin = jnp.concatenate([params["w1"], params["w2"], params["w3"]], axis=0)
    cat = jnp.concatenate([x_emb[i], x_emb[j], rbf_h], axis=-1)
    return _silu(cat @ w_lin + params["b"])


if __name__ == "__main__":
    # Small shapes consistent with the module's forward.
    n_symbols = 10
    pattern_length = 4
    symbol_dim = 8            # H = 32
    num_radial = 16
    N = 64                    # atoms
    E = 1000                  # edges (non-multiple of the tile -> exercises tail clipping)

    key = jax.random.PRNGKey(0)
    kp, kx, kr, ki, kj = jax.random.split(key, 5)

    params = make_params(kp, n_symbols=n_symbols, pattern_length=pattern_length,
                         symbol_dim=symbol_dim, num_radial=num_radial)

    x = jax.random.randint(kx, (N,), 0, 128)                     # atom types
    rbf = jax.random.normal(kr, (E, num_radial), jnp.float32)    # radial basis feats
    i_idx = jax.random.randint(ki, (E,), 0, N)
    j_idx = jax.random.randint(kj, (E,), 0, N)

    # tile_e=4096 is the at-scale default; the clamp keeps >=4 parallel grid steps here.
    fwd = jax.jit(functools.partial(forward, tile_e=4096))
    out = jax.block_until_ready(fwd(params, x, rbf, i_idx, j_idx))

    ref = _reference(params, x, rbf, i_idx, j_idx)
    H = pattern_length * symbol_dim
    assert out.shape == (E, H)
    out32 = out.astype(jnp.float32)
    assert bool(jnp.all(jnp.isfinite(out32)))
    max_err = float(jnp.max(jnp.abs(out32 - ref)))
    # In-kernel math is f32 (hi/lo-split gather error ~2^-18); only the final bf16 output
    # cast is lossy -> modest tolerance.
    assert jnp.allclose(out32, ref, atol=2e-2, rtol=2e-2), f"max abs err {max_err}"

    print("KERNEL_OK")
</pallas_src>

<mosaic_0001>
module attributes {stable_mosaic.version = 11 : i64} {
  func.func @_edge_kernel(%arg0: i32, %arg1: memref<256x1xi32, #tpu.memory_space<vmem>>, %arg2: memref<256x1xi32, #tpu.memory_space<vmem>>, %arg3: memref<256x16xf32, #tpu.memory_space<vmem>>, %arg4: memref<256x32xbf16, #tpu.memory_space<vmem>>, %arg5: memref<256x32xbf16, #tpu.memory_space<vmem>>, %arg6: memref<16x32xf32, #tpu.memory_space<vmem>>, %arg7: memref<1x32xf32, #tpu.memory_space<vmem>>, %arg8: memref<32x32xf32, #tpu.memory_space<vmem>>, %arg9: memref<1x32xf32, #tpu.memory_space<vmem>>, %arg10: memref<256x32xbf16, #tpu.memory_space<vmem>>) attributes {dimension_semantics = [#tpu.dimension_semantics<parallel>], iteration_bounds = array<i64: 4>, scalar_prefetch = 0 : i64, scratch_operands = 0 : i64, tpu.core_type = #tpu.core_type<tc>, window_params = [{transform_indices = @transform_0, window_bounds = array<i64: 256, 1>}, {transform_indices = @transform_1, window_bounds = array<i64: 256, 1>}, {transform_indices = @transform_2, window_bounds = array<i64: 256, 16>}, {pipeline_mode = #tpu.pipeline_mode<synchronous>, transform_indices = @transform_3, window_bounds = array<i64: 256, 32>}, {pipeline_mode = #tpu.pipeline_mode<synchronous>, transform_indices = @transform_4, window_bounds = array<i64: 256, 32>}, {pipeline_mode = #tpu.pipeline_mode<synchronous>, transform_indices = @transform_5, window_bounds = array<i64: 16, 32>}, {pipeline_mode = #tpu.pipeline_mode<synchronous>, transform_indices = @transform_6, window_bounds = array<i64: 1, 32>}, {pipeline_mode = #tpu.pipeline_mode<synchronous>, transform_indices = @transform_7, window_bounds = array<i64: 32, 32>}, {pipeline_mode = #tpu.pipeline_mode<synchronous>, transform_indices = @transform_8, window_bounds = array<i64: 1, 32>}, {transform_indices = @transform_9, window_bounds = array<i64: 256, 32>}]} {
    %0 = tpu.iota {dimensions = array<i32: 1>} : vector<256x256xi32>
    %c0 = arith.constant 0 : index
    %c0_0 = arith.constant 0 : index
    %1 = vector.load %arg1[%c0, %c0_0] : memref<256x1xi32, #tpu.memory_space<vmem>>, vector<256x1xi32>
    %2 = vector.broadcast %1 : vector<256x1xi32> to vector<256x256xi32>
    %3 = arith.cmpi eq, %0, %2 : vector<256x256xi32>
    %c0_1 = arith.constant 0 : index
    %c0_2 = arith.constant 0 : index
    %4 = vector.load %arg2[%c0_1, %c0_2] : memref<256x1xi32, #tpu.memory_space<vmem>>, vector<256x1xi32>
    %c128_i32 = arith.constant 128 : i32
    %5 = vector.broadcast %c128_i32 : i32 to vector<256x1xi32>
    %6 = arith.addi %4, %5 : vector<256x1xi32>
    %7 = vector.broadcast %6 : vector<256x1xi32> to vector<256x256xi32>
    %8 = arith.cmpi eq, %0, %7 : vector<256x256xi32>
    %9 = arith.ori %3, %8 : vector<256x256xi1>
    %cst = arith.constant 1.000000e+00 : f32
    %cst_3 = arith.constant 0.000000e+00 : f32
    %10 = vector.broadcast %cst : f32 to vector<256x256xf32>
    %11 = vector.broadcast %cst_3 : f32 to vector<256x256xf32>
    %12 = arith.select %9, %10, %11 : vector<256x256xi1>, vector<256x256xf32>
    %13 = arith.truncf %12 : vector<256x256xf32> to vector<256x256xbf16>
    %c0_4 = arith.constant 0 : index
    %c0_5 = arith.constant 0 : index
    %14 = vector.load %arg4[%c0_4, %c0_5] : memref<256x32xbf16, #tpu.memory_space<vmem>>, vector<256x32xbf16>
    %cst_6 = arith.constant dense<0.000000e+00> : vector<256x32xf32>
    %15 = tpu.matmul %13, %14, %cst_6 {dimension_numbers = #tpu.dot_dimension_numbers<[1], [0], [0], [1], [0, 0, 1, 1], [], []>} : vector<256x256xbf16>, vector<256x32xbf16>, vector<256x32xf32> -> vector<256x32xf32>
    %c0_7 = arith.constant 0 : index
    %c0_8 = arith.constant 0 : index
    %16 = vector.load %arg5[%c0_7, %c0_8] : memref<256x32xbf16, #tpu.memory_space<vmem>>, vector<256x32xbf16>
    %cst_9 = arith.constant dense<0.000000e+00> : vector<256x32xf32>
    %17 = tpu.matmul %13, %16, %cst_9 {dimension_numbers = #tpu.dot_dimension_numbers<[1], [0], [0], [1], [0, 0, 1, 1], [], []>} : vector<256x256xbf16>, vector<256x32xbf16>, vector<256x32xf32> -> vector<256x32xf32>
    %18 = arith.addf %15, %17 : vector<256x32xf32>
    %c0_10 = arith.constant 0 : index
    %c0_11 = arith.constant 0 : index
    %19 = vector.load %arg3[%c0_10, %c0_11] : memref<256x16xf32, #tpu.memory_space<vmem>>, vector<256x16xf32>
    %c0_12 = arith.constant 0 : index
    %c0_13 = arith.constant 0 : index
    %20 = vector.load %arg6[%c0_12, %c0_13] : memref<16x32xf32, #tpu.memory_space<vmem>>, vector<16x32xf32>
    %cst_14 = arith.constant dense<0.000000e+00> : vector<256x32xf32>
    %21 = tpu.matmul %19, %20, %cst_14 {dimension_numbers = #tpu.dot_dimension_numbers<[1], [0], [0], [1], [0, 0, 1, 1], [], []>} : vector<256x16xf32>, vector<16x32xf32>, vector<256x32xf32> -> vector<256x32xf32>
    %c0_15 = arith.constant 0 : index
    %c0_16 = arith.constant 0 : index
    %22 = vector.load %arg7[%c0_15, %c0_16] : memref<1x32xf32, #tpu.memory_space<vmem>>, vector<1x32xf32>
    %23 = vector.broadcast %22 : vector<1x32xf32> to vector<256x32xf32>
    %24 = arith.addf %21, %23 : vector<256x32xf32>
    %25 = arith.negf %24 : vector<256x32xf32>
    %26 = math.exp %25 : vector<256x32xf32>
    %cst_17 = arith.constant 1.000000e+00 : f32
    %27 = vector.broadcast %cst_17 : f32 to vector<256x32xf32>
    %28 = arith.addf %27, %26 : vector<256x32xf32>
    %29 = arith.divf %27, %28 : vector<256x32xf32>
    %30 = arith.mulf %24, %29 : vector<256x32xf32>
    %c0_18 = arith.constant 0 : index
    %c0_19 = arith.constant 0 : index
    %31 = vector.load %arg8[%c0_18, %c0_19] : memref<32x32xf32, #tpu.memory_space<vmem>>, vector<32x32xf32>
    %cst_20 = arith.constant dense<0.000000e+00> : vector<256x32xf32>
    %32 = tpu.matmul %30, %31, %cst_20 {dimension_numbers = #tpu.dot_dimension_numbers<[1], [0], [0], [1], [0, 0, 1, 1], [], []>} : vector<256x32xf32>, vector<32x32xf32>, vector<256x32xf32> -> vector<256x32xf32>
    %33 = arith.addf %18, %32 : vector<256x32xf32>
    %c0_21 = arith.constant 0 : index
    %c0_22 = arith.constant 0 : index
    %34 = vector.load %arg9[%c0_21, %c0_22] : memref<1x32xf32, #tpu.memory_space<vmem>>, vector<1x32xf32>
    %35 = vector.broadcast %34 : vector<1x32xf32> to vector<256x32xf32>
    %36 = arith.addf %33, %35 : vector<256x32xf32>
    %37 = arith.negf %36 : vector<256x32xf32>
    %38 = math.exp %37 : vector<256x32xf32>
    %cst_23 = arith.constant 1.000000e+00 : f32
    %39 = vector.broadcast %cst_23 : f32 to vector<256x32xf32>
    %40 = arith.addf %39, %38 : vector<256x32xf32>
    %41 = arith.divf %39, %40 : vector<256x32xf32>
    %42 = arith.mulf %36, %41 : vector<256x32xf32>
    %43 = arith.truncf %42 : vector<256x32xf32> to vector<256x32xbf16>
    %c0_24 = arith.constant 0 : index
    %c0_25 = arith.constant 0 : index
    %44 = vector.load %arg10[%c0_24, %c0_25] : memref<256x32xbf16, #tpu.memory_space<vmem>>, vector<256x32xbf16>
    tpu.vector_store %arg10[%c0_24, %c0_25], %43 {strides = array<i32>} : memref<256x32xbf16, #tpu.memory_space<vmem>>, vector<256x32xbf16>,
    return
  }
  func.func @transform_0(%arg0: i32) -> (i32, i32) {
    %c0_i32 = arith.constant 0 : i32
    %c0_i32_0 = arith.constant 0 : i32
    return %arg0, %c0_i32 : i32, i32
  }
  func.func @transform_1(%arg0: i32) -> (i32, i32) {
    %c0_i32 = arith.constant 0 : i32
    %c0_i32_0 = arith.constant 0 : i32
    return %arg0, %c0_i32 : i32, i32
  }
  func.func @transform_2(%arg0: i32) -> (i32, i32) {
    %c0_i32 = arith.constant 0 : i32
    %c0_i32_0 = arith.constant 0 : i32
    return %arg0, %c0_i32 : i32, i32
  }
  func.func @transform_3(%arg0: i32) -> (i32, i32) {
    %c0_i32 = arith.constant 0 : i32
    %c0_i32_0 = arith.constant 0 : i32
    %c0_i32_1 = arith.constant 0 : i32
    return %c0_i32, %c0_i32_0 : i32, i32
  }
  func.func @transform_4(%arg0: i32) -> (i32, i32) {
    %c0_i32 = arith.constant 0 : i32
    %c0_i32_0 = arith.constant 0 : i32
    %c0_i32_1 = arith.constant 0 : i32
    return %c0_i32, %c0_i32_0 : i32, i32
  }
  func.func @transform_5(%arg0: i32) -> (i32, i32) {
    %c0_i32 = arith.constant 0 : i32
    %c0_i32_0 = arith.constant 0 : i32
    %c0_i32_1 = arith.constant 0 : i32
    return %c0_i32, %c0_i32_0 : i32, i32
  }
  func.func @transform_6(%arg0: i32) -> (i32, i32) {
    %c0_i32 = arith.constant 0 : i32
    %c0_i32_0 = arith.constant 0 : i32
    %c0_i32_1 = arith.constant 0 : i32
    return %c0_i32, %c0_i32_0 : i32, i32
  }
  func.func @transform_7(%arg0: i32) -> (i32, i32) {
    %c0_i32 = arith.constant 0 : i32
    %c0_i32_0 = arith.constant 0 : i32
    %c0_i32_1 = arith.constant 0 : i32
    return %c0_i32, %c0_i32_0 : i32, i32
  }
  func.func @transform_8(%arg0: i32) -> (i32, i32) {
    %c0_i32 = arith.constant 0 : i32
    %c0_i32_0 = arith.constant 0 : i32
    %c0_i32_1 = arith.constant 0 : i32
    return %c0_i32, %c0_i32_0 : i32, i32
  }
  func.func @transform_9(%arg0: i32) -> (i32, i32) {
    %c0_i32 = arith.constant 0 : i32
    %c0_i32_0 = arith.constant 0 : i32
    return %arg0, %c0_i32 : i32, i32
  }
}

</mosaic_0001>

<llo_original>
// kernel: forward.1
$region0: #{forward.1}
  #allocation0 [shape = 'u32[]', space=smem, size = 0x4, offset = 0x4, fixed_abs, tag = 'smem constant byte address 0x4 - core index']
  #allocation1 [shape = 'u32[144,128]{1,0:T(1,128)}', space=vmem, size = 0x12000, scoped, tag = 'internal scratch']
  %s0 = inlined_call_operand.vmem [shape: s32[1000,1], index: 0, kind: input, shape index: {}]
  %s1 = inlined_call_operand.vmem [shape: s32[1000,1], index: 1, kind: input, shape index: {}]
  %s2 = inlined_call_operand.vmem [shape: f32[1000,16], index: 2, kind: input, shape index: {}]
  %s3 = inlined_call_operand.vmem [shape: bf16[256,32], index: 3, kind: input, shape index: {}]
  %s4 = inlined_call_operand.vmem [shape: bf16[256,32], index: 4, kind: input, shape index: {}]
  %s5 = inlined_call_operand.vmem [shape: f32[16,32], index: 5, kind: input, shape index: {}]
  %s6 = inlined_call_operand.vmem [shape: f32[1,32], index: 6, kind: input, shape index: {}]
  %s7 = inlined_call_operand.vmem [shape: f32[32,32], index: 7, kind: input, shape index: {}]
  %s8 = inlined_call_operand.vmem [shape: f32[1,32], index: 8, kind: input, shape index: {}]
  %s9 = inlined_call_operand.vmem [shape: bf16[1000,32], index: 9, kind: output, shape index: {}]
  %s10 = sld [smem:[#allocation0]]
  $region113: #{forward.1} parent=0
    _
  %s12 = ssub.s32 1, %s10
  %s13 = scalar_select 0, %s12, %s10
  $region1: #{forward.1} parent=0
    #allocation2 [shape = 'u8[131072]{0}', space=vmem, size = 0x20000, scoped, tag = 'output window, operand 0']
    loop: start=0, step=1, limit=6
    $region2: #{forward.1} parent=1 // loop_pre_header
      _
    $region3: #{forward.1} parent=1 // loop_header
      %s15 = sphi 0, %s19
      %p16 = scmp.ge.s32.totalorder %s15, 6
      %s25 = sphi 0, %s27
      %s28 = sphi 0, %s25
      %s29 = sphi 0, %s28
      %s45 = sphi 0, %s29
      %s51 = sphi 0, %s53
      %s54 = sphi 0, %s51
      %s55 = sphi 0, %s54
      %s71 = sphi 0, %s55
      %s77 = sphi 0, %s79
      %s80 = sphi 0, %s77
      %s81 = sphi 0, %s80
      %s97 = sphi 0, %s81
      %s101 = sphi 0, %s101
      %s103 = sphi 0, %s101
      %s104 = sphi 0, %s103
      %s118 = sphi 0, %s104
      %s122 = sphi 0, %s122
      %s124 = sphi 0, %s122
      %s125 = sphi 0, %s124
      %s139 = sphi 0, %s125
      %s143 = sphi 0, %s143
      %s145 = sphi 0, %s143
      %s146 = sphi 0, %s145
      %s160 = sphi 0, %s146
      %s164 = sphi 0, %s164
      %s166 = sphi 0, %s164
      %s167 = sphi 0, %s166
      %s181 = sphi 0, %s167
      %s185 = sphi 0, %s185
      %s187 = sphi 0, %s185
      %s188 = sphi 0, %s187
      %s202 = sphi 0, %s188
      %s206 = sphi 0, %s206
      %s208 = sphi 0, %s206
      %s209 = sphi 0, %s208
      %s223 = sphi 0, %s209
      %s229 = sphi 0, %s231
      %s232 = sphi 0, %s229
      %s233 = sphi 0, %s232
      %s249 = sphi 0, %s233
    $region4: #{forward.1} parent=1 // loop_header_branch
      %18 = sbr.rel (%p16) target = $region8
    $region5: #{forward.1} parent=1 // loop_body
      %s20 = ssub.s32 %s15, 1
      %s21 = ssub.s32 %s15, 2
      %s22 = sadd.s32 %s15, 1
      %s23 = ssub.s32 %s15, %s22
      %p24 = scmp.eq.s32.totalorder %s23, 0
      %s26 = sadd.s32 %s25, 1
      %s27 = scalar_select %p24, %s25, %s26
      %p30 = pneg %p24
      %p31 = scmp.eq.s32.totalorder %s15, 3
      %p32 = por %p30, %p31
      %p33 = scmp.ne.s32.totalorder %s25, %s28
      %p34 = scmp.eq.s32.totalorder %s15, 0
      %p35 = por %p33, %p34
      %p36 = scmp.ne.s32.totalorder %s25, %s28
      %p37 = scmp.eq.s32.totalorder %s20, 3
      %p38 = por %p36, %p37
      %p39 = scmp.ne.s32.totalorder %s28, %s29
      %p40 = scmp.eq.s32.totalorder %s20, 0
      %p41 = por %p39, %p40
      %p42 = scmp.ne.s32.totalorder %s28, %s29
      %p43 = scmp.eq.s32.totalorder %s21, 3
      %p44 = por %p42, %p43
      %p46 = scmp.ne.s32.totalorder %s29, %s45
      %p47 = scmp.eq.s32.totalorder %s21, 0
      %p48 = por %p46, %p47
      %s49 = ssub.s32 %s15, %s22
      %p50 = scmp.eq.s32.totalorder %s49, 0
      %s52 = sadd.s32 %s51, 1
      %s53 = scalar_select %p50, %s51, %s52
      %p56 = pneg %p50
      %p57 = scmp.eq.s32.totalorder %s15, 3
      %p58 = por %p56, %p57
      %p59 = scmp.ne.s32.totalorder %s51, %s54
      %p60 = scmp.eq.s32.totalorder %s15, 0
      %p61 = por %p59, %p60
      %p62 = scmp.ne.s32.totalorder %s51, %s54
      %p63 = scmp.eq.s32.totalorder %s20, 3
      %p64 = por %p62, %p63
      %p65 = scmp.ne.s32.totalorder %s54, %s55
      %p66 = scmp.eq.s32.totalorder %s20, 0
      %p67 = por %p65, %p66
      %p68 = scmp.ne.s32.totalorder %s54, %s55
      %p69 = scmp.eq.s32.totalorder %s21, 3
      %p70 = por %p68, %p69
      %p72 = scmp.ne.s32.totalorder %s55, %s71
      %p73 = scmp.eq.s32.totalorder %s21, 0
      %p74 = por %p72, %p73
      %s75 = ssub.s32 %s15, %s22
      %p76 = scmp.eq.s32.totalorder %s75, 0
      %s78 = sadd.s32 %s77, 1
      %s79 = scalar_select %p76, %s77, %s78
      %p82 = pneg %p76
      %p83 = scmp.eq.s32.totalorder %s15, 3
      %p84 = por %p82, %p83
      %p85 = scmp.ne.s32.totalorder %s77, %s80
      %p86 = scmp.eq.s32.totalorder %s15, 0
      %p87 = por %p85, %p86
      %p88 = scmp.ne.s32.totalorder %s77, %s80
      %p89 = scmp.eq.s32.totalorder %s20, 3
      %p90 = por %p88, %p89
      %p91 = scmp.ne.s32.totalorder %s80, %s81
      %p92 = scmp.eq.s32.totalorder %s20, 0
      %p93 = por %p91, %p92
      %p94 = scmp.ne.s32.totalorder %s80, %s81
      %p95 = scmp.eq.s32.totalorder %s21, 3
      %p96 = por %p94, %p95
      %p98 = scmp.ne.s32.totalorder %s81, %s97
      %p99 = scmp.eq.s32.totalorder %s21, 0
      %p100 = por %p98, %p99
      %s102 = sadd.s32 %s101, 1
      %p105 = scmp.eq.s32.totalorder %s15, 3
      %p106 = scmp.ne.s32.totalorder %s101, %s103
      %p107 = scmp.eq.s32.totalorder %s15, 0
      %p108 = por %p106, %p107
      %p109 = scmp.ne.s32.totalorder %s101, %s103
      %p110 = scmp.eq.s32.totalorder %s20, 3
      %p111 = por %p109, %p110
      %p112 = scmp.ne.s32.totalorder %s103, %s104
      %p113 = scmp.eq.s32.totalorder %s20, 0
      %p114 = por %p112, %p113
      %p115 = scmp.ne.s32.totalorder %s103, %s104
      %p116 = scmp.eq.s32.totalorder %s21, 3
      %p117 = por %p115, %p116
      %p119 = scmp.ne.s32.totalorder %s104, %s118
      %p120 = scmp.eq.s32.totalorder %s21, 0
      %p121 = por %p119, %p120
      %s123 = sadd.s32 %s122, 1
      %p126 = scmp.eq.s32.totalorder %s15, 3
      %p127 = scmp.ne.s32.totalorder %s122, %s124
      %p128 = scmp.eq.s32.totalorder %s15, 0
      %p129 = por %p127, %p128
      %p130 = scmp.ne.s32.totalorder %s122, %s124
      %p131 = scmp.eq.s32.totalorder %s20, 3
      %p132 = por %p130, %p131
      %p133 = scmp.ne.s32.totalorder %s124, %s125
      %p134 = scmp.eq.s32.totalorder %s20, 0
      %p135 = por %p133, %p134
      %p136 = scmp.ne.s32.totalorder %s124, %s125
      %p137 = scmp.eq.s32.totalorder %s21, 3
      %p138 = por %p136, %p137
      %p140 = scmp.ne.s32.totalorder %s125, %s139
      %p141 = scmp.eq.s32.totalorder %s21, 0
      %p142 = por %p140, %p141
      %s144 = sadd.s32 %s143, 1
      %p147 = scmp.eq.s32.totalorder %s15, 3
      %p148 = scmp.ne.s32.totalorder %s143, %s145
      %p149 = scmp.eq.s32.totalorder %s15, 0
      %p150 = por %p148, %p149
      %p151 = scmp.ne.s32.totalorder %s143, %s145
      %p152 = scmp.eq.s32.totalorder %s20, 3
      %p153 = por %p151, %p152
      %p154 = scmp.ne.s32.totalorder %s145, %s146
      %p155 = scmp.eq.s32.totalorder %s20, 0
      %p156 = por %p154, %p155
      %p157 = scmp.ne.s32.totalorder %s145, %s146
      %p158 = scmp.eq.s32.totalorder %s21, 3
      %p159 = por %p157, %p158
      %p161 = scmp.ne.s32.totalorder %s146, %s160
      %p162 = scmp.eq.s32.totalorder %s21, 0
      %p163 = por %p161, %p162
      %s165 = sadd.s32 %s164, 1
      %p168 = scmp.eq.s32.totalorder %s15, 3
      %p169 = scmp.ne.s32.totalorder %s164, %s166
      %p170 = scmp.eq.s32.totalorder %s15, 0
      %p171 = por %p169, %p170
      %p172 = scmp.ne.s32.totalorder %s164, %s166
      %p173 = scmp.eq.s32.totalorder %s20, 3
      %p174 = por %p172, %p173
      %p175 = scmp.ne.s32.totalorder %s166, %s167
      %p176 = scmp.eq.s32.totalorder %s20, 0
      %p177 = por %p175, %p176
      %p178 = scmp.ne.s32.totalorder %s166, %s167
      %p179 = scmp.eq.s32.totalorder %s21, 3
      %p180 = por %p178, %p179
      %p182 = scmp.ne.s32.totalorder %s167, %s181
      %p183 = scmp.eq.s32.totalorder %s21, 0
      %p184 = por %p182, %p183
      %s186 = sadd.s32 %s185, 1
      %p189 = scmp.eq.s32.totalorder %s15, 3
      %p190 = scmp.ne.s32.totalorder %s185, %s187
      %p191 = scmp.eq.s32.totalorder %s15, 0
      %p192 = por %p190, %p191
      %p193 = scmp.ne.s32.totalorder %s185, %s187
      %p194 = scmp.eq.s32.totalorder %s20, 3
      %p195 = por %p193, %p194
      %p196 = scmp.ne.s32.totalorder %s187, %s188
      %p197 = scmp.eq.s32.totalorder %s20, 0
      %p198 = por %p196, %p197
      %p199 = scmp.ne.s32.totalorder %s187, %s188
      %p200 = scmp.eq.s32.totalorder %s21, 3
      %p201 = por %p199, %p200
      %p203 = scmp.ne.s32.totalorder %s188, %s202
      %p204 = scmp.eq.s32.totalorder %s21, 0
      %p205 = por %p203, %p204
      %s207 = sadd.s32 %s206, 1
      %p210 = scmp.eq.s32.totalorder %s15, 3
      %p211 = scmp.ne.s32.totalorder %s206, %s208
      %p212 = scmp.eq.s32.totalorder %s15, 0
      %p213 = por %p211, %p212
      %p214 = scmp.ne.s32.totalorder %s206, %s208
      %p215 = scmp.eq.s32.totalorder %s20, 3
      %p216 = por %p214, %p215
      %p217 = scmp.ne.s32.totalorder %s208, %s209
      %p218 = scmp.eq.s32.totalorder %s20, 0
      %p219 = por %p217, %p218
      %p220 = scmp.ne.s32.totalorder %s208, %s209
      %p221 = scmp.eq.s32.totalorder %s21, 3
      %p222 = por %p220, %p221
      %p224 = scmp.ne.s32.totalorder %s209, %s223
      %p225 = scmp.eq.s32.totalorder %s21, 0
      %p226 = por %p224, %p225
      %s227 = ssub.s32 %s15, %s22
      %p228 = scmp.eq.s32.totalorder %s227, 0
      %s230 = sadd.s32 %s229, 1
      %s231 = scalar_select %p228, %s229, %s230
      %p234 = pneg %p228
      %p235 = scmp.eq.s32.totalorder %s15, 3
      %p236 = por %p234, %p235
      %p237 = scmp.ne.s32.totalorder %s229, %s232
      %p238 = scmp.eq.s32.totalorder %s15, 0
      %p239 = por %p237, %p238
      %p240 = scmp.ne.s32.totalorder %s229, %s232
      %p241 = scmp.eq.s32.totalorder %s20, 3
      %p242 = por %p240, %p241
      %p243 = scmp.ne.s32.totalorder %s232, %s233
      %p244 = scmp.eq.s32.totalorder %s20, 0
      %p245 = por %p243, %p244
      %p246 = scmp.ne.s32.totalorder %s232, %s233
      %p247 = scmp.eq.s32.totalorder %s21, 3
      %p248 = por %p246, %p247
      %p250 = scmp.ne.s32.totalorder %s233, %s249
      %p251 = scmp.eq.s32.totalorder %s21, 0
      %p252 = por %p250, %p251
      %p253 = scmp.le.s32.totalorder 1, %s15
      %p254 = scmp.lt.s32.totalorder %s15, 5
      %p255 = pnand %p253, %p254
      %p256 = pneg %p255
      // Predicated region
      $region9: #{forward.1} parent=5 // pred_check
        _
      $region10: #{forward.1} parent=5 // pred_check_branch
        %258 = sbr.rel (%p255) target = $region12
      $region11: #{forward.1} parent=5 // pred_region
        %s259 = ssub.s32 %s15, 1
        // Predicated region
        $region13: #{forward.1} parent=11 // pred_check
          %p260 = pneg %p114
        $region14: #{forward.1} parent=11 // pred_check_branch
          %262 = sbr.rel (%p260) target = $region16
        $region15: #{forward.1} parent=11 // pred_region
          _
        $region16: #{forward.1} parent=11 // pred_fallthru
          _
        // Predicated region
        $region17: #{forward.1} parent=11 // pred_check
          %p263 = pneg %p135
        $region18: #{forward.1} parent=11 // pred_check_branch
          %265 = sbr.rel (%p263) target = $region20
        $region19: #{forward.1} parent=11 // pred_region
          _
        $region20: #{forward.1} parent=11 // pred_fallthru
          _
        // Predicated region
        $region21: #{forward.1} parent=11 // pred_check
          %p266 = pneg %p156
        $region22: #{forward.1} parent=11 // pred_check_branch
          %268 = sbr.rel (%p266) target = $region24
        $region23: #{forward.1} parent=11 // pred_region
          _
        $region24: #{forward.1} parent=11 // pred_fallthru
          _
        // Predicated region
        $region25: #{forward.1} parent=11 // pred_check
          %p269 = pneg %p177
        $region26: #{forward.1} parent=11 // pred_check_branch
          %271 = sbr.rel (%p269) target = $region28
        $region27: #{forward.1} parent=11 // pred_region
          _
        $region28: #{forward.1} parent=11 // pred_fallthru
          _
        // Predicated region
        $region29: #{forward.1} parent=11 // pred_check
          %p272 = pneg %p198
        $region30: #{forward.1} parent=11 // pred_check_branch
          %274 = sbr.rel (%p272) target = $region32
        $region31: #{forward.1} parent=11 // pred_region
          _
        $region32: #{forward.1} parent=11 // pred_fallthru
          _
        // Predicated region
        $region33: #{forward.1} parent=11 // pred_check
          %p275 = pneg %p219
        $region34: #{forward.1} parent=11 // pred_check_branch
          %277 = sbr.rel (%p275) target = $region36
        $region35: #{forward.1} parent=11 // pred_region
          _
        $region36: #{forward.1} parent=11 // pred_fallthru
          _
      $region12: #{forward.1} parent=5 // pred_fallthru
        _
      %p278 = scmp.lt.s32.totalorder %s15, 4
      // Predicated region
      $region37: #{forward.1} parent=5 // pred_check
        %p279 = pneg %p278
      $region38: #{forward.1} parent=5 // pred_check_branch
        %281 = sbr.rel (%p279) target = $region40
      $region39: #{forward.1} parent=5 // pred_region
        // Predicated region
        $region41: #{forward.1} parent=39 // pred_check
          %p282 = pneg %p35
        $region42: #{forward.1} parent=39 // pred_check_branch
          %284 = sbr.rel (%p282) target = $region44
        $region43: #{forward.1} parent=39 // pred_region
          %s285 = smul.u32 32, %s15
          %s286 = ssub.s32 125, %s285
          %p287 = scmp.lt.s32.totalorder %s286, 32
          %s288 = scalar_select %p287, %s286, 32
          %s289 = smul.u32 128, %s288
          %p290 = scmp.lt.s32.totalorder %s285, 124
          %s291 = scalar_select %p290, %s285, 124
          %s292 = smul.addr %s291, 8
          %s293 = scalar_lea.vmem %s0, %s292
          %s294 = smul.u32 32, %s15
          %s295 = ssub.s32 125, %s294
          %p296 = scmp.lt.s32.totalorder %s295, 32
          %s297 = scalar_select %p296, %s295, 32
          %s298 = smul.u32 128, %s297
        $region44: #{forward.1} parent=39 // pred_fallthru
          _
        // Predicated region
        $region45: #{forward.1} parent=39 // pred_check
          %p299 = pneg %p61
        $region46: #{forward.1} parent=39 // pred_check_branch
          %301 = sbr.rel (%p299) target = $region48
        $region47: #{forward.1} parent=39 // pred_region
          %s302 = smul.u32 32, %s15
          %s303 = ssub.s32 125, %s302
          %p304 = scmp.lt.s32.totalorder %s303, 32
          %s305 = scalar_select %p304, %s303, 32
          %s306 = smul.u32 128, %s305
          %p307 = scmp.lt.s32.totalorder %s302, 124
          %s308 = scalar_select %p307, %s302, 124
          %s309 = smul.addr %s308, 8
          %s310 = scalar_lea.vmem %s1, %s309
          %s311 = smul.u32 32, %s15
          %s312 = ssub.s32 125, %s311
          %p313 = scmp.lt.s32.totalorder %s312, 32
          %s314 = scalar_select %p313, %s312, 32
          %s315 = smul.u32 128, %s314
        $region48: #{forward.1} parent=39 // pred_fallthru
          _
        // Predicated region
        $region49: #{forward.1} parent=39 // pred_check
          %p316 = pneg %p87
        $region50: #{forward.1} parent=39 // pred_check_branch
          %318 = sbr.rel (%p316) target = $region52
        $region51: #{forward.1} parent=39 // pred_region
          %s319 = smul.u32 32, %s15
          %s320 = ssub.s32 125, %s319
          %p321 = scmp.lt.s32.totalorder %s320, 32
          %s322 = scalar_select %p321, %s320, 32
          %s323 = smul.u32 128, %s322
          %p324 = scmp.lt.s32.totalorder %s319, 124
          %s325 = scalar_select %p324, %s319, 124
          %s326 = smul.addr %s325, 8
          %s327 = scalar_lea.vmem %s2, %s326
          %s328 = smul.u32 32, %s15
          %s329 = ssub.s32 125, %s328
          %p330 = scmp.lt.s32.totalorder %s329, 32
          %s331 = scalar_select %p330, %s329, 32
          %s332 = smul.u32 128, %s331
        $region52: #{forward.1} parent=39 // pred_fallthru
          _
      $region40: #{forward.1} parent=5 // pred_fallthru
        _
      %p333 = scmp.le.s32.totalorder 1, %s15
      %p334 = scmp.lt.s32.totalorder %s15, 5
      %p335 = pnand %p333, %p334
      %p336 = pneg %p335
      // Predicated region
      $region53: #{forward.1} parent=5 // pred_check
        _
      $region54: #{forward.1} parent=5 // pred_check_branch
        %338 = sbr.rel (%p335) target = $region56
      $region55: #{forward.1} parent=5 // pred_region
        %s339 = ssub.s32 %s15, 1
        %s340 = smul.u32 32, %s20
        %s341 = ssub.s32 125, %s340
        %p342 = scmp.lt.s32.totalorder %s341, 32
        %s343 = scalar_select %p342, %s341, 32
        %s344 = smul.u32 128, %s343
        %p345 = scmp.lt.s32.totalorder %s340, 124
        %s346 = scalar_select %p345, %s340, 124
        %s347 = smul.addr %s346, 8
        %s348 = scalar_lea.vmem %s0, %s347
        %p349 = pneg %p41
        %p350 = pneg %p38
        %s351 = smul.u32 32, %s20
        %s352 = ssub.s32 125, %s351
        %p353 = scmp.lt.s32.totalorder %s352, 32
        %s354 = scalar_select %p353, %s352, 32
        %s355 = smul.u32 128, %s354
        %p356 = scmp.lt.s32.totalorder %s351, 124
        %s357 = scalar_select %p356, %s351, 124
        %s358 = smul.addr %s357, 8
        %s359 = scalar_lea.vmem %s1, %s358
        %p360 = pneg %p67
        %p361 = pneg %p64
        %s362 = smul.u32 32, %s20
        %s363 = ssub.s32 125, %s362
        %p364 = scmp.lt.s32.totalorder %s363, 32
        %s365 = scalar_select %p364, %s363, 32
        %s366 = smul.u32 128, %s365
        %p367 = scmp.lt.s32.totalorder %s362, 124
        %s368 = scalar_select %p367, %s362, 124
        %s369 = smul.addr %s368, 8
        %s370 = scalar_lea.vmem %s2, %s369
        %p371 = pneg %p93
        %p372 = pneg %p90
        %p373 = pneg %p114
        %p374 = pneg %p111
        %p375 = pneg %p135
        %p376 = pneg %p132
        %p377 = pneg %p156
        %p378 = pneg %p153
        %p379 = pneg %p177
        %p380 = pneg %p174
        %p381 = pneg %p198
        %p382 = pneg %p195
        %p383 = pneg %p219
        %p384 = pneg %p216
        %p385 = pneg %p245
        %p386 = pneg %p242
        %s387 = sand.u32 %s232, 1
        %s388 = sand.u32 %s232, 1
        %s389 = smul.addr %s388, 128
        %s390 = scalar_lea.vmem [#allocation2], %s389
        %s391 = smul.u32 32, %s20
        %s392 = ssub.s32 125, %s391
        %p393 = scmp.lt.s32.totalorder %s392, 32
        %s394 = scalar_select %p393, %s392, 32
        %s395 = smul.u32 128, %s394
        %p396 = scmp.lt.s32.totalorder %s391, 124
        %s397 = scalar_select %p396, %s391, 124
        %s398 = smul.addr %s397, 8
        %s399 = scalar_lea.vmem %s0, %s398
        %s400 = smul.u32 32, %s20
        %s401 = ssub.s32 125, %s400
        %p402 = scmp.lt.s32.totalorder %s401, 32
        %s403 = scalar_select %p402, %s401, 32
        %s404 = smul.u32 128, %s403
        %s405 = smul.u32 32, %s20
        %s406 = ssub.s32 125, %s405
        %p407 = scmp.lt.s32.totalorder %s406, 32
        %s408 = scalar_select %p407, %s406, 32
        %s409 = smul.u32 128, %s408
        %p410 = scmp.lt.s32.totalorder %s405, 124
        %s411 = scalar_select %p410, %s405, 124
        %s412 = smul.addr %s411, 8
        %s413 = scalar_lea.vmem %s1, %s412
        %s414 = smul.u32 32, %s20
        %s415 = ssub.s32 125, %s414
        %p416 = scmp.lt.s32.totalorder %s415, 32
        %s417 = scalar_select %p416, %s415, 32
        %s418 = smul.u32 128, %s417
        %s419 = smul.u32 32, %s20
        %s420 = ssub.s32 125, %s419
        %p421 = scmp.lt.s32.totalorder %s420, 32
        %s422 = scalar_select %p421, %s420, 32
        %s423 = smul.u32 128, %s422
        %p424 = scmp.lt.s32.totalorder %s419, 124
        %s425 = scalar_select %p424, %s419, 124
        %s426 = smul.addr %s425, 8
        %s427 = scalar_lea.vmem %s2, %s426
        %s428 = smul.u32 32, %s20
        %s429 = ssub.s32 125, %s428
        %p430 = scmp.lt.s32.totalorder %s429, 32
        %s431 = scalar_select %p430, %s429, 32
        %s432 = smul.u32 128, %s431
        %s433 = smul.u32 32, %s20
        %s434 = ssub.s32 125, %s433
        %p435 = scmp.lt.s32.totalorder %s434, 32
        %s436 = scalar_select %p435, %s434, 32
        %s437 = smul.u32 64, %s436
        %v439 = vlaneseq
        %v440 = vand.u32 %v439, 127
        %v441 = vadd.s32 %v440, 128
        %v442 = vld [vmem:[%s399] sm:$0xff]
        %v443 = vld [vmem:[%s399 + $0x8] sm:$0xff]
        %v444 = vld [vmem:[%s399 + $0x10] sm:$0xff]
        %v445 = vld [vmem:[%s399 + $0x18] sm:$0xff]
        %v446 = vld [vmem:[%s399 + $0x20] sm:$0xff]
        %v447 = vld [vmem:[%s399 + $0x28] sm:$0xff]
        %v448 = vld [vmem:[%s399 + $0x30] sm:$0xff]
        %v449 = vld [vmem:[%s399 + $0x38] sm:$0xff]
        %v450 = vld [vmem:[%s399 + $0x40] sm:$0xff]
        %v451 = vld [vmem:[%s399 + $0x48] sm:$0xff]
        %v452 = vld [vmem:[%s399 + $0x50] sm:$0xff]
        %v453 = vld [vmem:[%s399 + $0x58] sm:$0xff]
        %v454 = vld [vmem:[%s399 + $0x60] sm:$0xff]
        %v455 = vld [vmem:[%s399 + $0x68] sm:$0xff]
        %v456 = vld [vmem:[%s399 + $0x70] sm:$0xff]
        %v457 = vld [vmem:[%s399 + $0x78] sm:$0xff]
        %v458 = vld [vmem:[%s399 + $0x80] sm:$0xff]
        %v459 = vld [vmem:[%s399 + $0x88] sm:$0xff]
        %v460 = vld [vmem:[%s399 + $0x90] sm:$0xff]
        %v461 = vld [vmem:[%s399 + $0x98] sm:$0xff]
        %v462 = vld [vmem:[%s399 + $0xa0] sm:$0xff]
        %v463 = vld [vmem:[%s399 + $0xa8] sm:$0xff]
        %v464 = vld [vmem:[%s399 + $0xb0] sm:$0xff]
        %v465 = vld [vmem:[%s399 + $0xb8] sm:$0xff]
        %v466 = vld [vmem:[%s399 + $0xc0] sm:$0xff]
        %v467 = vld [vmem:[%s399 + $0xc8] sm:$0xff]
        %v468 = vld [vmem:[%s399 + $0xd0] sm:$0xff]
        %v469 = vld [vmem:[%s399 + $0xd8] sm:$0xff]
        %v470 = vld [vmem:[%s399 + $0xe0] sm:$0xff]
        %v471 = vld [vmem:[%s399 + $0xe8] sm:$0xff]
        %v472 = vld [vmem:[%s399 + $0xf0] sm:$0xff]
        %v473 = vld [vmem:[%s399 + $0xf8] sm:$0xff]
        %474 = vset.pattern.permute.xlu0 0
        %475 = vperm.xlu0 %474, %v442
        %v476 = vpop.permute.xlu0 %475
        %477 = vset.pattern.permute.xlu0 0
        %478 = vperm.xlu0 %477, %v443
        %v479 = vpop.permute.xlu0 %478
        %480 = vset.pattern.permute.xlu0 0
        %481 = vperm.xlu0 %480, %v444
        %v482 = vpop.permute.xlu0 %481
        %483 = vset.pattern.permute.xlu0 0
        %484 = vperm.xlu0 %483, %v445
        %v485 = vpop.permute.xlu0 %484
        %486 = vset.pattern.permute.xlu0 0
        %487 = vperm.xlu0 %486, %v446
        %v488 = vpop.permute.xlu0 %487
        %489 = vset.pattern.permute.xlu0 0
        %490 = vperm.xlu0 %489, %v447
        %v491 = vpop.permute.xlu0 %490
        %492 = vset.pattern.permute.xlu0 0
        %493 = vperm.xlu0 %492, %v448
        %v494 = vpop.permute.xlu0 %493
        %495 = vset.pattern.permute.xlu0 0
        %496 = vperm.xlu0 %495, %v449
        %v497 = vpop.permute.xlu0 %496
        %498 = vset.pattern.permute.xlu0 0
        %499 = vperm.xlu0 %498, %v450
        %v500 = vpop.permute.xlu0 %499
        %501 = vset.pattern.permute.xlu0 0
        %502 = vperm.xlu0 %501, %v451
        %v503 = vpop.permute.xlu0 %502
        %504 = vset.pattern.permute.xlu0 0
        %505 = vperm.xlu0 %504, %v452
        %v506 = vpop.permute.xlu0 %505
        %507 = vset.pattern.permute.xlu0 0
        %508 = vperm.xlu0 %507, %v453
        %v509 = vpop.permute.xlu0 %508
        %510 = vset.pattern.permute.xlu0 0
        %511 = vperm.xlu0 %510, %v454
        %v512 = vpop.permute.xlu0 %511
        %513 = vset.pattern.permute.xlu0 0
        %514 = vperm.xlu0 %513, %v455
        %v515 = vpop.permute.xlu0 %514
        %516 = vset.pattern.permute.xlu0 0
        %517 = vperm.xlu0 %516, %v456
        %v518 = vpop.permute.xlu0 %517
        %519 = vset.pattern.permute.xlu0 0
        %520 = vperm.xlu0 %519, %v457
        %v521 = vpop.permute.xlu0 %520
        %522 = vset.pattern.permute.xlu0 0
        %523 = vperm.xlu0 %522, %v458
        %v524 = vpop.permute.xlu0 %523
        %525 = vset.pattern.permute.xlu0 0
        %526 = vperm.xlu0 %525, %v459
        %v527 = vpop.permute.xlu0 %526
        %528 = vset.pattern.permute.xlu0 0
        %529 = vperm.xlu0 %528, %v460
        %v530 = vpop.permute.xlu0 %529
        %531 = vset.pattern.permute.xlu0 0
        %532 = vperm.xlu0 %531, %v461
        %v533 = vpop.permute.xlu0 %532
        %534 = vset.pattern.permute.xlu0 0
        %535 = vperm.xlu0 %534, %v462
        %v536 = vpop.permute.xlu0 %535
        %537 = vset.pattern.permute.xlu0 0
        %538 = vperm.xlu0 %537, %v463
        %v539 = vpop.permute.xlu0 %538
        %540 = vset.pattern.permute.xlu0 0
        %541 = vperm.xlu0 %540, %v464
        %v542 = vpop.permute.xlu0 %541
        %543 = vset.pattern.permute.xlu0 0
        %544 = vperm.xlu0 %543, %v465
        %v545 = vpop.permute.xlu0 %544
        %546 = vset.pattern.permute.xlu0 0
        %547 = vperm.xlu0 %546, %v466
        %v548 = vpop.permute.xlu0 %547
        %549 = vset.pattern.permute.xlu0 0
        %550 = vperm.xlu0 %549, %v467
        %v551 = vpop.permute.xlu0 %550
        %552 = vset.pattern.permute.xlu0 0
        %553 = vperm.xlu0 %552, %v468
        %v554 = vpop.permute.xlu0 %553
        %555 = vset.pattern.permute.xlu0 0
        %556 = vperm.xlu0 %555, %v469
        %v557 = vpop.permute.xlu0 %556
        %558 = vset.pattern.permute.xlu0 0
        %559 = vperm.xlu0 %558, %v470
        %v560 = vpop.permute.xlu0 %559
        %561 = vset.pattern.permute.xlu0 0
        %562 = vperm.xlu0 %561, %v471
        %v563 = vpop.permute.xlu0 %562
        %564 = vset.pattern.permute.xlu0 0
        %565 = vperm.xlu0 %564, %v472
        %v566 = vpop.permute.xlu0 %565
        %567 = vset.pattern.permute.xlu0 0
        %568 = vperm.xlu0 %567, %v473
        %v569 = vpop.permute.xlu0 %568
        %vm570 = vcmp.eq.s32.totalorder %v440, %v476
        %vm571 = vcmp.eq.s32.totalorder %v441, %v476
        %vm572 = vcmp.eq.s32.totalorder %v440, %v479
        %vm573 = vcmp.eq.s32.totalorder %v441, %v479
        %vm574 = vcmp.eq.s32.totalorder %v440, %v482
        %vm575 = vcmp.eq.s32.totalorder %v441, %v482
        %vm576 = vcmp.eq.s32.totalorder %v440, %v485
        %vm577 = vcmp.eq.s32.totalorder %v441, %v485
        %vm578 = vcmp.eq.s32.totalorder %v440, %v488
        %vm579 = vcmp.eq.s32.totalorder %v441, %v488
        %vm580 = vcmp.eq.s32.totalorder %v440, %v491
        %vm581 = vcmp.eq.s32.totalorder %v441, %v491
        %vm582 = vcmp.eq.s32.totalorder %v440, %v494
        %vm583 = vcmp.eq.s32.totalorder %v441, %v494
        %vm584 = vcmp.eq.s32.totalorder %v440, %v497
        %vm585 = vcmp.eq.s32.totalorder %v441, %v497
        %vm586 = vcmp.eq.s32.totalorder %v440, %v500
        %vm587 = vcmp.eq.s32.totalorder %v441, %v500
        %vm588 = vcmp.eq.s32.totalorder %v440, %v503
        %vm589 = vcmp.eq.s32.totalorder %v441, %v503
        %vm590 = vcmp.eq.s32.totalorder %v440, %v506
        %vm591 = vcmp.eq.s32.totalorder %v441, %v506
        %vm592 = vcmp.eq.s32.totalorder %v440, %v509
        %vm593 = vcmp.eq.s32.totalorder %v441, %v509
        %vm594 = vcmp.eq.s32.totalorder %v440, %v512
        %vm595 = vcmp.eq.s32.totalorder %v441, %v512
        %vm596 = vcmp.eq.s32.totalorder %v440, %v515
        %vm597 = vcmp.eq.s32.totalorder %v441, %v515
        %vm598 = vcmp.eq.s32.totalorder %v440, %v518
        %vm599 = vcmp.eq.s32.totalorder %v441, %v518
        %vm600 = vcmp.eq.s32.totalorder %v440, %v521
        %vm601 = vcmp.eq.s32.totalorder %v441, %v521
        %vm602 = vcmp.eq.s32.totalorder %v440, %v524
        %vm603 = vcmp.eq.s32.totalorder %v441, %v524
        %vm604 = vcmp.eq.s32.totalorder %v440, %v527
        %vm605 = vcmp.eq.s32.totalorder %v441, %v527
        %vm606 = vcmp.eq.s32.totalorder %v440, %v530
        %vm607 = vcmp.eq.s32.totalorder %v441, %v530
        %vm608 = vcmp.eq.s32.totalorder %v440, %v533
        %vm609 = vcmp.eq.s32.totalorder %v441, %v533
        %vm610 = vcmp.eq.s32.totalorder %v440, %v536
        %vm611 = vcmp.eq.s32.totalorder %v441, %v536
        %vm612 = vcmp.eq.s32.totalorder %v440, %v539
        %vm613 = vcmp.eq.s32.totalorder %v441, %v539
        %vm614 = vcmp.eq.s32.totalorder %v440, %v542
        %vm615 = vcmp.eq.s32.totalorder %v441, %v542
        %vm616 = vcmp.eq.s32.totalorder %v440, %v545
        %vm617 = vcmp.eq.s32.totalorder %v441, %v545
        %vm618 = vcmp.eq.s32.totalorder %v440, %v548
        %vm619 = vcmp.eq.s32.totalorder %v441, %v548
        %vm620 = vcmp.eq.s32.totalorder %v440, %v551
        %vm621 = vcmp.eq.s32.totalorder %v441, %v551
        %vm622 = vcmp.eq.s32.totalorder %v440, %v554
        %vm623 = vcmp.eq.s32.totalorder %v441, %v554
        %vm624 = vcmp.eq.s32.totalorder %v440, %v557
        %vm625 = vcmp.eq.s32.totalorder %v441, %v557
        %vm626 = vcmp.eq.s32.totalorder %v440, %v560
        %vm627 = vcmp.eq.s32.totalorder %v441, %v560
        %vm628 = vcmp.eq.s32.totalorder %v440, %v563
        %vm629 = vcmp.eq.s32.totalorder %v441, %v563
        %vm630 = vcmp.eq.s32.totalorder %v440, %v566
        %vm631 = vcmp.eq.s32.totalorder %v441, %v566
        %vm632 = vcmp.eq.s32.totalorder %v440, %v569
        %vm633 = vcmp.eq.s32.totalorder %v441, %v569
        %v634 = vld [vmem:[%s413] sm:$0xff]
        %v635 = vld [vmem:[%s413 + $0x8] sm:$0xff]
        %v636 = vld [vmem:[%s413 + $0x10] sm:$0xff]
        %v637 = vld [vmem:[%s413 + $0x18] sm:$0xff]
        %v638 = vld [vmem:[%s413 + $0x20] sm:$0xff]
        %v639 = vld [vmem:[%s413 + $0x28] sm:$0xff]
        %v640 = vld [vmem:[%s413 + $0x30] sm:$0xff]
        %v641 = vld [vmem:[%s413 + $0x38] sm:$0xff]
        %v642 = vld [vmem:[%s413 + $0x40] sm:$0xff]
        %v643 = vld [vmem:[%s413 + $0x48] sm:$0xff]
        %v644 = vld [vmem:[%s413 + $0x50] sm:$0xff]
        %v645 = vld [vmem:[%s413 + $0x58] sm:$0xff]
        %v646 = vld [vmem:[%s413 + $0x60] sm:$0xff]
        %v647 = vld [vmem:[%s413 + $0x68] sm:$0xff]
        %v648 = vld [vmem:[%s413 + $0x70] sm:$0xff]
        %v649 = vld [vmem:[%s413 + $0x78] sm:$0xff]
        %v650 = vld [vmem:[%s413 + $0x80] sm:$0xff]
        %v651 = vld [vmem:[%s413 + $0x88] sm:$0xff]
        %v652 = vld [vmem:[%s413 + $0x90] sm:$0xff]
        %v653 = vld [vmem:[%s413 + $0x98] sm:$0xff]
        %v654 = vld [vmem:[%s413 + $0xa0] sm:$0xff]
        %v655 = vld [vmem:[%s413 + $0xa8] sm:$0xff]
        %v656 = vld [vmem:[%s413 + $0xb0] sm:$0xff]
        %v657 = vld [vmem:[%s413 + $0xb8] sm:$0xff]
        %v658 = vld [vmem:[%s413 + $0xc0] sm:$0xff]
        %v659 = vld [vmem:[%s413 + $0xc8] sm:$0xff]
        %v660 = vld [vmem:[%s413 + $0xd0] sm:$0xff]
        %v661 = vld [vmem:[%s413 + $0xd8] sm:$0xff]
        %v662 = vld [vmem:[%s413 + $0xe0] sm:$0xff]
        %v663 = vld [vmem:[%s413 + $0xe8] sm:$0xff]
        %v664 = vld [vmem:[%s413 + $0xf0] sm:$0xff]
        %v665 = vld [vmem:[%s413 + $0xf8] sm:$0xff]
        %v666 = vadd.s32 %v634, 128
        %v667 = vadd.s32 %v635, 128
        %v668 = vadd.s32 %v636, 128
        %v669 = vadd.s32 %v637, 128
        %v670 = vadd.s32 %v638, 128
        %v671 = vadd.s32 %v639, 128
        %v672 = vadd.s32 %v640, 128
        %v673 = vadd.s32 %v641, 128
        %v674 = vadd.s32 %v642, 128
        %v675 = vadd.s32 %v643, 128
        %v676 = vadd.s32 %v644, 128
        %v677 = vadd.s32 %v645, 128
        %v678 = vadd.s32 %v646, 128
        %v679 = vadd.s32 %v647, 128
        %v680 = vadd.s32 %v648, 128
        %v681 = vadd.s32 %v649, 128
        %v682 = vadd.s32 %v650, 128
        %v683 = vadd.s32 %v651, 128
        %v684 = vadd.s32 %v652, 128
        %v685 = vadd.s32 %v653, 128
        %v686 = vadd.s32 %v654, 128
        %v687 = vadd.s32 %v655, 128
        %v688 = vadd.s32 %v656, 128
        %v689 = vadd.s32 %v657, 128
        %v690 = vadd.s32 %v658, 128
        %v691 = vadd.s32 %v659, 128
        %v692 = vadd.s32 %v660, 128
        %v693 = vadd.s32 %v661, 128
        %v694 = vadd.s32 %v662, 128
        %v695 = vadd.s32 %v663, 128
        %v696 = vadd.s32 %v664, 128
        %v697 = vadd.s32 %v665, 128
        %698 = vset.pattern.permute.xlu0 0
        %699 = vperm.xlu0 %698, %v666
        %v700 = vpop.permute.xlu0 %699
        %701 = vset.pattern.permute.xlu0 0
        %702 = vperm.xlu0 %701, %v667
        %v703 = vpop.permute.xlu0 %702
        %704 = vset.pattern.permute.xlu0 0
        %705 = vperm.xlu0 %704, %v668
        %v706 = vpop.permute.xlu0 %705
        %707 = vset.pattern.permute.xlu0 0
        %708 = vperm.xlu0 %707, %v669
        %v709 = vpop.permute.xlu0 %708
        %710 = vset.pattern.permute.xlu0 0
        %711 = vperm.xlu0 %710, %v670
        %v712 = vpop.permute.xlu0 %711
        %713 = vset.pattern.permute.xlu0 0
        %714 = vperm.xlu0 %713, %v671
        %v715 = vpop.permute.xlu0 %714
        %716 = vset.pattern.permute.xlu0 0
        %717 = vperm.xlu0 %716, %v672
        %v718 = vpop.permute.xlu0 %717
        %719 = vset.pattern.permute.xlu0 0
        %720 = vperm.xlu0 %719, %v673
        %v721 = vpop.permute.xlu0 %720
        %722 = vset.pattern.permute.xlu0 0
        %723 = vperm.xlu0 %722, %v674
        %v724 = vpop.permute.xlu0 %723
        %725 = vset.pattern.permute.xlu0 0
        %726 = vperm.xlu0 %725, %v675
        %v727 = vpop.permute.xlu0 %726
        %728 = vset.pattern.permute.xlu0 0
        %729 = vperm.xlu0 %728, %v676
        %v730 = vpop.permute.xlu0 %729
        %731 = vset.pattern.permute.xlu0 0
        %732 = vperm.xlu0 %731, %v677
        %v733 = vpop.permute.xlu0 %732
        %734 = vset.pattern.permute.xlu0 0
        %735 = vperm.xlu0 %734, %v678
        %v736 = vpop.permute.xlu0 %735
        %737 = vset.pattern.permute.xlu0 0
        %738 = vperm.xlu0 %737, %v679
        %v739 = vpop.permute.xlu0 %738
        %740 = vset.pattern.permute.xlu0 0
        %741 = vperm.xlu0 %740, %v680
        %v742 = vpop.permute.xlu0 %741
        %743 = vset.pattern.permute.xlu0 0
        %744 = vperm.xlu0 %743, %v681
        %v745 = vpop.permute.xlu0 %744
        %746 = vset.pattern.permute.xlu0 0
        %747 = vperm.xlu0 %746, %v682
        %v748 = vpop.permute.xlu0 %747
        %749 = vset.pattern.permute.xlu0 0
        %750 = vperm.xlu0 %749, %v683
        %v751 = vpop.permute.xlu0 %750
        %752 = vset.pattern.permute.xlu0 0
        %753 = vperm.xlu0 %752, %v684
        %v754 = vpop.permute.xlu0 %753
        %755 = vset.pattern.permute.xlu0 0
        %756 = vperm.xlu0 %755, %v685
        %v757 = vpop.permute.xlu0 %756
        %758 = vset.pattern.permute.xlu0 0
        %759 = vperm.xlu0 %758, %v686
        %v760 = vpop.permute.xlu0 %759
        %761 = vset.pattern.permute.xlu0 0
        %762 = vperm.xlu0 %761, %v687
        %v763 = vpop.permute.xlu0 %762
        %764 = vset.pattern.permute.xlu0 0
        %765 = vperm.xlu0 %764, %v688
        %v766 = vpop.permute.xlu0 %765
        %767 = vset.pattern.permute.xlu0 0
        %768 = vperm.xlu0 %767, %v689
        %v769 = vpop.permute.xlu0 %768
        %770 = vset.pattern.permute.xlu0 0
        %771 = vperm.xlu0 %770, %v690
        %v772 = vpop.permute.xlu0 %771
        %773 = vset.pattern.permute.xlu0 0
        %774 = vperm.xlu0 %773, %v691
        %v775 = vpop.permute.xlu0 %774
        %776 = vset.pattern.permute.xlu0 0
        %777 = vperm.xlu0 %776, %v692
        %v778 = vpop.permute.xlu0 %777
        %779 = vset.pattern.permute.xlu0 0
        %780 = vperm.xlu0 %779, %v693
        %v781 = vpop.permute.xlu0 %780
        %782 = vset.pattern.permute.xlu0 0
        %783 = vperm.xlu0 %782, %v694
        %v784 = vpop.permute.xlu0 %783
        %785 = vset.pattern.permute.xlu0 0
        %786 = vperm.xlu0 %785, %v695
        %v787 = vpop.permute.xlu0 %786
        %788 = vset.pattern.permute.xlu0 0
        %789 = vperm.xlu0 %788, %v696
        %v790 = vpop.permute.xlu0 %789
        %791 = vset.pattern.permute.xlu0 0
        %792 = vperm.xlu0 %791, %v697
        %v793 = vpop.permute.xlu0 %792
        %vm794 = vcmp.eq.s32.totalorder %v440, %v700
        %vm795 = vcmp.eq.s32.totalorder %v441, %v700
        %vm796 = vcmp.eq.s32.totalorder %v440, %v703
        %vm797 = vcmp.eq.s32.totalorder %v441, %v703
        %vm798 = vcmp.eq.s32.totalorder %v440, %v706
        %vm799 = vcmp.eq.s32.totalorder %v441, %v706
        %vm800 = vcmp.eq.s32.totalorder %v440, %v709
        %vm801 = vcmp.eq.s32.totalorder %v441, %v709
        %vm802 = vcmp.eq.s32.totalorder %v440, %v712
        %vm803 = vcmp.eq.s32.totalorder %v441, %v712
        %vm804 = vcmp.eq.s32.totalorder %v440, %v715
        %vm805 = vcmp.eq.s32.totalorder %v441, %v715
        %vm806 = vcmp.eq.s32.totalorder %v440, %v718
        %vm807 = vcmp.eq.s32.totalorder %v441, %v718
        %vm808 = vcmp.eq.s32.totalorder %v440, %v721
        %vm809 = vcmp.eq.s32.totalorder %v441, %v721
        %vm810 = vcmp.eq.s32.totalorder %v440, %v724
        %vm811 = vcmp.eq.s32.totalorder %v441, %v724
        %vm812 = vcmp.eq.s32.totalorder %v440, %v727
        %vm813 = vcmp.eq.s32.totalorder %v441, %v727
        %vm814 = vcmp.eq.s32.totalorder %v440, %v730
        %vm815 = vcmp.eq.s32.totalorder %v441, %v730
        %vm816 = vcmp.eq.s32.totalorder %v440, %v733
        %vm817 = vcmp.eq.s32.totalorder %v441, %v733
        %vm818 = vcmp.eq.s32.totalorder %v440, %v736
        %vm819 = vcmp.eq.s32.totalorder %v441, %v736
        %vm820 = vcmp.eq.s32.totalorder %v440, %v739
        %vm821 = vcmp.eq.s32.totalorder %v441, %v739
        %vm822 = vcmp.eq.s32.totalorder %v440, %v742
        %vm823 = vcmp.eq.s32.totalorder %v441, %v742
        %vm824 = vcmp.eq.s32.totalorder %v440, %v745
        %vm825 = vcmp.eq.s32.totalorder %v441, %v745
        %vm826 = vcmp.eq.s32.totalorder %v440, %v748
        %vm827 = vcmp.eq.s32.totalorder %v441, %v748
        %vm828 = vcmp.eq.s32.totalorder %v440, %v751
        %vm829 = vcmp.eq.s32.totalorder %v441, %v751
        %vm830 = vcmp.eq.s32.totalorder %v440, %v754
        %vm831 = vcmp.eq.s32.totalorder %v441, %v754
        %vm832 = vcmp.eq.s32.totalorder %v440, %v757
        %vm833 = vcmp.eq.s32.totalorder %v441, %v757
        %vm834 = vcmp.eq.s32.totalorder %v440, %v760
        %vm835 = vcmp.eq.s32.totalorder %v441, %v760
        %vm836 = vcmp.eq.s32.totalorder %v440, %v763
        %vm837 = vcmp.eq.s32.totalorder %v441, %v763
        %vm838 = vcmp.eq.s32.totalorder %v440, %v766
        %vm839 = vcmp.eq.s32.totalorder %v441, %v766
        %vm840 = vcmp.eq.s32.totalorder %v440, %v769
        %vm841 = vcmp.eq.s32.totalorder %v441, %v769
        %vm842 = vcmp.eq.s32.totalorder %v440, %v772
        %vm843 = vcmp.eq.s32.totalorder %v441, %v772
        %vm844 = vcmp.eq.s32.totalorder %v440, %v775
        %vm845 = vcmp.eq.s32.totalorder %v441, %v775
        %vm846 = vcmp.eq.s32.totalorder %v440, %v778
        %vm847 = vcmp.eq.s32.totalorder %v441, %v778
        %vm848 = vcmp.eq.s32.totalorder %v440, %v781
        %vm849 = vcmp.eq.s32.totalorder %v441, %v781
        %vm850 = vcmp.eq.s32.totalorder %v440, %v784
        %vm851 = vcmp.eq.s32.totalorder %v441, %v784
        %vm852 = vcmp.eq.s32.totalorder %v440, %v787
        %vm853 = vcmp.eq.s32.totalorder %v441, %v787
        %vm854 = vcmp.eq.s32.totalorder %v440, %v790
        %vm855 = vcmp.eq.s32.totalorder %v441, %v790
        %vm856 = vcmp.eq.s32.totalorder %v440, %v793
        %vm857 = vcmp.eq.s32.totalorder %v441, %v793
        %vm858 = vmor %vm570, %vm794
        %vm859 = vmor %vm571, %vm795
        %vm860 = vmor %vm572, %vm796
        %vm861 = vmor %vm573, %vm797
        %vm862 = vmor %vm574, %vm798
        %vm863 = vmor %vm575, %vm799
        %vm864 = vmor %vm576, %vm800
        %vm865 = vmor %vm577, %vm801
        %vm866 = vmor %vm578, %vm802
        %vm867 = vmor %vm579, %vm803
        %vm868 = vmor %vm580, %vm804
        %vm869 = vmor %vm581, %vm805
        %vm870 = vmor %vm582, %vm806
        %vm871 = vmor %vm583, %vm807
        %vm872 = vmor %vm584, %vm808
        %vm873 = vmor %vm585, %vm809
        %vm874 = vmor %vm586, %vm810
        %vm875 = vmor %vm587, %vm811
        %vm876 = vmor %vm588, %vm812
        %vm877 = vmor %vm589, %vm813
        %vm878 = vmor %vm590, %vm814
        %vm879 = vmor %vm591, %vm815
        %vm880 = vmor %vm592, %vm816
        %vm881 = vmor %vm593, %vm817
        %vm882 = vmor %vm594, %vm818
        %vm883 = vmor %vm595, %vm819
        %vm884 = vmor %vm596, %vm820
        %vm885 = vmor %vm597, %vm821
        %vm886 = vmor %vm598, %vm822
        %vm887 = vmor %vm599, %vm823
        %vm888 = vmor %vm600, %vm824
        %vm889 = vmor %vm601, %vm825
        %vm890 = vmor %vm602, %vm826
        %vm891 = vmor %vm603, %vm827
        %vm892 = vmor %vm604, %vm828
        %vm893 = vmor %vm605, %vm829
        %vm894 = vmor %vm606, %vm830
        %vm895 = vmor %vm607, %vm831
        %vm896 = vmor %vm608, %vm832
        %vm897 = vmor %vm609, %vm833
        %vm898 = vmor %vm610, %vm834
        %vm899 = vmor %vm611, %vm835
        %vm900 = vmor %vm612, %vm836
        %vm901 = vmor %vm613, %vm837
        %vm902 = vmor %vm614, %vm838
        %vm903 = vmor %vm615, %vm839
        %vm904 = vmor %vm616, %vm840
        %vm905 = vmor %vm617, %vm841
        %vm906 = vmor %vm618, %vm842
        %vm907 = vmor %vm619, %vm843
        %vm908 = vmor %vm620, %vm844
        %vm909 = vmor %vm621, %vm845
        %vm910 = vmor %vm622, %vm846
        %vm911 = vmor %vm623, %vm847
        %vm912 = vmor %vm624, %vm848
        %vm913 = vmor %vm625, %vm849
        %vm914 = vmor %vm626, %vm850
        %vm915 = vmor %vm627, %vm851
        %vm916 = vmor %vm628, %vm852
        %vm917 = vmor %vm629, %vm853
        %vm918 = vmor %vm630, %vm854
        %vm919 = vmor %vm631, %vm855
        %vm920 = vmor %vm632, %vm856
        %vm921 = vmor %vm633, %vm857
        %v922 = vsel %vm858, 1.0, 0.0
        %v923 = vsel %vm859, 1.0, 0.0
        %v924 = vsel %vm860, 1.0, 0.0
        %v925 = vsel %vm861, 1.0, 0.0
        %v926 = vsel %vm862, 1.0, 0.0
        %v927 = vsel %vm863, 1.0, 0.0
        %v928 = vsel %vm864, 1.0, 0.0
        %v929 = vsel %vm865, 1.0, 0.0
        %v930 = vsel %vm866, 1.0, 0.0
        %v931 = vsel %vm867, 1.0, 0.0
        %v932 = vsel %vm868, 1.0, 0.0
        %v933 = vsel %vm869, 1.0, 0.0
        %v934 = vsel %vm870, 1.0, 0.0
        %v935 = vsel %vm871, 1.0, 0.0
        %v936 = vsel %vm872, 1.0, 0.0
        %v937 = vsel %vm873, 1.0, 0.0
        %v938 = vsel %vm874, 1.0, 0.0
        %v939 = vsel %vm875, 1.0, 0.0
        %v940 = vsel %vm876, 1.0, 0.0
        %v941 = vsel %vm877, 1.0, 0.0
        %v942 = vsel %vm878, 1.0, 0.0
        %v943 = vsel %vm879, 1.0, 0.0
        %v944 = vsel %vm880, 1.0, 0.0
        %v945 = vsel %vm881, 1.0, 0.0
        %v946 = vsel %vm882, 1.0, 0.0
        %v947 = vsel %vm883, 1.0, 0.0
        %v948 = vsel %vm884, 1.0, 0.0
        %v949 = vsel %vm885, 1.0, 0.0
        %v950 = vsel %vm886, 1.0, 0.0
        %v951 = vsel %vm887, 1.0, 0.0
        %v952 = vsel %vm888, 1.0, 0.0
        %v953 = vsel %vm889, 1.0, 0.0
        %v954 = vsel %vm890, 1.0, 0.0
        %v955 = vsel %vm891, 1.0, 0.0
        %v956 = vsel %vm892, 1.0, 0.0
        %v957 = vsel %vm893, 1.0, 0.0
        %v958 = vsel %vm894, 1.0, 0.0
        %v959 = vsel %vm895, 1.0, 0.0
        %v960 = vsel %vm896, 1.0, 0.0
        %v961 = vsel %vm897, 1.0, 0.0
        %v962 = vsel %vm898, 1.0, 0.0
        %v963 = vsel %vm899, 1.0, 0.0
        %v964 = vsel %vm900, 1.0, 0.0
        %v965 = vsel %vm901, 1.0, 0.0
        %v966 = vsel %vm902, 1.0, 0.0
        %v967 = vsel %vm903, 1.0, 0.0
        %v968 = vsel %vm904, 1.0, 0.0
        %v969 = vsel %vm905, 1.0, 0.0
        %v970 = vsel %vm906, 1.0, 0.0
        %v971 = vsel %vm907, 1.0, 0.0
        %v972 = vsel %vm908, 1.0, 0.0
        %v973 = vsel %vm909, 1.0, 0.0
        %v974 = vsel %vm910, 1.0, 0.0
        %v975 = vsel %vm911, 1.0, 0.0
        %v976 = vsel %vm912, 1.0, 0.0
        %v977 = vsel %vm913, 1.0, 0.0
        %v978 = vsel %vm914, 1.0, 0.0
        %v979 = vsel %vm915, 1.0, 0.0
        %v980 = vsel %vm916, 1.0, 0.0
        %v981 = vsel %vm917, 1.0, 0.0
        %v982 = vsel %vm918, 1.0, 0.0
        %v983 = vsel %vm919, 1.0, 0.0
        %v984 = vsel %vm920, 1.0, 0.0
        %v985 = vsel %vm921, 1.0, 0.0
        %v986 = vpack.c.bf16 %v924, %v922
        %v987 = vpack.c.bf16 %v925, %v923
        %v988 = vpack.c.bf16 %v928, %v926
        %v989 = vpack.c.bf16 %v929, %v927
        %v990 = vpack.c.bf16 %v932, %v930
        %v991 = vpack.c.bf16 %v933, %v931
        %v992 = vpack.c.bf16 %v936, %v934
        %v993 = vpack.c.bf16 %v937, %v935
        %v994 = vpack.c.bf16 %v940, %v938
        %v995 = vpack.c.bf16 %v941, %v939
        %v996 = vpack.c.bf16 %v944, %v942
        %v997 = vpack.c.bf16 %v945, %v943
        %v998 = vpack.c.bf16 %v948, %v946
        %v999 = vpack.c.bf16 %v949, %v947
        %v1000 = vpack.c.bf16 %v952, %v950
        %v1001 = vpack.c.bf16 %v953, %v951
        %v1002 = vpack.c.bf16 %v956, %v954
        %v1003 = vpack.c.bf16 %v957, %v955
        %v1004 = vpack.c.bf16 %v960, %v958
        %v1005 = vpack.c.bf16 %v961, %v959
        %v1006 = vpack.c.bf16 %v964, %v962
        %v1007 = vpack.c.bf16 %v965, %v963
        %v1008 = vpack.c.bf16 %v968, %v966
        %v1009 = vpack.c.bf16 %v969, %v967
        %v1010 = vpack.c.bf16 %v972, %v970
        %v1011 = vpack.c.bf16 %v973, %v971
        %v1012 = vpack.c.bf16 %v976, %v974
        %v1013 = vpack.c.bf16 %v977, %v975
        %v1014 = vpack.c.bf16 %v980, %v978
        %v1015 = vpack.c.bf16 %v981, %v979
        %v1016 = vpack.c.bf16 %v984, %v982
        %v1017 = vpack.c.bf16 %v985, %v983
        %v1018 = vld [vmem:[%s3] sm:$0xf]
        %v1019 = vld [vmem:[%s3 + $0x4] sm:$0xf]
        %v1020 = vld [vmem:[%s3 + $0x8] sm:$0xf]
        %v1021 = vld [vmem:[%s3 + $0xc] sm:$0xf]
        %v1022 = vld [vmem:[%s3 + $0x10] sm:$0xf]
        %v1023 = vld [vmem:[%s3 + $0x14] sm:$0xf]
        %v1024 = vld [vmem:[%s3 + $0x18] sm:$0xf]
        %v1025 = vld [vmem:[%s3 + $0x1c] sm:$0xf]
        %v1026 = vld [vmem:[%s3 + $0x20] sm:$0xf]
        %v1027 = vld [vmem:[%s3 + $0x24] sm:$0xf]
        %v1028 = vld [vmem:[%s3 + $0x28] sm:$0xf]
        %v1029 = vld [vmem:[%s3 + $0x2c] sm:$0xf]
        %v1030 = vld [vmem:[%s3 + $0x30] sm:$0xf]
        %v1031 = vld [vmem:[%s3 + $0x34] sm:$0xf]
        %v1032 = vld [vmem:[%s3 + $0x38] sm:$0xf]
        %v1033 = vld [vmem:[%s3 + $0x3c] sm:$0xf]
        %v1034 = vld [vmem:[%s3 + $0x40] sm:$0xf]
        %v1035 = vld [vmem:[%s3 + $0x44] sm:$0xf]
        %v1036 = vld [vmem:[%s3 + $0x48] sm:$0xf]
        %v1037 = vld [vmem:[%s3 + $0x4c] sm:$0xf]
        %v1038 = vld [vmem:[%s3 + $0x50] sm:$0xf]
        %v1039 = vld [vmem:[%s3 + $0x54] sm:$0xf]
        %v1040 = vld [vmem:[%s3 + $0x58] sm:$0xf]
        %v1041 = vld [vmem:[%s3 + $0x5c] sm:$0xf]
        %v1042 = vld [vmem:[%s3 + $0x60] sm:$0xf]
        %v1043 = vld [vmem:[%s3 + $0x64] sm:$0xf]
        %v1044 = vld [vmem:[%s3 + $0x68] sm:$0xf]
        %v1045 = vld [vmem:[%s3 + $0x6c] sm:$0xf]
        %v1046 = vld [vmem:[%s3 + $0x70] sm:$0xf]
        %v1047 = vld [vmem:[%s3 + $0x74] sm:$0xf]
        %v1048 = vld [vmem:[%s3 + $0x78] sm:$0xf]
        %v1049 = vld [vmem:[%s3 + $0x7c] sm:$0xf]
        %v1050 = vld [vmem:[%s4] sm:$0xf]
        %v1051 = vld [vmem:[%s4 + $0x4] sm:$0xf]
        %v1052 = vld [vmem:[%s4 + $0x8] sm:$0xf]
        %v1053 = vld [vmem:[%s4 + $0xc] sm:$0xf]
        %v1054 = vld [vmem:[%s4 + $0x10] sm:$0xf]
        %v1055 = vld [vmem:[%s4 + $0x14] sm:$0xf]
        %v1056 = vld [vmem:[%s4 + $0x18] sm:$0xf]
        %v1057 = vld [vmem:[%s4 + $0x1c] sm:$0xf]
        %v1058 = vld [vmem:[%s4 + $0x20] sm:$0xf]
        %v1059 = vld [vmem:[%s4 + $0x24] sm:$0xf]
        %v1060 = vld [vmem:[%s4 + $0x28] sm:$0xf]
        %v1061 = vld [vmem:[%s4 + $0x2c] sm:$0xf]
        %v1062 = vld [vmem:[%s4 + $0x30] sm:$0xf]
        %v1063 = vld [vmem:[%s4 + $0x34] sm:$0xf]
        %v1064 = vld [vmem:[%s4 + $0x38] sm:$0xf]
        %v1065 = vld [vmem:[%s4 + $0x3c] sm:$0xf]
        %v1066 = vld [vmem:[%s4 + $0x40] sm:$0xf]
        %v1067 = vld [vmem:[%s4 + $0x44] sm:$0xf]
        %v1068 = vld [vmem:[%s4 + $0x48] sm:$0xf]
        %v1069 = vld [vmem:[%s4 + $0x4c] sm:$0xf]
        %v1070 = vld [vmem:[%s4 + $0x50] sm:$0xf]
        %v1071 = vld [vmem:[%s4 + $0x54] sm:$0xf]
        %v1072 = vld [vmem:[%s4 + $0x58] sm:$0xf]
        %v1073 = vld [vmem:[%s4 + $0x5c] sm:$0xf]
        %v1074 = vld [vmem:[%s4 + $0x60] sm:$0xf]
        %v1075 = vld [vmem:[%s4 + $0x64] sm:$0xf]
        %v1076 = vld [vmem:[%s4 + $0x68] sm:$0xf]
        %v1077 = vld [vmem:[%s4 + $0x6c] sm:$0xf]
        %v1078 = vld [vmem:[%s4 + $0x70] sm:$0xf]
        %v1079 = vld [vmem:[%s4 + $0x74] sm:$0xf]
        %v1080 = vld [vmem:[%s4 + $0x78] sm:$0xf]
        %v1081 = vld [vmem:[%s4 + $0x7c] sm:$0xf]
        %v1114 = vunpack.c.l.b16 %v1050
        %v1115 = vunpack.c.l.b16 %v1051
        %v1116 = vunpack.c.l.b16 %v1052
        %v1117 = vunpack.c.l.b16 %v1053
        %v1118 = vunpack.c.l.b16 %v1054
        %v1119 = vunpack.c.l.b16 %v1055
        %v1120 = vunpack.c.l.b16 %v1056
        %v1121 = vunpack.c.l.b16 %v1057
        %v1122 = vunpack.c.l.b16 %v1058
        %v1123 = vunpack.c.l.b16 %v1059
        %v1124 = vunpack.c.l.b16 %v1060
        %v1125 = vunpack.c.l.b16 %v1061
        %v1126 = vunpack.c.l.b16 %v1062
        %v1127 = vunpack.c.l.b16 %v1063
        %v1128 = vunpack.c.l.b16 %v1064
        %v1129 = vunpack.c.l.b16 %v1065
        %v1130 = vunpack.c.l.b16 %v1066
        %v1131 = vunpack.c.l.b16 %v1067
        %v1132 = vunpack.c.l.b16 %v1068
        %v1133 = vunpack.c.l.b16 %v1069
        %v1134 = vunpack.c.l.b16 %v1070
        %v1135 = vunpack.c.l.b16 %v1071
        %v1136 = vunpack.c.l.b16 %v1072
        %v1137 = vunpack.c.l.b16 %v1073
        %v1138 = vunpack.c.l.b16 %v1074
        %v1139 = vunpack.c.l.b16 %v1075
        %v1140 = vunpack.c.l.b16 %v1076
        %v1141 = vunpack.c.l.b16 %v1077
        %v1142 = vunpack.c.l.b16 %v1078
        %v1143 = vunpack.c.l.b16 %v1079
        %v1144 = vunpack.c.l.b16 %v1080
        %v1145 = vunpack.c.l.b16 %v1081
        %v1146 = vpack.c.b16 %v1115, %v1114
        %v1147 = vpack.c.b16 %v1117, %v1116
        %v1148 = vpack.c.b16 %v1119, %v1118
        %v1149 = vpack.c.b16 %v1121, %v1120
        %v1150 = vpack.c.b16 %v1123, %v1122
        %v1151 = vpack.c.b16 %v1125, %v1124
        %v1152 = vpack.c.b16 %v1127, %v1126
        %v1153 = vpack.c.b16 %v1129, %v1128
        %v1154 = vpack.c.b16 %v1131, %v1130
        %v1155 = vpack.c.b16 %v1133, %v1132
        %v1156 = vpack.c.b16 %v1135, %v1134
        %v1157 = vpack.c.b16 %v1137, %v1136
        %v1158 = vpack.c.b16 %v1139, %v1138
        %v1159 = vpack.c.b16 %v1141, %v1140
        %v1160 = vpack.c.b16 %v1143, %v1142
        %v1161 = vpack.c.b16 %v1145, %v1144
        %1178 = vmatprep.subr.bf16.mxu0 0
        %1179 = vmatpush1.bf16.msra.mxu0 %v1146
        %1180 = vmatprep.subr.bf16.mxu0 0
        %1181 = vmatpush1.bf16.msra.mxu0 %v1147
        %1182 = vmatprep.subr.bf16.mxu0 0
        %1183 = vmatpush1.bf16.msra.mxu0 %v1148
        %1184 = vmatprep.subr.bf16.mxu0 0
        %1185 = vmatpush1.bf16.msra.mxu0 %v1149
        %1186 = vmatprep.subr.bf16.mxu0 0
        %1187 = vmatpush1.bf16.msra.mxu0 %v1150
        %1188 = vmatprep.subr.bf16.mxu0 0
        %1189 = vmatpush1.bf16.msra.mxu0 %v1151
        %1190 = vmatprep.subr.bf16.mxu0 0
        %1191 = vmatpush1.bf16.msra.mxu0 %v1152
        %1192 = vmatprep.subr.bf16.mxu0 0
        %1193 = vmatpush1.bf16.msra.mxu0 %v1153
        %1194 = vmatprep.subr.bf16.mxu0 0
        %1195 = vmatpush1.bf16.msra.mxu0 %v1154
        %1196 = vmatprep.subr.bf16.mxu0 0
        %1197 = vmatpush1.bf16.msra.mxu0 %v1155
        %1198 = vmatprep.subr.bf16.mxu0 0
        %1199 = vmatpush1.bf16.msra.mxu0 %v1156
        %1200 = vmatprep.subr.bf16.mxu0 0
        %1201 = vmatpush1.bf16.msra.mxu0 %v1157
        %1202 = vmatprep.subr.bf16.mxu0 0
        %1203 = vmatpush1.bf16.msra.mxu0 %v1158
        %1204 = vmatprep.subr.bf16.mxu0 0
        %1205 = vmatpush1.bf16.msra.mxu0 %v1159
        %1206 = vmatprep.subr.bf16.mxu0 0
        %1207 = vmatpush1.bf16.msra.mxu0 %v1160
        %1208 = vmatprep.subr.bf16.mxu0 0
        %1209 = vmatpush1.bf16.msra.mxu0 %v1161
        %1210 = vmatprep.mubr.bf16.mxu0 %v987
        %1211 = vmatmul.mubr.bf16.gmra.mrb[0].mxu0 %v986
        %v1212 = vpop.f32.mrb[0].mxu0
        %v1213 = vadd.f32 0.0, %v1212
        %v1214 = vpop.f32.mrb[0].mxu0
        %v1215 = vpop.f32.mrb[0].mxu0
        %v1216 = vadd.f32 0.0, %v1215
        %v1217 = vpop.f32.mrb[0].mxu0
        %1218 = vmatprep.mubr.bf16.mxu0 %v989
        %1219 = vmatmul.mubr.bf16.gmra.mrb[0].mxu0 %v988
        %v1220 = vpop.f32.mrb[0].mxu0
        %v1221 = vadd.f32 0.0, %v1220
        %v1222 = vpop.f32.mrb[0].mxu0
        %v1223 = vpop.f32.mrb[0].mxu0
        %v1224 = vadd.f32 0.0, %v1223
        %v1225 = vpop.f32.mrb[0].mxu0
        %1226 = vmatprep.mubr.bf16.mxu0 %v991
        %1227 = vmatmul.mubr.bf16.gmra.mrb[0].mxu0 %v990
        %v1228 = vpop.f32.mrb[0].mxu0
        %v1229 = vadd.f32 0.0, %v1228
        %v1230 = vpop.f32.mrb[0].mxu0
        %v1231 = vpop.f32.mrb[0].mxu0
        %v1232 = vadd.f32 0.0, %v1231
        %v1233 = vpop.f32.mrb[0].mxu0
        %1234 = vmatprep.mubr.bf16.mxu0 %v993
        %1235 = vmatmul.mubr.bf16.gmra.mrb[0].mxu0 %v992
        %v1236 = vpop.f32.mrb[0].mxu0
        %v1237 = vadd.f32 0.0, %v1236
        %v1238 = vpop.f32.mrb[0].mxu0
        %v1239 = vpop.f32.mrb[0].mxu0
        %v1240 = vadd.f32 0.0, %v1239
        %v1241 = vpop.f32.mrb[0].mxu0
        %1242 = vmatprep.mubr.bf16.mxu0 %v995
        %1243 = vmatmul.mubr.bf16.gmra.mrb[0].mxu0 %v994
        %v1244 = vpop.f32.mrb[0].mxu0
        %v1245 = vadd.f32 0.0, %v1244
        %v1246 = vpop.f32.mrb[0].mxu0
        %v1247 = vpop.f32.mrb[0].mxu0
        %v1248 = vadd.f32 0.0, %v1247
        %v1249 = vpop.f32.mrb[0].mxu0
        %1250 = vmatprep.mubr.bf16.mxu0 %v997
        %1251 = vmatmul.mubr.bf16.gmra.mrb[0].mxu0 %v996
        %v1252 = vpop.f32.mrb[0].mxu0
        %v1253 = vadd.f32 0.0, %v1252
        %v1254 = vpop.f32.mrb[0].mxu0
        %v1255 = vpop.f32.mrb[0].mxu0
        %v1256 = vadd.f32 0.0, %v1255
        %v1257 = vpop.f32.mrb[0].mxu0
        %1258 = vmatprep.mubr.bf16.mxu0 %v999
        %1259 = vmatmul.mubr.bf16.gmra.mrb[0].mxu0 %v998
        %v1260 = vpop.f32.mrb[0].mxu0
        %v1261 = vadd.f32 0.0, %v1260
        %v1262 = vpop.f32.mrb[0].mxu0
        %v1263 = vpop.f32.mrb[0].mxu0
        %v1264 = vadd.f32 0.0, %v1263
        %v1265 = vpop.f32.mrb[0].mxu0
        %1266 = vmatprep.mubr.bf16.mxu0 %v1001
        %1267 = vmatmul.mubr.bf16.gmra.mrb[0].mxu0 %v1000
        %v1268 = vpop.f32.mrb[0].mxu0
        %v1269 = vadd.f32 0.0, %v1268
        %v1270 = vpop.f32.mrb[0].mxu0
        %v1271 = vpop.f32.mrb[0].mxu0
        %v1272 = vadd.f32 0.0, %v1271
        %v1273 = vpop.f32.mrb[0].mxu0
        %1274 = vmatprep.mubr.bf16.mxu0 %v1003
        %1275 = vmatmul.mubr.bf16.gmra.mrb[0].mxu0 %v1002
        %v1276 = vpop.f32.mrb[0].mxu0
        %v1277 = vadd.f32 0.0, %v1276
        %v1278 = vpop.f32.mrb[0].mxu0
        %v1279 = vpop.f32.mrb[0].mxu0
        %v1280 = vadd.f32 0.0, %v1279
        %v1281 = vpop.f32.mrb[0].mxu0
        %1282 = vmatprep.mubr.bf16.mxu0 %v1005
        %1283 = vmatmul.mubr.bf16.gmra.mrb[0].mxu0 %v1004
        %v1284 = vpop.f32.mrb[0].mxu0
        %v1285 = vadd.f32 0.0, %v1284
        %v1286 = vpop.f32.mrb[0].mxu0
        %v1287 = vpop.f32.mrb[0].mxu0
        %v1288 = vadd.f32 0.0, %v1287
        %v1289 = vpop.f32.mrb[0].mxu0
        %1290 = vmatprep.mubr.bf16.mxu0 %v1007
        %1291 = vmatmul.mubr.bf16.gmra.mrb[0].mxu0 %v1006
        %v1292 = vpop.f32.mrb[0].mxu0
        %v1293 = vadd.f32 0.0, %v1292
        %v1294 = vpop.f32.mrb[0].mxu0
        %v1295 = vpop.f32.mrb[0].mxu0
        %v1296 = vadd.f32 0.0, %v1295
        %v1297 = vpop.f32.mrb[0].mxu0
        %1298 = vmatprep.mubr.bf16.mxu0 %v1009
        %1299 = vmatmul.mubr.bf16.gmra.mrb[0].mxu0 %v1008
        %v1300 = vpop.f32.mrb[0].mxu0
        %v1301 = vadd.f32 0.0, %v1300
        %v1302 = vpop.f32.mrb[0].mxu0
        %v1303 = vpop.f32.mrb[0].mxu0
        %v1304 = vadd.f32 0.0, %v1303
        %v1305 = vpop.f32.mrb[0].mxu0
        %1306 = vmatprep.mubr.bf16.mxu0 %v1011
        %1307 = vmatmul.mubr.bf16.gmra.mrb[0].mxu0 %v1010
        %v1308 = vpop.f32.mrb[0].mxu0
        %v1309 = vadd.f32 0.0, %v1308
        %v1310 = vpop.f32.mrb[0].mxu0
        %v1311 = vpop.f32.mrb[0].mxu0
        %v1312 = vadd.f32 0.0, %v1311
        %v1313 = vpop.f32.mrb[0].mxu0
        %1314 = vmatprep.mubr.bf16.mxu0 %v1013
        %1315 = vmatmul.mubr.bf16.gmra.mrb[0].mxu0 %v1012
        %v1316 = vpop.f32.mrb[0].mxu0
        %v1317 = vadd.f32 0.0, %v1316
        %v1318 = vpop.f32.mrb[0].mxu0
        %v1319 = vpop.f32.mrb[0].mxu0
        %v1320 = vadd.f32 0.0, %v1319
        %v1321 = vpop.f32.mrb[0].mxu0
        %1322 = vmatprep.mubr.bf16.mxu0 %v1015
        %1323 = vmatmul.mubr.bf16.gmra.mrb[0].mxu0 %v1014
        %v1324 = vpop.f32.mrb[0].mxu0
        %v1325 = vadd.f32 0.0, %v1324
        %v1326 = vpop.f32.mrb[0].mxu0
        %v1327 = vpop.f32.mrb[0].mxu0
        %v1328 = vadd.f32 0.0, %v1327
        %v1329 = vpop.f32.mrb[0].mxu0
        %1330 = vmatprep.mubr.bf16.mxu0 %v1017
        %1331 = vmatmul.mubr.bf16.gmra.mrb[0].mxu0 %v1016
        %v1332 = vpop.f32.mrb[0].mxu0
        %v1333 = vadd.f32 0.0, %v1332
        %v1334 = vpop.f32.mrb[0].mxu0
        %v1335 = vpop.f32.mrb[0].mxu0
        %v1336 = vadd.f32 0.0, %v1335
        %v1337 = vpop.f32.mrb[0].mxu0
        %1338 = vdwg.mxu0
        %v1371 = vunpack.c.l.b16 %v1018
        %v1372 = vunpack.c.l.b16 %v1019
        %v1373 = vunpack.c.l.b16 %v1020
        %v1374 = vunpack.c.l.b16 %v1021
        %v1375 = vunpack.c.l.b16 %v1022
        %v1376 = vunpack.c.l.b16 %v1023
        %v1377 = vunpack.c.l.b16 %v1024
        %v1378 = vunpack.c.l.b16 %v1025
        %v1379 = vunpack.c.l.b16 %v1026
        %v1380 = vunpack.c.l.b16 %v1027
        %v1381 = vunpack.c.l.b16 %v1028
        %v1382 = vunpack.c.l.b16 %v1029
        %v1383 = vunpack.c.l.b16 %v1030
        %v1384 = vunpack.c.l.b16 %v1031
        %v1385 = vunpack.c.l.b16 %v1032
        %v1386 = vunpack.c.l.b16 %v1033
        %v1387 = vunpack.c.l.b16 %v1034
        %v1388 = vunpack.c.l.b16 %v1035
        %v1389 = vunpack.c.l.b16 %v1036
        %v1390 = vunpack.c.l.b16 %v1037
        %v1391 = vunpack.c.l.b16 %v1038
        %v1392 = vunpack.c.l.b16 %v1039
        %v1393 = vunpack.c.l.b16 %v1040
        %v1394 = vunpack.c.l.b16 %v1041
        %v1395 = vunpack.c.l.b16 %v1042
        %v1396 = vunpack.c.l.b16 %v1043
        %v1397 = vunpack.c.l.b16 %v1044
        %v1398 = vunpack.c.l.b16 %v1045
        %v1399 = vunpack.c.l.b16 %v1046
        %v1400 = vunpack.c.l.b16 %v1047
        %v1401 = vunpack.c.l.b16 %v1048
        %v1402 = vunpack.c.l.b16 %v1049
        %v1403 = vpack.c.b16 %v1372, %v1371
        %v1404 = vpack.c.b16 %v1374, %v1373
        %v1405 = vpack.c.b16 %v1376, %v1375
        %v1406 = vpack.c.b16 %v1378, %v1377
        %v1407 = vpack.c.b16 %v1380, %v1379
        %v1408 = vpack.c.b16 %v1382, %v1381
        %v1409 = vpack.c.b16 %v1384, %v1383
        %v1410 = vpack.c.b16 %v1386, %v1385
        %v1411 = vpack.c.b16 %v1388, %v1387
        %v1412 = vpack.c.b16 %v1390, %v1389
        %v1413 = vpack.c.b16 %v1392, %v1391
        %v1414 = vpack.c.b16 %v1394, %v1393
        %v1415 = vpack.c.b16 %v1396, %v1395
        %v1416 = vpack.c.b16 %v1398, %v1397
        %v1417 = vpack.c.b16 %v1400, %v1399
        %v1418 = vpack.c.b16 %v1402, %v1401
        %1435 = vmatprep.subr.bf16.mxu0 0
        %1436 = vmatpush1.bf16.msra.mxu0 %v1403
        %1437 = vmatprep.subr.bf16.mxu0 0
        %1438 = vmatpush1.bf16.msra.mxu0 %v1404
        %1439 = vmatprep.subr.bf16.mxu0 0
        %1440 = vmatpush1.bf16.msra.mxu0 %v1405
        %1441 = vmatprep.subr.bf16.mxu0 0
        %1442 = vmatpush1.bf16.msra.mxu0 %v1406
        %1443 = vmatprep.subr.bf16.mxu0 0
        %1444 = vmatpush1.bf16.msra.mxu0 %v1407
        %1445 = vmatprep.subr.bf16.mxu0 0
        %1446 = vmatpush1.bf16.msra.mxu0 %v1408
        %1447 = vmatprep.subr.bf16.mxu0 0
        %1448 = vmatpush1.bf16.msra.mxu0 %v1409
        %1449 = vmatprep.subr.bf16.mxu0 0
        %1450 = vmatpush1.bf16.msra.mxu0 %v1410
        %1451 = vmatprep.subr.bf16.mxu0 0
        %1452 = vmatpush1.bf16.msra.mxu0 %v1411
        %1453 = vmatprep.subr.bf16.mxu0 0
        %1454 = vmatpush1.bf16.msra.mxu0 %v1412
        %1455 = vmatprep.subr.bf16.mxu0 0
        %1456 = vmatpush1.bf16.msra.mxu0 %v1413
        %1457 = vmatprep.subr.bf16.mxu0 0
        %1458 = vmatpush1.bf16.msra.mxu0 %v1414
        %1459 = vmatprep.subr.bf16.mxu0 0
        %1460 = vmatpush1.bf16.msra.mxu0 %v1415
        %1461 = vmatprep.subr.bf16.mxu0 0
        %1462 = vmatpush1.bf16.msra.mxu0 %v1416
        %1463 = vmatprep.subr.bf16.mxu0 0
        %1464 = vmatpush1.bf16.msra.mxu0 %v1417
        %1465 = vmatprep.subr.bf16.mxu0 0
        %1466 = vmatpush1.bf16.msra.mxu0 %v1418
        %1467 = vmatprep.mubr.bf16.mxu0 %v987
        %1468 = vmatmul.mubr.bf16.gmra.mrb[0].mxu0 %v986
        %v1469 = vpop.f32.mrb[0].mxu0
        %v1470 = vadd.f32 %v1213, %v1469
        %v1471 = vpop.f32.mrb[0].mxu0
        %v1472 = vpop.f32.mrb[0].mxu0
        %v1473 = vadd.f32 %v1216, %v1472
        %v1474 = vpop.f32.mrb[0].mxu0
        %1475 = vmatprep.mubr.bf16.mxu0 %v989
        %1476 = vmatmul.mubr.bf16.gmra.mrb[0].mxu0 %v988
        %v1477 = vpop.f32.mrb[0].mxu0
        %v1478 = vadd.f32 %v1221, %v1477
        %v1479 = vpop.f32.mrb[0].mxu0
        %v1480 = vpop.f32.mrb[0].mxu0
        %v1481 = vadd.f32 %v1224, %v1480
        %v1482 = vpop.f32.mrb[0].mxu0
        %1483 = vmatprep.mubr.bf16.mxu0 %v991
        %1484 = vmatmul.mubr.bf16.gmra.mrb[0].mxu0 %v990
        %v1485 = vpop.f32.mrb[0].mxu0
        %v1486 = vadd.f32 %v1229, %v1485
        %v1487 = vpop.f32.mrb[0].mxu0
        %v1488 = vpop.f32.mrb[0].mxu0
        %v1489 = vadd.f32 %v1232, %v1488
        %v1490 = vpop.f32.mrb[0].mxu0
        %1491 = vmatprep.mubr.bf16.mxu0 %v993
        %1492 = vmatmul.mubr.bf16.gmra.mrb[0].mxu0 %v992
        %v1493 = vpop.f32.mrb[0].mxu0
        %v1494 = vadd.f32 %v1237, %v1493
        %v1495 = vpop.f32.mrb[0].mxu0
        %v1496 = vpop.f32.mrb[0].mxu0
        %v1497 = vadd.f32 %v1240, %v1496
        %v1498 = vpop.f32.mrb[0].mxu0
        %1499 = vmatprep.mubr.bf16.mxu0 %v995
        %1500 = vmatmul.mubr.bf16.gmra.mrb[0].mxu0 %v994
        %v1501 = vpop.f32.mrb[0].mxu0
        %v1502 = vadd.f32 %v1245, %v1501
        %v1503 = vpop.f32.mrb[0].mxu0
        %v1504 = vpop.f32.mrb[0].mxu0
        %v1505 = vadd.f32 %v1248, %v1504
        %v1506 = vpop.f32.mrb[0].mxu0
        %1507 = vmatprep.mubr.bf16.mxu0 %v997
        %1508 = vmatmul.mubr.bf16.gmra.mrb[0].mxu0 %v996
        %v1509 = vpop.f32.mrb[0].mxu0
        %v1510 = vadd.f32 %v1253, %v1509
        %v1511 = vpop.f32.mrb[0].mxu0
        %v1512 = vpop.f32.mrb[0].mxu0
        %v1513 = vadd.f32 %v1256, %v1512
        %v1514 = vpop.f32.mrb[0].mxu0
        %1515 = vmatprep.mubr.bf16.mxu0 %v999
        %1516 = vmatmul.mubr.bf16.gmra.mrb[0].mxu0 %v998
        %v1517 = vpop.f32.mrb[0].mxu0
        %v1518 = vadd.f32 %v1261, %v1517
        %v1519 = vpop.f32.mrb[0].mxu0
        %v1520 = vpop.f32.mrb[0].mxu0
        %v1521 = vadd.f32 %v1264, %v1520
        %v1522 = vpop.f32.mrb[0].mxu0
        %1523 = vmatprep.mubr.bf16.mxu0 %v1001
        %1524 = vmatmul.mubr.bf16.gmra.mrb[0].mxu0 %v1000
        %v1525 = vpop.f32.mrb[0].mxu0
        %v1526 = vadd.f32 %v1269, %v1525
        %v1527 = vpop.f32.mrb[0].mxu0
        %v1528 = vpop.f32.mrb[0].mxu0
        %v1529 = vadd.f32 %v1272, %v1528
        %v1530 = vpop.f32.mrb[0].mxu0
        %1531 = vmatprep.mubr.bf16.mxu0 %v1003
        %1532 = vmatmul.mubr.bf16.gmra.mrb[0].mxu0 %v1002
        %v1533 = vpop.f32.mrb[0].mxu0
        %v1534 = vadd.f32 %v1277, %v1533
        %v1535 = vpop.f32.mrb[0].mxu0
        %v1536 = vpop.f32.mrb[0].mxu0
        %v1537 = vadd.f32 %v1280, %v1536
        %v1538 = vpop.f32.mrb[0].mxu0
        %1539 = vmatprep.mubr.bf16.mxu0 %v1005
        %1540 = vmatmul.mubr.bf16.gmra.mrb[0].mxu0 %v1004
        %v1541 = vpop.f32.mrb[0].mxu0
        %v1542 = vadd.f32 %v1285, %v1541
        %v1543 = vpop.f32.mrb[0].mxu0
        %v1544 = vpop.f32.mrb[0].mxu0
        %v1545 = vadd.f32 %v1288, %v1544
        %v1546 = vpop.f32.mrb[0].mxu0
        %1547 = vmatprep.mubr.bf16.mxu0 %v1007
        %1548 = vmatmul.mubr.bf16.gmra.mrb[0].mxu0 %v1006
        %v1549 = vpop.f32.mrb[0].mxu0
        %v1550 = vadd.f32 %v1293, %v1549
        %v1551 = vpop.f32.mrb[0].mxu0
        %v1552 = vpop.f32.mrb[0].mxu0
        %v1553 = vadd.f32 %v1296, %v1552
        %v1554 = vpop.f32.mrb[0].mxu0
        %1555 = vmatprep.mubr.bf16.mxu0 %v1009
        %1556 = vmatmul.mubr.bf16.gmra.mrb[0].mxu0 %v1008
        %v1557 = vpop.f32.mrb[0].mxu0
        %v1558 = vadd.f32 %v1301, %v1557
        %v1559 = vpop.f32.mrb[0].mxu0
        %v1560 = vpop.f32.mrb[0].mxu0
        %v1561 = vadd.f32 %v1304, %v1560
        %v1562 = vpop.f32.mrb[0].mxu0
        %1563 = vmatprep.mubr.bf16.mxu0 %v1011
        %1564 = vmatmul.mubr.bf16.gmra.mrb[0].mxu0 %v1010
        %v1565 = vpop.f32.mrb[0].mxu0
        %v1566 = vadd.f32 %v1309, %v1565
        %v1567 = vpop.f32.mrb[0].mxu0
        %v1568 = vpop.f32.mrb[0].mxu0
        %v1569 = vadd.f32 %v1312, %v1568
        %v1570 = vpop.f32.mrb[0].mxu0
        %1571 = vmatprep.mubr.bf16.mxu0 %v1013
        %1572 = vmatmul.mubr.bf16.gmra.mrb[0].mxu0 %v1012
        %v1573 = vpop.f32.mrb[0].mxu0
        %v1574 = vadd.f32 %v1317, %v1573
        %v1575 = vpop.f32.mrb[0].mxu0
        %v1576 = vpop.f32.mrb[0].mxu0
        %v1577 = vadd.f32 %v1320, %v1576
        %v1578 = vpop.f32.mrb[0].mxu0
        %1579 = vmatprep.mubr.bf16.mxu0 %v1015
        %1580 = vmatmul.mubr.bf16.gmra.mrb[0].mxu0 %v1014
        %v1581 = vpop.f32.mrb[0].mxu0
        %v1582 = vadd.f32 %v1325, %v1581
        %v1583 = vpop.f32.mrb[0].mxu0
        %v1584 = vpop.f32.mrb[0].mxu0
        %v1585 = vadd.f32 %v1328, %v1584
        %v1586 = vpop.f32.mrb[0].mxu0
        %1587 = vmatprep.mubr.bf16.mxu0 %v1017
        %1588 = vmatmul.mubr.bf16.gmra.mrb[0].mxu0 %v1016
        %v1589 = vpop.f32.mrb[0].mxu0
        %v1590 = vadd.f32 %v1333, %v1589
        %v1591 = vpop.f32.mrb[0].mxu0
        %v1592 = vpop.f32.mrb[0].mxu0
        %v1593 = vadd.f32 %v1336, %v1592
        %v1594 = vpop.f32.mrb[0].mxu0
        %1595 = vdwg.mxu0
        %v1596 = vld [vmem:[%s427] sm:$0xff]
        %v1597 = vld [vmem:[%s427 + $0x8] sm:$0xff]
        %v1598 = vld [vmem:[%s427 + $0x10] sm:$0xff]
        %v1599 = vld [vmem:[%s427 + $0x18] sm:$0xff]
        %v1600 = vld [vmem:[%s427 + $0x20] sm:$0xff]
        %v1601 = vld [vmem:[%s427 + $0x28] sm:$0xff]
        %v1602 = vld [vmem:[%s427 + $0x30] sm:$0xff]
        %v1603 = vld [vmem:[%s427 + $0x38] sm:$0xff]
        %v1604 = vld [vmem:[%s427 + $0x40] sm:$0xff]
        %v1605 = vld [vmem:[%s427 + $0x48] sm:$0xff]
        %v1606 = vld [vmem:[%s427 + $0x50] sm:$0xff]
        %v1607 = vld [vmem:[%s427 + $0x58] sm:$0xff]
        %v1608 = vld [vmem:[%s427 + $0x60] sm:$0xff]
        %v1609 = vld [vmem:[%s427 + $0x68] sm:$0xff]
        %v1610 = vld [vmem:[%s427 + $0x70] sm:$0xff]
        %v1611 = vld [vmem:[%s427 + $0x78] sm:$0xff]
        %v1612 = vld [vmem:[%s427 + $0x80] sm:$0xff]
        %v1613 = vld [vmem:[%s427 + $0x88] sm:$0xff]
        %v1614 = vld [vmem:[%s427 + $0x90] sm:$0xff]
        %v1615 = vld [vmem:[%s427 + $0x98] sm:$0xff]
        %v1616 = vld [vmem:[%s427 + $0xa0] sm:$0xff]
        %v1617 = vld [vmem:[%s427 + $0xa8] sm:$0xff]
        %v1618 = vld [vmem:[%s427 + $0xb0] sm:$0xff]
        %v1619 = vld [vmem:[%s427 + $0xb8] sm:$0xff]
        %v1620 = vld [vmem:[%s427 + $0xc0] sm:$0xff]
        %v1621 = vld [vmem:[%s427 + $0xc8] sm:$0xff]
        %v1622 = vld [vmem:[%s427 + $0xd0] sm:$0xff]
        %v1623 = vld [vmem:[%s427 + $0xd8] sm:$0xff]
        %v1624 = vld [vmem:[%s427 + $0xe0] sm:$0xff]
        %v1625 = vld [vmem:[%s427 + $0xe8] sm:$0xff]
        %v1626 = vld [vmem:[%s427 + $0xf0] sm:$0xff]
        %v1627 = vld [vmem:[%s427 + $0xf8] sm:$0xff]
        %v1628 = vld [vmem:[%s5] sm:$0xff]
        %v1629 = vld [vmem:[%s5 + $0x8] sm:$0xff]
        %v1630 = vld [vmem:[%s6] sm:$0x1]
        %v1632 = vlaneseq
        %v1633 = vshrl.u32 %v1632, 7
        %v1634 = vsub.s32 0, %v1633
        %v1635 = vrot.slane %v1630, %v1634
        %vm1637 = vcmask 130048
        %v1639 = vsel %vm1637, %v1596, 0
        %v1642 = vsel %vm1637, %v1597, 0
        %v1645 = vsel %vm1637, %v1598, 0
        %v1648 = vsel %vm1637, %v1599, 0
        %v1651 = vsel %vm1637, %v1600, 0
        %v1654 = vsel %vm1637, %v1601, 0
        %v1657 = vsel %vm1637, %v1602, 0
        %v1660 = vsel %vm1637, %v1603, 0
        %v1663 = vsel %vm1637, %v1604, 0
        %v1666 = vsel %vm1637, %v1605, 0
        %v1669 = vsel %vm1637, %v1606, 0
        %v1672 = vsel %vm1637, %v1607, 0
        %v1675 = vsel %vm1637, %v1608, 0
        %v1678 = vsel %vm1637, %v1609, 0
        %v1681 = vsel %vm1637, %v1610, 0
        %v1684 = vsel %vm1637, %v1611, 0
        %v1687 = vsel %vm1637, %v1612, 0
        %v1690 = vsel %vm1637, %v1613, 0
        %v1693 = vsel %vm1637, %v1614, 0
        %v1696 = vsel %vm1637, %v1615, 0
        %v1699 = vsel %vm1637, %v1616, 0
        %v1702 = vsel %vm1637, %v1617, 0
        %v1705 = vsel %vm1637, %v1618, 0
        %v1708 = vsel %vm1637, %v1619, 0
        %v1711 = vsel %vm1637, %v1620, 0
        %v1714 = vsel %vm1637, %v1621, 0
        %v1717 = vsel %vm1637, %v1622, 0
        %v1720 = vsel %vm1637, %v1623, 0
        %v1723 = vsel %vm1637, %v1624, 0
        %v1726 = vsel %vm1637, %v1625, 0
        %v1729 = vsel %vm1637, %v1626, 0
        %v1732 = vsel %vm1637, %v1627, 0
        %1734 = vmatprep.subr.mxu0 0.0
        %1735 = vmatpush1.msra.mxu0 %v1628
        %1736 = vmatprep.subr.mxu0 0.0
        %1737 = vmatpush1.msra.mxu0 %v1629
        %1738 = vmatprep.subr.mxu0 0.0
        %1739 = vmatpush1.msra.mxu0 0.0
        %1740 = vmatprep.subr.mxu0 0.0
        %1741 = vmatpush1.msra.mxu0 0.0
        %1742 = vmatprep.subr.mxu0 0.0
        %1743 = vmatpush1.msra.mxu0 0.0
        %1744 = vmatprep.subr.mxu0 0.0
        %1745 = vmatpush1.msra.mxu0 0.0
        %1746 = vmatprep.subr.mxu0 0.0
        %1747 = vmatpush1.msra.mxu0 0.0
        %1748 = vmatprep.subr.mxu0 0.0
        %1749 = vmatpush1.msra.mxu0 0.0
        %1750 = vmatprep.subr.mxu0 0.0
        %1751 = vmatpush1.msra.mxu0 0.0
        %1752 = vmatprep.subr.mxu0 0.0
        %1753 = vmatpush1.msra.mxu0 0.0
        %1754 = vmatprep.subr.mxu0 0.0
        %1755 = vmatpush1.msra.mxu0 0.0
        %1756 = vmatprep.subr.mxu0 0.0
        %1757 = vmatpush1.msra.mxu0 0.0
        %1758 = vmatprep.subr.mxu0 0.0
        %1759 = vmatpush1.msra.mxu0 0.0
        %1760 = vmatprep.subr.mxu0 0.0
        %1761 = vmatpush1.msra.mxu0 0.0
        %1762 = vmatprep.subr.mxu0 0.0
        %1763 = vmatpush1.msra.mxu0 0.0
        %1764 = vmatprep.subr.mxu0 0.0
        %1765 = vmatpush1.msra.mxu0 0.0
        %1766 = vmatprep.subr.mxu0 0.0
        %1767 = vmatpush1.msra.mxu0 0.0
        %1768 = vmatprep.subr.mxu0 0.0
        %1769 = vmatpush1.msra.mxu0 0.0
        %1770 = vmatprep.subr.mxu0 0.0
        %1771 = vmatpush1.msra.mxu0 0.0
        %1772 = vmatprep.subr.mxu0 0.0
        %1773 = vmatpush1.msra.mxu0 0.0
        %1774 = vmatprep.subr.mxu0 0.0
        %1775 = vmatpush1.msra.mxu0 0.0
        %1776 = vmatprep.subr.mxu0 0.0
        %1777 = vmatpush1.msra.mxu0 0.0
        %1778 = vmatprep.subr.mxu0 0.0
        %1779 = vmatpush1.msra.mxu0 0.0
        %1780 = vmatprep.subr.mxu0 0.0
        %1781 = vmatpush1.msra.mxu0 0.0
        %1782 = vmatprep.subr.mxu0 0.0
        %1783 = vmatpush1.msra.mxu0 0.0
        %1784 = vmatprep.subr.mxu0 0.0
        %1785 = vmatpush1.msra.mxu0 0.0
        %1786 = vmatprep.subr.mxu0 0.0
        %1787 = vmatpush1.msra.mxu0 0.0
        %1788 = vmatprep.subr.mxu0 0.0
        %1789 = vmatpush1.msra.mxu0 0.0
        %1790 = vmatprep.subr.mxu0 0.0
        %1791 = vmatpush1.msra.mxu0 0.0
        %1792 = vmatprep.subr.mxu0 0.0
        %1793 = vmatpush1.msra.mxu0 0.0
        %1794 = vmatprep.subr.mxu0 0.0
        %1795 = vmatpush1.msra.mxu0 0.0
        %1796 = vmatprep.subr.mxu0 0.0
        %1797 = vmatpush1.msra.mxu0 0.0
        %1798 = vmatprep.mubr.f32.mxu0 0.0
        %1799 = vmatmul.mubr.f32.gmra.mrb[0].mxu0 %v1639
        %v1800 = vpop.f32.mrb[0].mxu0
        %v1801 = vadd.f32 %v1635, %v1800
        %v1802 = vpop.f32.mrb[0].mxu0
        %1803 = vmatprep.mubr.f32.mxu0 0.0
        %1804 = vmatmul.mubr.f32.gmra.mrb[0].mxu0 %v1642
        %v1805 = vpop.f32.mrb[0].mxu0
        %v1806 = vadd.f32 %v1635, %v1805
        %v1807 = vpop.f32.mrb[0].mxu0
        %1808 = vmatprep.mubr.f32.mxu0 0.0
        %1809 = vmatmul.mubr.f32.gmra.mrb[0].mxu0 %v1645
        %v1810 = vpop.f32.mrb[0].mxu0
        %v1811 = vadd.f32 %v1635, %v1810
        %v1812 = vpop.f32.mrb[0].mxu0
        %1813 = vmatprep.mubr.f32.mxu0 0.0
        %1814 = vmatmul.mubr.f32.gmra.mrb[0].mxu0 %v1648
        %v1815 = vpop.f32.mrb[0].mxu0
        %v1816 = vadd.f32 %v1635, %v1815
        %v1817 = vpop.f32.mrb[0].mxu0
        %1818 = vmatprep.mubr.f32.mxu0 0.0
        %1819 = vmatmul.mubr.f32.gmra.mrb[0].mxu0 %v1651
        %v1820 = vpop.f32.mrb[0].mxu0
        %v1821 = vadd.f32 %v1635, %v1820
        %v1822 = vpop.f32.mrb[0].mxu0
        %1823 = vmatprep.mubr.f32.mxu0 0.0
        %1824 = vmatmul.mubr.f32.gmra.mrb[0].mxu0 %v1654
        %v1825 = vpop.f32.mrb[0].mxu0
        %v1826 = vadd.f32 %v1635, %v1825
        %v1827 = vpop.f32.mrb[0].mxu0
        %1828 = vmatprep.mubr.f32.mxu0 0.0
        %1829 = vmatmul.mubr.f32.gmra.mrb[0].mxu0 %v1657
        %v1830 = vpop.f32.mrb[0].mxu0
        %v1831 = vadd.f32 %v1635, %v1830
        %v1832 = vpop.f32.mrb[0].mxu0
        %1833 = vmatprep.mubr.f32.mxu0 0.0
        %1834 = vmatmul.mubr.f32.gmra.mrb[0].mxu0 %v1660
        %v1835 = vpop.f32.mrb[0].mxu0
        %v1836 = vadd.f32 %v1635, %v1835
        %v1837 = vpop.f32.mrb[0].mxu0
        %1838 = vmatprep.mubr.f32.mxu0 0.0
        %1839 = vmatmul.mubr.f32.gmra.mrb[0].mxu0 %v1663
        %v1840 = vpop.f32.mrb[0].mxu0
        %v1841 = vadd.f32 %v1635, %v1840
        %v1842 = vpop.f32.mrb[0].mxu0
        %1843 = vmatprep.mubr.f32.mxu0 0.0
        %1844 = vmatmul.mubr.f32.gmra.mrb[0].mxu0 %v1666
        %v1845 = vpop.f32.mrb[0].mxu0
        %v1846 = vadd.f32 %v1635, %v1845
        %v1847 = vpop.f32.mrb[0].mxu0
        %1848 = vmatprep.mubr.f32.mxu0 0.0
        %1849 = vmatmul.mubr.f32.gmra.mrb[0].mxu0 %v1669
        %v1850 = vpop.f32.mrb[0].mxu0
        %v1851 = vadd.f32 %v1635, %v1850
        %v1852 = vpop.f32.mrb[0].mxu0
        %1853 = vmatprep.mubr.f32.mxu0 0.0
        %1854 = vmatmul.mubr.f32.gmra.mrb[0].mxu0 %v1672
        %v1855 = vpop.f32.mrb[0].mxu0
        %v1856 = vadd.f32 %v1635, %v1855
        %v1857 = vpop.f32.mrb[0].mxu0
        %1858 = vmatprep.mubr.f32.mxu0 0.0
        %1859 = vmatmul.mubr.f32.gmra.mrb[0].mxu0 %v1675
        %v1860 = vpop.f32.mrb[0].mxu0
        %v1861 = vadd.f32 %v1635, %v1860
        %v1862 = vpop.f32.mrb[0].mxu0
        %1863 = vmatprep.mubr.f32.mxu0 0.0
        %1864 = vmatmul.mubr.f32.gmra.mrb[0].mxu0 %v1678
        %v1865 = vpop.f32.mrb[0].mxu0
        %v1866 = vadd.f32 %v1635, %v1865
        %v1867 = vpop.f32.mrb[0].mxu0
        %1868 = vmatprep.mubr.f32.mxu0 0.0
        %1869 = vmatmul.mubr.f32.gmra.mrb[0].mxu0 %v1681
        %v1870 = vpop.f32.mrb[0].mxu0
        %v1871 = vadd.f32 %v1635, %v1870
        %v1872 = vpop.f32.mrb[0].mxu0
        %1873 = vmatprep.mubr.f32.mxu0 0.0
        %1874 = vmatmul.mubr.f32.gmra.mrb[0].mxu0 %v1684
        %v1875 = vpop.f32.mrb[0].mxu0
        %v1876 = vadd.f32 %v1635, %v1875
        %v1877 = vpop.f32.mrb[0].mxu0
        %1878 = vmatprep.mubr.f32.mxu0 0.0
        %1879 = vmatmul.mubr.f32.gmra.mrb[0].mxu0 %v1687
        %v1880 = vpop.f32.mrb[0].mxu0
        %v1881 = vadd.f32 %v1635, %v1880
        %v1882 = vpop.f32.mrb[0].mxu0
        %1883 = vmatprep.mubr.f32.mxu0 0.0
        %1884 = vmatmul.mubr.f32.gmra.mrb[0].mxu0 %v1690
        %v1885 = vpop.f32.mrb[0].mxu0
        %v1886 = vadd.f32 %v1635, %v1885
        %v1887 = vpop.f32.mrb[0].mxu0
        %1888 = vmatprep.mubr.f32.mxu0 0.0
        %1889 = vmatmul.mubr.f32.gmra.mrb[0].mxu0 %v1693
        %v1890 = vpop.f32.mrb[0].mxu0
        %v1891 = vadd.f32 %v1635, %v1890
        %v1892 = vpop.f32.mrb[0].mxu0
        %1893 = vmatprep.mubr.f32.mxu0 0.0
        %1894 = vmatmul.mubr.f32.gmra.mrb[0].mxu0 %v1696
        %v1895 = vpop.f32.mrb[0].mxu0
        %v1896 = vadd.f32 %v1635, %v1895
        %v1897 = vpop.f32.mrb[0].mxu0
        %1898 = vmatprep.mubr.f32.mxu0 0.0
        %1899 = vmatmul.mubr.f32.gmra.mrb[0].mxu0 %v1699
        %v1900 = vpop.f32.mrb[0].mxu0
        %v1901 = vadd.f32 %v1635, %v1900
        %v1902 = vpop.f32.mrb[0].mxu0
        %1903 = vmatprep.mubr.f32.mxu0 0.0
        %1904 = vmatmul.mubr.f32.gmra.mrb[0].mxu0 %v1702
        %v1905 = vpop.f32.mrb[0].mxu0
        %v1906 = vadd.f32 %v1635, %v1905
        %v1907 = vpop.f32.mrb[0].mxu0
        %1908 = vmatprep.mubr.f32.mxu0 0.0
        %1909 = vmatmul.mubr.f32.gmra.mrb[0].mxu0 %v1705
        %v1910 = vpop.f32.mrb[0].mxu0
        %v1911 = vadd.f32 %v1635, %v1910
        %v1912 = vpop.f32.mrb[0].mxu0
        %1913 = vmatprep.mubr.f32.mxu0 0.0
        %1914 = vmatmul.mubr.f32.gmra.mrb[0].mxu0 %v1708
        %v1915 = vpop.f32.mrb[0].mxu0
        %v1916 = vadd.f32 %v1635, %v1915
        %v1917 = vpop.f32.mrb[0].mxu0
        %1918 = vmatprep.mubr.f32.mxu0 0.0
        %1919 = vmatmul.mubr.f32.gmra.mrb[0].mxu0 %v1711
        %v1920 = vpop.f32.mrb[0].mxu0
        %v1921 = vadd.f32 %v1635, %v1920
        %v1922 = vpop.f32.mrb[0].mxu0
        %1923 = vmatprep.mubr.f32.mxu0 0.0
        %1924 = vmatmul.mubr.f32.gmra.mrb[0].mxu0 %v1714
        %v1925 = vpop.f32.mrb[0].mxu0
        %v1926 = vadd.f32 %v1635, %v1925
        %v1927 = vpop.f32.mrb[0].mxu0
        %1928 = vmatprep.mubr.f32.mxu0 0.0
        %1929 = vmatmul.mubr.f32.gmra.mrb[0].mxu0 %v1717
        %v1930 = vpop.f32.mrb[0].mxu0
        %v1931 = vadd.f32 %v1635, %v1930
        %v1932 = vpop.f32.mrb[0].mxu0
        %1933 = vmatprep.mubr.f32.mxu0 0.0
        %1934 = vmatmul.mubr.f32.gmra.mrb[0].mxu0 %v1720
        %v1935 = vpop.f32.mrb[0].mxu0
        %v1936 = vadd.f32 %v1635, %v1935
        %v1937 = vpop.f32.mrb[0].mxu0
        %1938 = vmatprep.mubr.f32.mxu0 0.0
        %1939 = vmatmul.mubr.f32.gmra.mrb[0].mxu0 %v1723
        %v1940 = vpop.f32.mrb[0].mxu0
        %v1941 = vadd.f32 %v1635, %v1940
        %v1942 = vpop.f32.mrb[0].mxu0
        %1943 = vmatprep.mubr.f32.mxu0 0.0
        %1944 = vmatmul.mubr.f32.gmra.mrb[0].mxu0 %v1726
        %v1945 = vpop.f32.mrb[0].mxu0
        %v1946 = vadd.f32 %v1635, %v1945
        %v1947 = vpop.f32.mrb[0].mxu0
        %1948 = vmatprep.mubr.f32.mxu0 0.0
        %1949 = vmatmul.mubr.f32.gmra.mrb[0].mxu0 %v1729
        %v1950 = vpop.f32.mrb[0].mxu0
        %v1951 = vadd.f32 %v1635, %v1950
        %v1952 = vpop.f32.mrb[0].mxu0
        %1953 = vmatprep.mubr.f32.mxu0 0.0
        %1954 = vmatmul.mubr.f32.gmra.mrb[0].mxu0 %v1732
        %v1955 = vpop.f32.mrb[0].mxu0
        %v1956 = vadd.f32 %v1635, %v1955
        %v1957 = vpop.f32.mrb[0].mxu0
        %1958 = vdwg.mxu0
        %v1959 = vxor.u32 %v1801, 2147483648
        %v1960 = vxor.u32 %v1806, 2147483648
        %v1961 = vxor.u32 %v1811, 2147483648
        %v1962 = vxor.u32 %v1816, 2147483648
        %v1963 = vxor.u32 %v1821, 2147483648
        %v1964 = vxor.u32 %v1826, 2147483648
        %v1965 = vxor.u32 %v1831, 2147483648
        %v1966 = vxor.u32 %v1836, 2147483648
        %v1967 = vxor.u32 %v1841, 2147483648
        %v1968 = vxor.u32 %v1846, 2147483648
        %v1969 = vxor.u32 %v1851, 2147483648
        %v1970 = vxor.u32 %v1856, 2147483648
        %v1971 = vxor.u32 %v1861, 2147483648
        %v1972 = vxor.u32 %v1866, 2147483648
        %v1973 = vxor.u32 %v1871, 2147483648
        %v1974 = vxor.u32 %v1876, 2147483648
        %v1975 = vxor.u32 %v1881, 2147483648
        %v1976 = vxor.u32 %v1886, 2147483648
        %v1977 = vxor.u32 %v1891, 2147483648
        %v1978 = vxor.u32 %v1896, 2147483648
        %v1979 = vxor.u32 %v1901, 2147483648
        %v1980 = vxor.u32 %v1906, 2147483648
        %v1981 = vxor.u32 %v1911, 2147483648
        %v1982 = vxor.u32 %v1916, 2147483648
        %v1983 = vxor.u32 %v1921, 2147483648
        %v1984 = vxor.u32 %v1926, 2147483648
        %v1985 = vxor.u32 %v1931, 2147483648
        %v1986 = vxor.u32 %v1936, 2147483648
        %v1987 = vxor.u32 %v1941, 2147483648
        %v1988 = vxor.u32 %v1946, 2147483648
        %v1989 = vxor.u32 %v1951, 2147483648
        %v1990 = vxor.u32 %v1956, 2147483648
        %v1991 = vmul.f32 %v1959, 1.442695
        %v1992 = vpow.pop %v1991
        %v1993 = vmul.f32 %v1960, 1.442695
        %v1994 = vpow.pop %v1993
        %v1995 = vmul.f32 %v1961, 1.442695
        %v1996 = vpow.pop %v1995
        %v1997 = vmul.f32 %v1962, 1.442695
        %v1998 = vpow.pop %v1997
        %v1999 = vmul.f32 %v1963, 1.442695
        %v2000 = vpow.pop %v1999
        %v2001 = vmul.f32 %v1964, 1.442695
        %v2002 = vpow.pop %v2001
        %v2003 = vmul.f32 %v1965, 1.442695
        %v2004 = vpow.pop %v2003
        %v2005 = vmul.f32 %v1966, 1.442695
        %v2006 = vpow.pop %v2005
        %v2007 = vmul.f32 %v1967, 1.442695
        %v2008 = vpow.pop %v2007
        %v2009 = vmul.f32 %v1968, 1.442695
        %v2010 = vpow.pop %v2009
        %v2011 = vmul.f32 %v1969, 1.442695
        %v2012 = vpow.pop %v2011
        %v2013 = vmul.f32 %v1970, 1.442695
        %v2014 = vpow.pop %v2013
        %v2015 = vmul.f32 %v1971, 1.442695
        %v2016 = vpow.pop %v2015
        %v2017 = vmul.f32 %v1972, 1.442695
        %v2018 = vpow.pop %v2017
        %v2019 = vmul.f32 %v1973, 1.442695
        %v2020 = vpow.pop %v2019
        %v2021 = vmul.f32 %v1974, 1.442695
        %v2022 = vpow.pop %v2021
        %v2023 = vmul.f32 %v1975, 1.442695
        %v2024 = vpow.pop %v2023
        %v2025 = vmul.f32 %v1976, 1.442695
        %v2026 = vpow.pop %v2025
        %v2027 = vmul.f32 %v1977, 1.442695
        %v2028 = vpow.pop %v2027
        %v2029 = vmul.f32 %v1978, 1.442695
        %v2030 = vpow.pop %v2029
        %v2031 = vmul.f32 %v1979, 1.442695
        %v2032 = vpow.pop %v2031
        %v2033 = vmul.f32 %v1980, 1.442695
        %v2034 = vpow.pop %v2033
        %v2035 = vmul.f32 %v1981, 1.442695
        %v2036 = vpow.pop %v2035
        %v2037 = vmul.f32 %v1982, 1.442695
        %v2038 = vpow.pop %v2037
        %v2039 = vmul.f32 %v1983, 1.442695
        %v2040 = vpow.pop %v2039
        %v2041 = vmul.f32 %v1984, 1.442695
        %v2042 = vpow.pop %v2041
        %v2043 = vmul.f32 %v1985, 1.442695
        %v2044 = vpow.pop %v2043
        %v2045 = vmul.f32 %v1986, 1.442695
        %v2046 = vpow.pop %v2045
        %v2047 = vmul.f32 %v1987, 1.442695
        %v2048 = vpow.pop %v2047
        %v2049 = vmul.f32 %v1988, 1.442695
        %v2050 = vpow.pop %v2049
        %v2051 = vmul.f32 %v1989, 1.442695
        %v2052 = vpow.pop %v2051
        %v2053 = vmul.f32 %v1990, 1.442695
        %v2054 = vpow.pop %v2053
        %v2055 = vadd.f32 %v1992, 1.0
        %v2056 = vadd.f32 %v1994, 1.0
        %v2057 = vadd.f32 %v1996, 1.0
        %v2058 = vadd.f32 %v1998, 1.0
        %v2059 = vadd.f32 %v2000, 1.0
        %v2060 = vadd.f32 %v2002, 1.0
        %v2061 = vadd.f32 %v2004, 1.0
        %v2062 = vadd.f32 %v2006, 1.0
        %v2063 = vadd.f32 %v2008, 1.0
        %v2064 = vadd.f32 %v2010, 1.0
        %v2065 = vadd.f32 %v2012, 1.0
        %v2066 = vadd.f32 %v2014, 1.0
        %v2067 = vadd.f32 %v2016, 1.0
        %v2068 = vadd.f32 %v2018, 1.0
        %v2069 = vadd.f32 %v2020, 1.0
        %v2070 = vadd.f32 %v2022, 1.0
        %v2071 = vadd.f32 %v2024, 1.0
        %v2072 = vadd.f32 %v2026, 1.0
        %v2073 = vadd.f32 %v2028, 1.0
        %v2074 = vadd.f32 %v2030, 1.0
        %v2075 = vadd.f32 %v2032, 1.0
        %v2076 = vadd.f32 %v2034, 1.0
        %v2077 = vadd.f32 %v2036, 1.0
        %v2078 = vadd.f32 %v2038, 1.0
        %v2079 = vadd.f32 %v2040, 1.0
        %v2080 = vadd.f32 %v2042, 1.0
        %v2081 = vadd.f32 %v2044, 1.0
        %v2082 = vadd.f32 %v2046, 1.0
        %v2083 = vadd.f32 %v2048, 1.0
        %v2084 = vadd.f32 %v2050, 1.0
        %v2085 = vadd.f32 %v2052, 1.0
        %v2086 = vadd.f32 %v2054, 1.0
        %v2087 = vrcp.pop %v2055
        %v2088 = vmul.f32 1.0, %v2087
        %v2089 = vrcp.pop %v2056
        %v2090 = vmul.f32 1.0, %v2089
        %v2091 = vrcp.pop %v2057
        %v2092 = vmul.f32 1.0, %v2091
        %v2093 = vrcp.pop %v2058
        %v2094 = vmul.f32 1.0, %v2093
        %v2095 = vrcp.pop %v2059
        %v2096 = vmul.f32 1.0, %v2095
        %v2097 = vrcp.pop %v2060
        %v2098 = vmul.f32 1.0, %v2097
        %v2099 = vrcp.pop %v2061
        %v2100 = vmul.f32 1.0, %v2099
        %v2101 = vrcp.pop %v2062
        %v2102 = vmul.f32 1.0, %v2101
        %v2103 = vrcp.pop %v2063
        %v2104 = vmul.f32 1.0, %v2103
        %v2105 = vrcp.pop %v2064
        %v2106 = vmul.f32 1.0, %v2105
        %v2107 = vrcp.pop %v2065
        %v2108 = vmul.f32 1.0, %v2107
        %v2109 = vrcp.pop %v2066
        %v2110 = vmul.f32 1.0, %v2109
        %v2111 = vrcp.pop %v2067
        %v2112 = vmul.f32 1.0, %v2111
        %v2113 = vrcp.pop %v2068
        %v2114 = vmul.f32 1.0, %v2113
        %v2115 = vrcp.pop %v2069
        %v2116 = vmul.f32 1.0, %v2115
        %v2117 = vrcp.pop %v2070
        %v2118 = vmul.f32 1.0, %v2117
        %v2119 = vrcp.pop %v2071
        %v2120 = vmul.f32 1.0, %v2119
        %v2121 = vrcp.pop %v2072
        %v2122 = vmul.f32 1.0, %v2121
        %v2123 = vrcp.pop %v2073
        %v2124 = vmul.f32 1.0, %v2123
        %v2125 = vrcp.pop %v2074
        %v2126 = vmul.f32 1.0, %v2125
        %v2127 = vrcp.pop %v2075
        %v2128 = vmul.f32 1.0, %v2127
        %v2129 = vrcp.pop %v2076
        %v2130 = vmul.f32 1.0, %v2129
        %v2131 = vrcp.pop %v2077
        %v2132 = vmul.f32 1.0, %v2131
        %v2133 = vrcp.pop %v2078
        %v2134 = vmul.f32 1.0, %v2133
        %v2135 = vrcp.pop %v2079
        %v2136 = vmul.f32 1.0, %v2135
        %v2137 = vrcp.pop %v2080
        %v2138 = vmul.f32 1.0, %v2137
        %v2139 = vrcp.pop %v2081
        %v2140 = vmul.f32 1.0, %v2139
        %v2141 = vrcp.pop %v2082
        %v2142 = vmul.f32 1.0, %v2141
        %v2143 = vrcp.pop %v2083
        %v2144 = vmul.f32 1.0, %v2143
        %v2145 = vrcp.pop %v2084
        %v2146 = vmul.f32 1.0, %v2145
        %v2147 = vrcp.pop %v2085
        %v2148 = vmul.f32 1.0, %v2147
        %v2149 = vrcp.pop %v2086
        %v2150 = vmul.f32 1.0, %v2149
        %v2151 = vmul.f32 %v1801, %v2088
        %v2152 = vmul.f32 %v1806, %v2090
        %v2153 = vmul.f32 %v1811, %v2092
        %v2154 = vmul.f32 %v1816, %v2094
        %v2155 = vmul.f32 %v1821, %v2096
        %v2156 = vmul.f32 %v1826, %v2098
        %v2157 = vmul.f32 %v1831, %v2100
        %v2158 = vmul.f32 %v1836, %v2102
        %v2159 = vmul.f32 %v1841, %v2104
        %v2160 = vmul.f32 %v1846, %v2106
        %v2161 = vmul.f32 %v1851, %v2108
        %v2162 = vmul.f32 %v1856, %v2110
        %v2163 = vmul.f32 %v1861, %v2112
        %v2164 = vmul.f32 %v1866, %v2114
        %v2165 = vmul.f32 %v1871, %v2116
        %v2166 = vmul.f32 %v1876, %v2118
        %v2167 = vmul.f32 %v1881, %v2120
        %v2168 = vmul.f32 %v1886, %v2122
        %v2169 = vmul.f32 %v1891, %v2124
        %v2170 = vmul.f32 %v1896, %v2126
        %v2171 = vmul.f32 %v1901, %v2128
        %v2172 = vmul.f32 %v1906, %v2130
        %v2173 = vmul.f32 %v1911, %v2132
        %v2174 = vmul.f32 %v1916, %v2134
        %v2175 = vmul.f32 %v1921, %v2136
        %v2176 = vmul.f32 %v1926, %v2138
        %v2177 = vmul.f32 %v1931, %v2140
        %v2178 = vmul.f32 %v1936, %v2142
        %v2179 = vmul.f32 %v1941, %v2144
        %v2180 = vmul.f32 %v1946, %v2146
        %v2181 = vmul.f32 %v1951, %v2148
        %v2182 = vmul.f32 %v1956, %v2150
        %v2183 = vld [vmem:[%s7] sm:$0xff]
        %v2184 = vld [vmem:[%s7 + $0x8] sm:$0xff]
        %v2185 = vld [vmem:[%s7 + $0x10] sm:$0xff]
        %v2186 = vld [vmem:[%s7 + $0x18] sm:$0xff]
        %vm2187 = vcmask 261120
        %v2189 = vsel %vm2187, %v2151, 0
        %v2192 = vsel %vm2187, %v2152, 0
        %v2195 = vsel %vm2187, %v2153, 0
        %v2198 = vsel %vm2187, %v2154, 0
        %v2201 = vsel %vm2187, %v2155, 0
        %v2204 = vsel %vm2187, %v2156, 0
        %v2207 = vsel %vm2187, %v2157, 0
        %v2210 = vsel %vm2187, %v2158, 0
        %v2213 = vsel %vm2187, %v2159, 0
        %v2216 = vsel %vm2187, %v2160, 0
        %v2219 = vsel %vm2187, %v2161, 0
        %v2222 = vsel %vm2187, %v2162, 0
        %v2225 = vsel %vm2187, %v2163, 0
        %v2228 = vsel %vm2187, %v2164, 0
        %v2231 = vsel %vm2187, %v2165, 0
        %v2234 = vsel %vm2187, %v2166, 0
        %v2237 = vsel %vm2187, %v2167, 0
        %v2240 = vsel %vm2187, %v2168, 0
        %v2243 = vsel %vm2187, %v2169, 0
        %v2246 = vsel %vm2187, %v2170, 0
        %v2249 = vsel %vm2187, %v2171, 0
        %v2252 = vsel %vm2187, %v2172, 0
        %v2255 = vsel %vm2187, %v2173, 0
        %v2258 = vsel %vm2187, %v2174, 0
        %v2261 = vsel %vm2187, %v2175, 0
        %v2264 = vsel %vm2187, %v2176, 0
        %v2267 = vsel %vm2187, %v2177, 0
        %v2270 = vsel %vm2187, %v2178, 0
        %v2273 = vsel %vm2187, %v2179, 0
        %v2276 = vsel %vm2187, %v2180, 0
        %v2279 = vsel %vm2187, %v2181, 0
        %v2282 = vsel %vm2187, %v2182, 0
        %2284 = vmatprep.subr.mxu0 0.0
        %2285 = vmatpush1.msra.mxu0 %v2183
        %2286 = vmatprep.subr.mxu0 0.0
        %2287 = vmatpush1.msra.mxu0 %v2184
        %2288 = vmatprep.subr.mxu0 0.0
        %2289 = vmatpush1.msra.mxu0 %v2185
        %2290 = vmatprep.subr.mxu0 0.0
        %2291 = vmatpush1.msra.mxu0 %v2186
        %2292 = vmatprep.subr.mxu0 0.0
        %2293 = vmatpush1.msra.mxu0 0.0
        %2294 = vmatprep.subr.mxu0 0.0
        %2295 = vmatpush1.msra.mxu0 0.0
        %2296 = vmatprep.subr.mxu0 0.0
        %2297 = vmatpush1.msra.mxu0 0.0
        %2298 = vmatprep.subr.mxu0 0.0
        %2299 = vmatpush1.msra.mxu0 0.0
        %2300 = vmatprep.subr.mxu0 0.0
        %2301 = vmatpush1.msra.mxu0 0.0
        %2302 = vmatprep.subr.mxu0 0.0
        %2303 = vmatpush1.msra.mxu0 0.0
        %2304 = vmatprep.subr.mxu0 0.0
        %2305 = vmatpush1.msra.mxu0 0.0
        %2306 = vmatprep.subr.mxu0 0.0
        %2307 = vmatpush1.msra.mxu0 0.0
        %2308 = vmatprep.subr.mxu0 0.0
        %2309 = vmatpush1.msra.mxu0 0.0
        %2310 = vmatprep.subr.mxu0 0.0
        %2311 = vmatpush1.msra.mxu0 0.0
        %2312 = vmatprep.subr.mxu0 0.0
        %2313 = vmatpush1.msra.mxu0 0.0
        %2314 = vmatprep.subr.mxu0 0.0
        %2315 = vmatpush1.msra.mxu0 0.0
        %2316 = vmatprep.subr.mxu0 0.0
        %2317 = vmatpush1.msra.mxu0 0.0
        %2318 = vmatprep.subr.mxu0 0.0
        %2319 = vmatpush1.msra.mxu0 0.0
        %2320 = vmatprep.subr.mxu0 0.0
        %2321 = vmatpush1.msra.mxu0 0.0
        %2322 = vmatprep.subr.mxu0 0.0
        %2323 = vmatpush1.msra.mxu0 0.0
        %2324 = vmatprep.subr.mxu0 0.0
        %2325 = vmatpush1.msra.mxu0 0.0
        %2326 = vmatprep.subr.mxu0 0.0
        %2327 = vmatpush1.msra.mxu0 0.0
        %2328 = vmatprep.subr.mxu0 0.0
        %2329 = vmatpush1.msra.mxu0 0.0
        %2330 = vmatprep.subr.mxu0 0.0
        %2331 = vmatpush1.msra.mxu0 0.0
        %2332 = vmatprep.subr.mxu0 0.0
        %2333 = vmatpush1.msra.mxu0 0.0
        %2334 = vmatprep.subr.mxu0 0.0
        %2335 = vmatpush1.msra.mxu0 0.0
        %2336 = vmatprep.subr.mxu0 0.0
        %2337 = vmatpush1.msra.mxu0 0.0
        %2338 = vmatprep.subr.mxu0 0.0
        %2339 = vmatpush1.msra.mxu0 0.0
        %2340 = vmatprep.subr.mxu0 0.0
        %2341 = vmatpush1.msra.mxu0 0.0
        %2342 = vmatprep.subr.mxu0 0.0
        %2343 = vmatpush1.msra.mxu0 0.0
        %2344 = vmatprep.subr.mxu0 0.0
        %2345 = vmatpush1.msra.mxu0 0.0
        %2346 = vmatprep.subr.mxu0 0.0
        %2347 = vmatpush1.msra.mxu0 0.0
        %2348 = vmatprep.mubr.f32.mxu0 0.0
        %2349 = vmatmul.mubr.f32.gmra.mrb[0].mxu0 %v2189
        %v2350 = vpop.f32.mrb[0].mxu0
        %v2351 = vadd.f32 0.0, %v2350
        %v2352 = vpop.f32.mrb[0].mxu0
        %2353 = vmatprep.mubr.f32.mxu0 0.0
        %2354 = vmatmul.mubr.f32.gmra.mrb[0].mxu0 %v2192
        %v2355 = vpop.f32.mrb[0].mxu0
        %v2356 = vadd.f32 0.0, %v2355
        %v2357 = vpop.f32.mrb[0].mxu0
        %2358 = vmatprep.mubr.f32.mxu0 0.0
        %2359 = vmatmul.mubr.f32.gmra.mrb[0].mxu0 %v2195
        %v2360 = vpop.f32.mrb[0].mxu0
        %v2361 = vadd.f32 0.0, %v2360
        %v2362 = vpop.f32.mrb[0].mxu0
        %2363 = vmatprep.mubr.f32.mxu0 0.0
        %2364 = vmatmul.mubr.f32.gmra.mrb[0].mxu0 %v2198
        %v2365 = vpop.f32.mrb[0].mxu0
        %v2366 = vadd.f32 0.0, %v2365
        %v2367 = vpop.f32.mrb[0].mxu0
        %2368 = vmatprep.mubr.f32.mxu0 0.0
        %2369 = vmatmul.mubr.f32.gmra.mrb[0].mxu0 %v2201
        %v2370 = vpop.f32.mrb[0].mxu0
        %v2371 = vadd.f32 0.0, %v2370
        %v2372 = vpop.f32.mrb[0].mxu0
        %2373 = vmatprep.mubr.f32.mxu0 0.0
        %2374 = vmatmul.mubr.f32.gmra.mrb[0].mxu0 %v2204
        %v2375 = vpop.f32.mrb[0].mxu0
        %v2376 = vadd.f32 0.0, %v2375
        %v2377 = vpop.f32.mrb[0].mxu0
        %2378 = vmatprep.mubr.f32.mxu0 0.0
        %2379 = vmatmul.mubr.f32.gmra.mrb[0].mxu0 %v2207
        %v2380 = vpop.f32.mrb[0].mxu0
        %v2381 = vadd.f32 0.0, %v2380
        %v2382 = vpop.f32.mrb[0].mxu0
        %2383 = vmatprep.mubr.f32.mxu0 0.0
        %2384 = vmatmul.mubr.f32.gmra.mrb[0].mxu0 %v2210
        %v2385 = vpop.f32.mrb[0].mxu0
        %v2386 = vadd.f32 0.0, %v2385
        %v2387 = vpop.f32.mrb[0].mxu0
        %2388 = vmatprep.mubr.f32.mxu0 0.0
        %2389 = vmatmul.mubr.f32.gmra.mrb[0].mxu0 %v2213
        %v2390 = vpop.f32.mrb[0].mxu0
        %v2391 = vadd.f32 0.0, %v2390
        %v2392 = vpop.f32.mrb[0].mxu0
        %2393 = vmatprep.mubr.f32.mxu0 0.0
        %2394 = vmatmul.mubr.f32.gmra.mrb[0].mxu0 %v2216
        %v2395 = vpop.f32.mrb[0].mxu0
        %v2396 = vadd.f32 0.0, %v2395
        %v2397 = vpop.f32.mrb[0].mxu0
        %2398 = vmatprep.mubr.f32.mxu0 0.0
        %2399 = vmatmul.mubr.f32.gmra.mrb[0].mxu0 %v2219
        %v2400 = vpop.f32.mrb[0].mxu0
        %v2401 = vadd.f32 0.0, %v2400
        %v2402 = vpop.f32.mrb[0].mxu0
        %2403 = vmatprep.mubr.f32.mxu0 0.0
        %2404 = vmatmul.mubr.f32.gmra.mrb[0].mxu0 %v2222
        %v2405 = vpop.f32.mrb[0].mxu0
        %v2406 = vadd.f32 0.0, %v2405
        %v2407 = vpop.f32.mrb[0].mxu0
        %2408 = vmatprep.mubr.f32.mxu0 0.0
        %2409 = vmatmul.mubr.f32.gmra.mrb[0].mxu0 %v2225
        %v2410 = vpop.f32.mrb[0].mxu0
        %v2411 = vadd.f32 0.0, %v2410
        %v2412 = vpop.f32.mrb[0].mxu0
        %2413 = vmatprep.mubr.f32.mxu0 0.0
        %2414 = vmatmul.mubr.f32.gmra.mrb[0].mxu0 %v2228
        %v2415 = vpop.f32.mrb[0].mxu0
        %v2416 = vadd.f32 0.0, %v2415
        %v2417 = vpop.f32.mrb[0].mxu0
        %2418 = vmatprep.mubr.f32.mxu0 0.0
        %2419 = vmatmul.mubr.f32.gmra.mrb[0].mxu0 %v2231
        %v2420 = vpop.f32.mrb[0].mxu0
        %v2421 = vadd.f32 0.0, %v2420
        %v2422 = vpop.f32.mrb[0].mxu0
        %2423 = vmatprep.mubr.f32.mxu0 0.0
        %2424 = vmatmul.mubr.f32.gmra.mrb[0].mxu0 %v2234
        %v2425 = vpop.f32.mrb[0].mxu0
        %v2426 = vadd.f32 0.0, %v2425
        %v2427 = vpop.f32.mrb[0].mxu0
        %2428 = vmatprep.mubr.f32.mxu0 0.0
        %2429 = vmatmul.mubr.f32.gmra.mrb[0].mxu0 %v2237
        %v2430 = vpop.f32.mrb[0].mxu0
        %v2431 = vadd.f32 0.0, %v2430
        %v2432 = vpop.f32.mrb[0].mxu0
        %2433 = vmatprep.mubr.f32.mxu0 0.0
        %2434 = vmatmul.mubr.f32.gmra.mrb[0].mxu0 %v2240
        %v2435 = vpop.f32.mrb[0].mxu0
        %v2436 = vadd.f32 0.0, %v2435
        %v2437 = vpop.f32.mrb[0].mxu0
        %2438 = vmatprep.mubr.f32.mxu0 0.0
        %2439 = vmatmul.mubr.f32.gmra.mrb[0].mxu0 %v2243
        %v2440 = vpop.f32.mrb[0].mxu0
        %v2441 = vadd.f32 0.0, %v2440
        %v2442 = vpop.f32.mrb[0].mxu0
        %2443 = vmatprep.mubr.f32.mxu0 0.0
        %2444 = vmatmul.mubr.f32.gmra.mrb[0].mxu0 %v2246
        %v2445 = vpop.f32.mrb[0].mxu0
        %v2446 = vadd.f32 0.0, %v2445
        %v2447 = vpop.f32.mrb[0].mxu0
        %2448 = vmatprep.mubr.f32.mxu0 0.0
        %2449 = vmatmul.mubr.f32.gmra.mrb[0].mxu0 %v2249
        %v2450 = vpop.f32.mrb[0].mxu0
        %v2451 = vadd.f32 0.0, %v2450
        %v2452 = vpop.f32.mrb[0].mxu0
        %2453 = vmatprep.mubr.f32.mxu0 0.0
        %2454 = vmatmul.mubr.f32.gmra.mrb[0].mxu0 %v2252
        %v2455 = vpop.f32.mrb[0].mxu0
        %v2456 = vadd.f32 0.0, %v2455
        %v2457 = vpop.f32.mrb[0].mxu0
        %2458 = vmatprep.mubr.f32.mxu0 0.0
        %2459 = vmatmul.mubr.f32.gmra.mrb[0].mxu0 %v2255
        %v2460 = vpop.f32.mrb[0].mxu0
        %v2461 = vadd.f32 0.0, %v2460
        %v2462 = vpop.f32.mrb[0].mxu0
        %2463 = vmatprep.mubr.f32.mxu0 0.0
        %2464 = vmatmul.mubr.f32.gmra.mrb[0].mxu0 %v2258
        %v2465 = vpop.f32.mrb[0].mxu0
        %v2466 = vadd.f32 0.0, %v2465
        %v2467 = vpop.f32.mrb[0].mxu0
        %2468 = vmatprep.mubr.f32.mxu0 0.0
        %2469 = vmatmul.mubr.f32.gmra.mrb[0].mxu0 %v2261
        %v2470 = vpop.f32.mrb[0].mxu0
        %v2471 = vadd.f32 0.0, %v2470
        %v2472 = vpop.f32.mrb[0].mxu0
        %2473 = vmatprep.mubr.f32.mxu0 0.0
        %2474 = vmatmul.mubr.f32.gmra.mrb[0].mxu0 %v2264
        %v2475 = vpop.f32.mrb[0].mxu0
        %v2476 = vadd.f32 0.0, %v2475
        %v2477 = vpop.f32.mrb[0].mxu0
        %2478 = vmatprep.mubr.f32.mxu0 0.0
        %2479 = vmatmul.mubr.f32.gmra.mrb[0].mxu0 %v2267
        %v2480 = vpop.f32.mrb[0].mxu0
        %v2481 = vadd.f32 0.0, %v2480
        %v2482 = vpop.f32.mrb[0].mxu0
        %2483 = vmatprep.mubr.f32.mxu0 0.0
        %2484 = vmatmul.mubr.f32.gmra.mrb[0].mxu0 %v2270
        %v2485 = vpop.f32.mrb[0].mxu0
        %v2486 = vadd.f32 0.0, %v2485
        %v2487 = vpop.f32.mrb[0].mxu0
        %2488 = vmatprep.mubr.f32.mxu0 0.0
        %2489 = vmatmul.mubr.f32.gmra.mrb[0].mxu0 %v2273
        %v2490 = vpop.f32.mrb[0].mxu0
        %v2491 = vadd.f32 0.0, %v2490
        %v2492 = vpop.f32.mrb[0].mxu0
        %2493 = vmatprep.mubr.f32.mxu0 0.0
        %2494 = vmatmul.mubr.f32.gmra.mrb[0].mxu0 %v2276
        %v2495 = vpop.f32.mrb[0].mxu0
        %v2496 = vadd.f32 0.0, %v2495
        %v2497 = vpop.f32.mrb[0].mxu0
        %2498 = vmatprep.mubr.f32.mxu0 0.0
        %2499 = vmatmul.mubr.f32.gmra.mrb[0].mxu0 %v2279
        %v2500 = vpop.f32.mrb[0].mxu0
        %v2501 = vadd.f32 0.0, %v2500
        %v2502 = vpop.f32.mrb[0].mxu0
        %2503 = vmatprep.mubr.f32.mxu0 0.0
        %2504 = vmatmul.mubr.f32.gmra.mrb[0].mxu0 %v2282
        %v2505 = vpop.f32.mrb[0].mxu0
        %v2506 = vadd.f32 0.0, %v2505
        %v2507 = vpop.f32.mrb[0].mxu0
        %2508 = vdwg.mxu0
        %v2509 = vadd.f32 %v1470, %v2351
        %v2510 = vadd.f32 %v1473, %v2356
        %v2511 = vadd.f32 %v1478, %v2361
        %v2512 = vadd.f32 %v1481, %v2366
        %v2513 = vadd.f32 %v1486, %v2371
        %v2514 = vadd.f32 %v1489, %v2376
        %v2515 = vadd.f32 %v1494, %v2381
        %v2516 = vadd.f32 %v1497, %v2386
        %v2517 = vadd.f32 %v1502, %v2391
        %v2518 = vadd.f32 %v1505, %v2396
        %v2519 = vadd.f32 %v1510, %v2401
        %v2520 = vadd.f32 %v1513, %v2406
        %v2521 = vadd.f32 %v1518, %v2411
        %v2522 = vadd.f32 %v1521, %v2416
        %v2523 = vadd.f32 %v1526, %v2421
        %v2524 = vadd.f32 %v1529, %v2426
        %v2525 = vadd.f32 %v1534, %v2431
        %v2526 = vadd.f32 %v1537, %v2436
        %v2527 = vadd.f32 %v1542, %v2441
        %v2528 = vadd.f32 %v1545, %v2446
        %v2529 = vadd.f32 %v1550, %v2451
        %v2530 = vadd.f32 %v1553, %v2456
        %v2531 = vadd.f32 %v1558, %v2461
        %v2532 = vadd.f32 %v1561, %v2466
        %v2533 = vadd.f32 %v1566, %v2471
        %v2534 = vadd.f32 %v1569, %v2476
        %v2535 = vadd.f32 %v1574, %v2481
        %v2536 = vadd.f32 %v1577, %v2486
        %v2537 = vadd.f32 %v1582, %v2491
        %v2538 = vadd.f32 %v1585, %v2496
        %v2539 = vadd.f32 %v1590, %v2501
        %v2540 = vadd.f32 %v1593, %v2506
        %v2541 = vld [vmem:[%s8] sm:$0x1]
        %v2543 = vlaneseq
        %v2544 = vshrl.u32 %v2543, 7
        %v2545 = vsub.s32 0, %v2544
        %v2546 = vrot.slane %v2541, %v2545
        %v2548 = vadd.f32 %v2509, %v2546
        %v2549 = vadd.f32 %v2510, %v2546
        %v2550 = vadd.f32 %v2511, %v2546
        %v2551 = vadd.f32 %v2512, %v2546
        %v2552 = vadd.f32 %v2513, %v2546
        %v2553 = vadd.f32 %v2514, %v2546
        %v2554 = vadd.f32 %v2515, %v2546
        %v2555 = vadd.f32 %v2516, %v2546
        %v2556 = vadd.f32 %v2517, %v2546
        %v2557 = vadd.f32 %v2518, %v2546
        %v2558 = vadd.f32 %v2519, %v2546
        %v2559 = vadd.f32 %v2520, %v2546
        %v2560 = vadd.f32 %v2521, %v2546
        %v2561 = vadd.f32 %v2522, %v2546
        %v2562 = vadd.f32 %v2523, %v2546
        %v2563 = vadd.f32 %v2524, %v2546
        %v2564 = vadd.f32 %v2525, %v2546
        %v2565 = vadd.f32 %v2526, %v2546
        %v2566 = vadd.f32 %v2527, %v2546
        %v2567 = vadd.f32 %v2528, %v2546
        %v2568 = vadd.f32 %v2529, %v2546
        %v2569 = vadd.f32 %v2530, %v2546
        %v2570 = vadd.f32 %v2531, %v2546
        %v2571 = vadd.f32 %v2532, %v2546
        %v2572 = vadd.f32 %v2533, %v2546
        %v2573 = vadd.f32 %v2534, %v2546
        %v2574 = vadd.f32 %v2535, %v2546
        %v2575 = vadd.f32 %v2536, %v2546
        %v2576 = vadd.f32 %v2537, %v2546
        %v2577 = vadd.f32 %v2538, %v2546
        %v2578 = vadd.f32 %v2539, %v2546
        %v2579 = vadd.f32 %v2540, %v2546
        %v2580 = vxor.u32 %v2548, 2147483648
        %v2581 = vxor.u32 %v2549, 2147483648
        %v2582 = vxor.u32 %v2550, 2147483648
        %v2583 = vxor.u32 %v2551, 2147483648
        %v2584 = vxor.u32 %v2552, 2147483648
        %v2585 = vxor.u32 %v2553, 2147483648
        %v2586 = vxor.u32 %v2554, 2147483648
        %v2587 = vxor.u32 %v2555, 2147483648
        %v2588 = vxor.u32 %v2556, 2147483648
        %v2589 = vxor.u32 %v2557, 2147483648
        %v2590 = vxor.u32 %v2558, 2147483648
        %v2591 = vxor.u32 %v2559, 2147483648
        %v2592 = vxor.u32 %v2560, 2147483648
        %v2593 = vxor.u32 %v2561, 2147483648
        %v2594 = vxor.u32 %v2562, 2147483648
        %v2595 = vxor.u32 %v2563, 2147483648
        %v2596 = vxor.u32 %v2564, 2147483648
        %v2597 = vxor.u32 %v2565, 2147483648
        %v2598 = vxor.u32 %v2566, 2147483648
        %v2599 = vxor.u32 %v2567, 2147483648
        %v2600 = vxor.u32 %v2568, 2147483648
        %v2601 = vxor.u32 %v2569, 2147483648
        %v2602 = vxor.u32 %v2570, 2147483648
        %v2603 = vxor.u32 %v2571, 2147483648
        %v2604 = vxor.u32 %v2572, 2147483648
        %v2605 = vxor.u32 %v2573, 2147483648
        %v2606 = vxor.u32 %v2574, 2147483648
        %v2607 = vxor.u32 %v2575, 2147483648
        %v2608 = vxor.u32 %v2576, 2147483648
        %v2609 = vxor.u32 %v2577, 2147483648
        %v2610 = vxor.u32 %v2578, 2147483648
        %v2611 = vxor.u32 %v2579, 2147483648
        %v2612 = vmul.f32 %v2580, 1.442695
        %v2613 = vpow.pop %v2612
        %v2614 = vmul.f32 %v2581, 1.442695
        %v2615 = vpow.pop %v2614
        %v2616 = vmul.f32 %v2582, 1.442695
        %v2617 = vpow.pop %v2616
        %v2618 = vmul.f32 %v2583, 1.442695
        %v2619 = vpow.pop %v2618
        %v2620 = vmul.f32 %v2584, 1.442695
        %v2621 = vpow.pop %v2620
        %v2622 = vmul.f32 %v2585, 1.442695
        %v2623 = vpow.pop %v2622
        %v2624 = vmul.f32 %v2586, 1.442695
        %v2625 = vpow.pop %v2624
        %v2626 = vmul.f32 %v2587, 1.442695
        %v2627 = vpow.pop %v2626
        %v2628 = vmul.f32 %v2588, 1.442695
        %v2629 = vpow.pop %v2628
        %v2630 = vmul.f32 %v2589, 1.442695
        %v2631 = vpow.pop %v2630
        %v2632 = vmul.f32 %v2590, 1.442695
        %v2633 = vpow.pop %v2632
        %v2634 = vmul.f32 %v2591, 1.442695
        %v2635 = vpow.pop %v2634
        %v2636 = vmul.f32 %v2592, 1.442695
        %v2637 = vpow.pop %v2636
        %v2638 = vmul.f32 %v2593, 1.442695
        %v2639 = vpow.pop %v2638
        %v2640 = vmul.f32 %v2594, 1.442695
        %v2641 = vpow.pop %v2640
        %v2642 = vmul.f32 %v2595, 1.442695
        %v2643 = vpow.pop %v2642
        %v2644 = vmul.f32 %v2596, 1.442695
        %v2645 = vpow.pop %v2644
        %v2646 = vmul.f32 %v2597, 1.442695
        %v2647 = vpow.pop %v2646
        %v2648 = vmul.f32 %v2598, 1.442695
        %v2649 = vpow.pop %v2648
        %v2650 = vmul.f32 %v2599, 1.442695
        %v2651 = vpow.pop %v2650
        %v2652 = vmul.f32 %v2600, 1.442695
        %v2653 = vpow.pop %v2652
        %v2654 = vmul.f32 %v2601, 1.442695
        %v2655 = vpow.pop %v2654
        %v2656 = vmul.f32 %v2602, 1.442695
        %v2657 = vpow.pop %v2656
        %v2658 = vmul.f32 %v2603, 1.442695
        %v2659 = vpow.pop %v2658
        %v2660 = vmul.f32 %v2604, 1.442695
        %v2661 = vpow.pop %v2660
        %v2662 = vmul.f32 %v2605, 1.442695
        %v2663 = vpow.pop %v2662
        %v2664 = vmul.f32 %v2606, 1.442695
        %v2665 = vpow.pop %v2664
        %v2666 = vmul.f32 %v2607, 1.442695
        %v2667 = vpow.pop %v2666
        %v2668 = vmul.f32 %v2608, 1.442695
        %v2669 = vpow.pop %v2668
        %v2670 = vmul.f32 %v2609, 1.442695
        %v2671 = vpow.pop %v2670
        %v2672 = vmul.f32 %v2610, 1.442695
        %v2673 = vpow.pop %v2672
        %v2674 = vmul.f32 %v2611, 1.442695
        %v2675 = vpow.pop %v2674
        %v2676 = vadd.f32 %v2613, 1.0
        %v2677 = vadd.f32 %v2615, 1.0
        %v2678 = vadd.f32 %v2617, 1.0
        %v2679 = vadd.f32 %v2619, 1.0
        %v2680 = vadd.f32 %v2621, 1.0
        %v2681 = vadd.f32 %v2623, 1.0
        %v2682 = vadd.f32 %v2625, 1.0
        %v2683 = vadd.f32 %v2627, 1.0
        %v2684 = vadd.f32 %v2629, 1.0
        %v2685 = vadd.f32 %v2631, 1.0
        %v2686 = vadd.f32 %v2633, 1.0
        %v2687 = vadd.f32 %v2635, 1.0
        %v2688 = vadd.f32 %v2637, 1.0
        %v2689 = vadd.f32 %v2639, 1.0
        %v2690 = vadd.f32 %v2641, 1.0
        %v2691 = vadd.f32 %v2643, 1.0
        %v2692 = vadd.f32 %v2645, 1.0
        %v2693 = vadd.f32 %v2647, 1.0
        %v2694 = vadd.f32 %v2649, 1.0
        %v2695 = vadd.f32 %v2651, 1.0
        %v2696 = vadd.f32 %v2653, 1.0
        %v2697 = vadd.f32 %v2655, 1.0
        %v2698 = vadd.f32 %v2657, 1.0
        %v2699 = vadd.f32 %v2659, 1.0
        %v2700 = vadd.f32 %v2661, 1.0
        %v2701 = vadd.f32 %v2663, 1.0
        %v2702 = vadd.f32 %v2665, 1.0
        %v2703 = vadd.f32 %v2667, 1.0
        %v2704 = vadd.f32 %v2669, 1.0
        %v2705 = vadd.f32 %v2671, 1.0
        %v2706 = vadd.f32 %v2673, 1.0
        %v2707 = vadd.f32 %v2675, 1.0
        %v2708 = vrcp.pop %v2676
        %v2709 = vmul.f32 1.0, %v2708
        %v2710 = vrcp.pop %v2677
        %v2711 = vmul.f32 1.0, %v2710
        %v2712 = vrcp.pop %v2678
        %v2713 = vmul.f32 1.0, %v2712
        %v2714 = vrcp.pop %v2679
        %v2715 = vmul.f32 1.0, %v2714
        %v2716 = vrcp.pop %v2680
        %v2717 = vmul.f32 1.0, %v2716
        %v2718 = vrcp.pop %v2681
        %v2719 = vmul.f32 1.0, %v2718
        %v2720 = vrcp.pop %v2682
        %v2721 = vmul.f32 1.0, %v2720
        %v2722 = vrcp.pop %v2683
        %v2723 = vmul.f32 1.0, %v2722
        %v2724 = vrcp.pop %v2684
        %v2725 = vmul.f32 1.0, %v2724
        %v2726 = vrcp.pop %v2685
        %v2727 = vmul.f32 1.0, %v2726
        %v2728 = vrcp.pop %v2686
        %v2729 = vmul.f32 1.0, %v2728
        %v2730 = vrcp.pop %v2687
        %v2731 = vmul.f32 1.0, %v2730
        %v2732 = vrcp.pop %v2688
        %v2733 = vmul.f32 1.0, %v2732
        %v2734 = vrcp.pop %v2689
        %v2735 = vmul.f32 1.0, %v2734
        %v2736 = vrcp.pop %v2690
        %v2737 = vmul.f32 1.0, %v2736
        %v2738 = vrcp.pop %v2691
        %v2739 = vmul.f32 1.0, %v2738
        %v2740 = vrcp.pop %v2692
        %v2741 = vmul.f32 1.0, %v2740
        %v2742 = vrcp.pop %v2693
        %v2743 = vmul.f32 1.0, %v2742
        %v2744 = vrcp.pop %v2694
        %v2745 = vmul.f32 1.0, %v2744
        %v2746 = vrcp.pop %v2695
        %v2747 = vmul.f32 1.0, %v2746
        %v2748 = vrcp.pop %v2696
        %v2749 = vmul.f32 1.0, %v2748
        %v2750 = vrcp.pop %v2697
        %v2751 = vmul.f32 1.0, %v2750
        %v2752 = vrcp.pop %v2698
        %v2753 = vmul.f32 1.0, %v2752
        %v2754 = vrcp.pop %v2699
        %v2755 = vmul.f32 1.0, %v2754
        %v2756 = vrcp.pop %v2700
        %v2757 = vmul.f32 1.0, %v2756
        %v2758 = vrcp.pop %v2701
        %v2759 = vmul.f32 1.0, %v2758
        %v2760 = vrcp.pop %v2702
        %v2761 = vmul.f32 1.0, %v2760
        %v2762 = vrcp.pop %v2703
        %v2763 = vmul.f32 1.0, %v2762
        %v2764 = vrcp.pop %v2704
        %v2765 = vmul.f32 1.0, %v2764
        %v2766 = vrcp.pop %v2705
        %v2767 = vmul.f32 1.0, %v2766
        %v2768 = vrcp.pop %v2706
        %v2769 = vmul.f32 1.0, %v2768
        %v2770 = vrcp.pop %v2707
        %v2771 = vmul.f32 1.0, %v2770
        %v2772 = vmul.f32 %v2548, %v2709
        %v2773 = vmul.f32 %v2549, %v2711
        %v2774 = vmul.f32 %v2550, %v2713
        %v2775 = vmul.f32 %v2551, %v2715
        %v2776 = vmul.f32 %v2552, %v2717
        %v2777 = vmul.f32 %v2553, %v2719
        %v2778 = vmul.f32 %v2554, %v2721
        %v2779 = vmul.f32 %v2555, %v2723
        %v2780 = vmul.f32 %v2556, %v2725
        %v2781 = vmul.f32 %v2557, %v2727
        %v2782 = vmul.f32 %v2558, %v2729
        %v2783 = vmul.f32 %v2559, %v2731
        %v2784 = vmul.f32 %v2560, %v2733
        %v2785 = vmul.f32 %v2561, %v2735
        %v2786 = vmul.f32 %v2562, %v2737
        %v2787 = vmul.f32 %v2563, %v2739
        %v2788 = vmul.f32 %v2564, %v2741
        %v2789 = vmul.f32 %v2565, %v2743
        %v2790 = vmul.f32 %v2566, %v2745
        %v2791 = vmul.f32 %v2567, %v2747
        %v2792 = vmul.f32 %v2568, %v2749
        %v2793 = vmul.f32 %v2569, %v2751
        %v2794 = vmul.f32 %v2570, %v2753
        %v2795 = vmul.f32 %v2571, %v2755
        %v2796 = vmul.f32 %v2572, %v2757
        %v2797 = vmul.f32 %v2573, %v2759
        %v2798 = vmul.f32 %v2574, %v2761
        %v2799 = vmul.f32 %v2575, %v2763
        %v2800 = vmul.f32 %v2576, %v2765
        %v2801 = vmul.f32 %v2577, %v2767
        %v2802 = vmul.f32 %v2578, %v2769
        %v2803 = vmul.f32 %v2579, %v2771
        %v2804 = vpack.c.bf16 %v2773, %v2772
        %v2805 = vpack.c.bf16 %v2775, %v2774
        %v2806 = vpack.c.bf16 %v2777, %v2776
        %v2807 = vpack.c.bf16 %v2779, %v2778
        %v2808 = vpack.c.bf16 %v2781, %v2780
        %v2809 = vpack.c.bf16 %v2783, %v2782
        %v2810 = vpack.c.bf16 %v2785, %v2784
        %v2811 = vpack.c.bf16 %v2787, %v2786
        %v2812 = vpack.c.bf16 %v2789, %v2788
        %v2813 = vpack.c.bf16 %v2791, %v2790
        %v2814 = vpack.c.bf16 %v2793, %v2792
        %v2815 = vpack.c.bf16 %v2795, %v2794
        %v2816 = vpack.c.bf16 %v2797, %v2796
        %v2817 = vpack.c.bf16 %v2799, %v2798
        %v2818 = vpack.c.bf16 %v2801, %v2800
        %v2819 = vpack.c.bf16 %v2803, %v2802
        %v2836 = vunpack.c.l.b16 %v2804
        %v2837 = vunpack.c.h.b16 %v2804
        %v2838 = vunpack.c.l.b16 %v2805
        %v2839 = vunpack.c.h.b16 %v2805
        %v2840 = vunpack.c.l.b16 %v2806
        %v2841 = vunpack.c.h.b16 %v2806
        %v2842 = vunpack.c.l.b16 %v2807
        %v2843 = vunpack.c.h.b16 %v2807
        %v2844 = vunpack.c.l.b16 %v2808
        %v2845 = vunpack.c.h.b16 %v2808
        %v2846 = vunpack.c.l.b16 %v2809
        %v2847 = vunpack.c.h.b16 %v2809
        %v2848 = vunpack.c.l.b16 %v2810
        %v2849 = vunpack.c.h.b16 %v2810
        %v2850 = vunpack.c.l.b16 %v2811
        %v2851 = vunpack.c.h.b16 %v2811
        %v2852 = vunpack.c.l.b16 %v2812
        %v2853 = vunpack.c.h.b16 %v2812
        %v2854 = vunpack.c.l.b16 %v2813
        %v2855 = vunpack.c.h.b16 %v2813
        %v2856 = vunpack.c.l.b16 %v2814
        %v2857 = vunpack.c.h.b16 %v2814
        %v2858 = vunpack.c.l.b16 %v2815
        %v2859 = vunpack.c.h.b16 %v2815
        %v2860 = vunpack.c.l.b16 %v2816
        %v2861 = vunpack.c.h.b16 %v2816
        %v2862 = vunpack.c.l.b16 %v2817
        %v2863 = vunpack.c.h.b16 %v2817
        %v2864 = vunpack.c.l.b16 %v2818
        %v2865 = vunpack.c.h.b16 %v2818
        %v2866 = vunpack.c.l.b16 %v2819
        %v2867 = vunpack.c.h.b16 %v2819
        %v2868 = vpack.c.b16 %v2836, %v2836
        %v2869 = vpack.c.b16 %v2837, %v2837
        %v2870 = vpack.c.b16 %v2838, %v2838
        %v2871 = vpack.c.b16 %v2839, %v2839
        %v2872 = vpack.c.b16 %v2840, %v2840
        %v2873 = vpack.c.b16 %v2841, %v2841
        %v2874 = vpack.c.b16 %v2842, %v2842
        %v2875 = vpack.c.b16 %v2843, %v2843
        %v2876 = vpack.c.b16 %v2844, %v2844
        %v2877 = vpack.c.b16 %v2845, %v2845
        %v2878 = vpack.c.b16 %v2846, %v2846
        %v2879 = vpack.c.b16 %v2847, %v2847
        %v2880 = vpack.c.b16 %v2848, %v2848
        %v2881 = vpack.c.b16 %v2849, %v2849
        %v2882 = vpack.c.b16 %v2850, %v2850
        %v2883 = vpack.c.b16 %v2851, %v2851
        %v2884 = vpack.c.b16 %v2852, %v2852
        %v2885 = vpack.c.b16 %v2853, %v2853
        %v2886 = vpack.c.b16 %v2854, %v2854
        %v2887 = vpack.c.b16 %v2855, %v2855
        %v2888 = vpack.c.b16 %v2856, %v2856
        %v2889 = vpack.c.b16 %v2857, %v2857
        %v2890 = vpack.c.b16 %v2858, %v2858
        %v2891 = vpack.c.b16 %v2859, %v2859
        %v2892 = vpack.c.b16 %v2860, %v2860
        %v2893 = vpack.c.b16 %v2861, %v2861
        %v2894 = vpack.c.b16 %v2862, %v2862
        %v2895 = vpack.c.b16 %v2863, %v2863
        %v2896 = vpack.c.b16 %v2864, %v2864
        %v2897 = vpack.c.b16 %v2865, %v2865
        %v2898 = vpack.c.b16 %v2866, %v2866
        %v2899 = vpack.c.b16 %v2867, %v2867
        %vm2932 = vcmask 257024
        %2933 = vst.msk [vmem:[%s390] sm:$0xf] %vm2932, %v2868
        %2934 = vst.msk [vmem:[%s390 + $0x4] sm:$0xf] %vm2932, %v2869
        %2935 = vst.msk [vmem:[%s390 + $0x8] sm:$0xf] %vm2932, %v2870
        %2936 = vst.msk [vmem:[%s390 + $0xc] sm:$0xf] %vm2932, %v2871
        %2937 = vst.msk [vmem:[%s390 + $0x10] sm:$0xf] %vm2932, %v2872
        %2938 = vst.msk [vmem:[%s390 + $0x14] sm:$0xf] %vm2932, %v2873
        %2939 = vst.msk [vmem:[%s390 + $0x18] sm:$0xf] %vm2932, %v2874
        %2940 = vst.msk [vmem:[%s390 + $0x1c] sm:$0xf] %vm2932, %v2875
        %2941 = vst.msk [vmem:[%s390 + $0x20] sm:$0xf] %vm2932, %v2876
        %2942 = vst.msk [vmem:[%s390 + $0x24] sm:$0xf] %vm2932, %v2877
        %2943 = vst.msk [vmem:[%s390 + $0x28] sm:$0xf] %vm2932, %v2878
        %2944 = vst.msk [vmem:[%s390 + $0x2c] sm:$0xf] %vm2932, %v2879
        %2945 = vst.msk [vmem:[%s390 + $0x30] sm:$0xf] %vm2932, %v2880
        %2946 = vst.msk [vmem:[%s390 + $0x34] sm:$0xf] %vm2932, %v2881
        %2947 = vst.msk [vmem:[%s390 + $0x38] sm:$0xf] %vm2932, %v2882
        %2948 = vst.msk [vmem:[%s390 + $0x3c] sm:$0xf] %vm2932, %v2883
        %2949 = vst.msk [vmem:[%s390 + $0x40] sm:$0xf] %vm2932, %v2884
        %2950 = vst.msk [vmem:[%s390 + $0x44] sm:$0xf] %vm2932, %v2885
        %2951 = vst.msk [vmem:[%s390 + $0x48] sm:$0xf] %vm2932, %v2886
        %2952 = vst.msk [vmem:[%s390 + $0x4c] sm:$0xf] %vm2932, %v2887
        %2953 = vst.msk [vmem:[%s390 + $0x50] sm:$0xf] %vm2932, %v2888
        %2954 = vst.msk [vmem:[%s390 + $0x54] sm:$0xf] %vm2932, %v2889
        %2955 = vst.msk [vmem:[%s390 + $0x58] sm:$0xf] %vm2932, %v2890
        %2956 = vst.msk [vmem:[%s390 + $0x5c] sm:$0xf] %vm2932, %v2891
        %2957 = vst.msk [vmem:[%s390 + $0x60] sm:$0xf] %vm2932, %v2892
        %2958 = vst.msk [vmem:[%s390 + $0x64] sm:$0xf] %vm2932, %v2893
        %2959 = vst.msk [vmem:[%s390 + $0x68] sm:$0xf] %vm2932, %v2894
        %2960 = vst.msk [vmem:[%s390 + $0x6c] sm:$0xf] %vm2932, %v2895
        %2961 = vst.msk [vmem:[%s390 + $0x70] sm:$0xf] %vm2932, %v2896
        %2962 = vst.msk [vmem:[%s390 + $0x74] sm:$0xf] %vm2932, %v2897
        %2963 = vst.msk [vmem:[%s390 + $0x78] sm:$0xf] %vm2932, %v2898
        %2964 = vst.msk [vmem:[%s390 + $0x7c] sm:$0xf] %vm2932, %v2899
        %s2965 = sand.u32 %s232, 1
        %s2966 = sand.u32 %s232, 1
        %s2967 = smul.addr %s2966, 128
        %s2968 = scalar_lea.vmem [#allocation2], %s2967
        // Predicated region
        $region57: #{forward.1} parent=55 // pred_check
          %p2969 = pneg %p242
        $region58: #{forward.1} parent=55 // pred_check_branch
          %2971 = sbr.rel (%p2969) target = $region60
        $region59: #{forward.1} parent=55 // pred_region
          %s2972 = smul.u32 32, %s20
          %s2973 = ssub.s32 125, %s2972
          %p2974 = scmp.lt.s32.totalorder %s2973, 32
          %s2975 = scalar_select %p2974, %s2973, 32
          %s2976 = smul.u32 64, %s2975
          %p2977 = scmp.ne.s32.totalorder 0, %s2976
          %s2978 = smul.addr %s2972, 4
          %s2979 = scalar_lea.vmem %s9, %s2978
          // Predicated region
          $region61: #{forward.1} parent=59 // pred_check
            %p2980 = pneg %p2977
          $region62: #{forward.1} parent=59 // pred_check_branch
            %2982 = sbr.rel (%p2980) target = $region64
          $region63: #{forward.1} parent=59 // pred_region
            // Predicated region
            $region65: #{forward.1} parent=63 // pred_check
              _
            $region66: #{forward.1} parent=63 // pred_check_branch
              %2984 = sbr.rel target = $region68
            $region67: #{forward.1} parent=63 // pred_region
              // Predicated region
              $region87: #{forward.1} parent=67 // pred_check
                _
              $region88: #{forward.1} parent=67 // pred_check_branch
                %3095 = sbr.rel (0) target = $region90
              $region89: #{forward.1} parent=67 // pred_region
                %s3097 = sshrl.u32 %s2975, 5
                // While loop
                $region91: #{forward.1} parent=89 // loop_pre_header
                  _
                $region92: #{forward.1} parent=89 // loop_header
                  %s3099 = sphi 0, %s3101
                  %p3100 = scmp.ge.s32.totalorder %s3099, %s3097
                  %s3104 = sphi 0, %s3173
                  %s3105 = sphi %s2968, %s3176
                  %s3106 = sphi %s2979, %s3177
                $region93: #{forward.1} parent=89 // loop_header_branch
                  %3103 = sbr.rel (%p3100) target = $region97
                $region94: #{forward.1} parent=89 // loop_body
                  %v3107 = vld [vmem:[%s3105] sm:$0xf]
                  %3108 = vst [vmem:[%s3106] sm:$0xf] %v3107
                  %v3109 = vld [vmem:[%s3105 + $0x4] sm:$0xf]
                  %3110 = vst [vmem:[%s3106 + $0x4] sm:$0xf] %v3109
                  %v3111 = vld [vmem:[%s3105 + $0x8] sm:$0xf]
                  %3112 = vst [vmem:[%s3106 + $0x8] sm:$0xf] %v3111
                  %v3113 = vld [vmem:[%s3105 + $0xc] sm:$0xf]
                  %3114 = vst [vmem:[%s3106 + $0xc] sm:$0xf] %v3113
                  %v3115 = vld [vmem:[%s3105 + $0x10] sm:$0xf]
                  %3116 = vst [vmem:[%s3106 + $0x10] sm:$0xf] %v3115
                  %v3117 = vld [vmem:[%s3105 + $0x14] sm:$0xf]
                  %3118 = vst [vmem:[%s3106 + $0x14] sm:$0xf] %v3117
                  %v3119 = vld [vmem:[%s3105 + $0x18] sm:$0xf]
                  %3120 = vst [vmem:[%s3106 + $0x18] sm:$0xf] %v3119
                  %v3121 = vld [vmem:[%s3105 + $0x1c] sm:$0xf]
                  %3122 = vst [vmem:[%s3106 + $0x1c] sm:$0xf] %v3121
                  %v3123 = vld [vmem:[%s3105 + $0x20] sm:$0xf]
                  %3124 = vst [vmem:[%s3106 + $0x20] sm:$0xf] %v3123
                  %v3125 = vld [vmem:[%s3105 + $0x24] sm:$0xf]
                  %3126 = vst [vmem:[%s3106 + $0x24] sm:$0xf] %v3125
                  %v3127 = vld [vmem:[%s3105 + $0x28] sm:$0xf]
                  %3128 = vst [vmem:[%s3106 + $0x28] sm:$0xf] %v3127
                  %v3129 = vld [vmem:[%s3105 + $0x2c] sm:$0xf]
                  %3130 = vst [vmem:[%s3106 + $0x2c] sm:$0xf] %v3129
                  %v3131 = vld [vmem:[%s3105 + $0x30] sm:$0xf]
                  %3132 = vst [vmem:[%s3106 + $0x30] sm:$0xf] %v3131
                  %v3133 = vld [vmem:[%s3105 + $0x34] sm:$0xf]
                  %3134 = vst [vmem:[%s3106 + $0x34] sm:$0xf] %v3133
                  %v3135 = vld [vmem:[%s3105 + $0x38] sm:$0xf]
                  %3136 = vst [vmem:[%s3106 + $0x38] sm:$0xf] %v3135
                  %v3137 = vld [vmem:[%s3105 + $0x3c] sm:$0xf]
                  %3138 = vst [vmem:[%s3106 + $0x3c] sm:$0xf] %v3137
                  %v3139 = vld [vmem:[%s3105 + $0x40] sm:$0xf]
                  %3140 = vst [vmem:[%s3106 + $0x40] sm:$0xf] %v3139
                  %v3141 = vld [vmem:[%s3105 + $0x44] sm:$0xf]
                  %3142 = vst [vmem:[%s3106 + $0x44] sm:$0xf] %v3141
                  %v3143 = vld [vmem:[%s3105 + $0x48] sm:$0xf]
                  %3144 = vst [vmem:[%s3106 + $0x48] sm:$0xf] %v3143
                  %v3145 = vld [vmem:[%s3105 + $0x4c] sm:$0xf]
                  %3146 = vst [vmem:[%s3106 + $0x4c] sm:$0xf] %v3145
                  %v3147 = vld [vmem:[%s3105 + $0x50] sm:$0xf]
                  %3148 = vst [vmem:[%s3106 + $0x50] sm:$0xf] %v3147
                  %v3149 = vld [vmem:[%s3105 + $0x54] sm:$0xf]
                  %3150 = vst [vmem:[%s3106 + $0x54] sm:$0xf] %v3149
                  %v3151 = vld [vmem:[%s3105 + $0x58] sm:$0xf]
                  %3152 = vst [vmem:[%s3106 + $0x58] sm:$0xf] %v3151
                  %v3153 = vld [vmem:[%s3105 + $0x5c] sm:$0xf]
                  %3154 = vst [vmem:[%s3106 + $0x5c] sm:$0xf] %v3153
                  %v3155 = vld [vmem:[%s3105 + $0x60] sm:$0xf]
                  %3156 = vst [vmem:[%s3106 + $0x60] sm:$0xf] %v3155
                  %v3157 = vld [vmem:[%s3105 + $0x64] sm:$0xf]
                  %3158 = vst [vmem:[%s3106 + $0x64] sm:$0xf] %v3157
                  %v3159 = vld [vmem:[%s3105 + $0x68] sm:$0xf]
                  %3160 = vst [vmem:[%s3106 + $0x68] sm:$0xf] %v3159
                  %v3161 = vld [vmem:[%s3105 + $0x6c] sm:$0xf]
                  %3162 = vst [vmem:[%s3106 + $0x6c] sm:$0xf] %v3161
                  %v3163 = vld [vmem:[%s3105 + $0x70] sm:$0xf]
                  %3164 = vst [vmem:[%s3106 + $0x70] sm:$0xf] %v3163
                  %v3165 = vld [vmem:[%s3105 + $0x74] sm:$0xf]
                  %3166 = vst [vmem:[%s3106 + $0x74] sm:$0xf] %v3165
                  %v3167 = vld [vmem:[%s3105 + $0x78] sm:$0xf]
                  %3168 = vst [vmem:[%s3106 + $0x78] sm:$0xf] %v3167
                  %v3169 = vld [vmem:[%s3105 + $0x7c] sm:$0xf]
                  %3170 = vst [vmem:[%s3106 + $0x7c] sm:$0xf] %v3169
                  %s3171 = sadd.s32 1, %s3104
                  %p3172 = scmp.ge.s32.totalorder %s3171, %s3097
                  %s3173 = scalar_select %p3172, 0, %s3171
                  %s3174 = smul.u32 %s3173, 128
                  %s3175 = smul.u32 %s3173, 128
                  %s3176 = scalar_lea.vmem %s2968, %s3174 [#allocation2]
                  %s3177 = scalar_lea.vmem %s2979, %s3175
                $region95: #{forward.1} parent=89 // loop_footer
                  %s3101 = sadd.s32 %s3099, 1
                $region96: #{forward.1} parent=89 // loop_footer_branch
                  %3098 = sbr.rel target = $region92
                $region97: #{forward.1} parent=89 // loop_exit
                  _
                %s3178 = sshrl.u32 %s2975, 5
                %s3179 = sand.u32 %s2975, 31
                %s3180 = smul.u32 %s3178, 32
                %s3181 = smul.u32 4, %s3180
                %s3182 = scalar_lea.vmem %s2968, %s3181 [#allocation2]
                %s3183 = smul.u32 4, %s3180
                %s3184 = scalar_lea.vmem %s2979, %s3183
                // While loop
                $region98: #{forward.1} parent=89 // loop_pre_header
                  _
                $region99: #{forward.1} parent=89 // loop_header
                  %s3186 = sphi 0, %s3188
                  %p3187 = scmp.ge.s32.totalorder %s3186, %s3179
                  %s3191 = sphi 0, %s3198
                  %s3192 = sphi %s3182, %s3201
                  %s3193 = sphi %s3184, %s3202
                $region100: #{forward.1} parent=89 // loop_header_branch
                  %3190 = sbr.rel (%p3187) target = $region104
                $region101: #{forward.1} parent=89 // loop_body
                  %v3194 = vld [vmem:[%s3192] sm:$0xf]
                  %3195 = vst [vmem:[%s3193] sm:$0xf] %v3194
                  %s3196 = sadd.s32 1, %s3191
                  %p3197 = scmp.ge.s32.totalorder %s3196, %s3179
                  %s3198 = scalar_select %p3197, 0, %s3196
                  %s3199 = smul.u32 %s3198, 4
                  %s3200 = smul.u32 %s3198, 4
                  %s3201 = scalar_lea.vmem %s3182, %s3199 [#allocation2]
                  %s3202 = scalar_lea.vmem %s3184, %s3200
                $region102: #{forward.1} parent=89 // loop_footer
                  %s3188 = sadd.s32 %s3186, 1
                $region103: #{forward.1} parent=89 // loop_footer_branch
                  %3185 = sbr.rel target = $region99
                $region104: #{forward.1} parent=89 // loop_exit
                  _
              $region90: #{forward.1} parent=67 // pred_fallthru
                _
            $region68: #{forward.1} parent=63 // pred_fallthru
              _
            // Predicated region
            $region69: #{forward.1} parent=63 // pred_check
              _
            $region70: #{forward.1} parent=63 // pred_check_branch
              %2986 = sbr.rel (0) target = $region72
            $region71: #{forward.1} parent=63 // pred_region
              %s2988 = sshrl.u32 %s2975, 5
              // While loop
              $region73: #{forward.1} parent=71 // loop_pre_header
                _
              $region74: #{forward.1} parent=71 // loop_header
                %s2990 = sphi 0, %s2992
                %p2991 = scmp.ge.s32.totalorder %s2990, %s2988
                %s2995 = sphi 0, %s3064
                %s2996 = sphi %s2968, %s3067
                %s2997 = sphi %s2979, %s3068
              $region75: #{forward.1} parent=71 // loop_header_branch
                %2994 = sbr.rel (%p2991) target = $region79
              $region76: #{forward.1} parent=71 // loop_body
                %v2998 = vld [vmem:[%s2996] sm:$0xf]
                %2999 = vst [vmem:[%s2997] sm:$0xf] %v2998
                %v3000 = vld [vmem:[%s2996 + $0x4] sm:$0xf]
                %3001 = vst [vmem:[%s2997 + $0x4] sm:$0xf] %v3000
                %v3002 = vld [vmem:[%s2996 + $0x8] sm:$0xf]
                %3003 = vst [vmem:[%s2997 + $0x8] sm:$0xf] %v3002
                %v3004 = vld [vmem:[%s2996 + $0xc] sm:$0xf]
                %3005 = vst [vmem:[%s2997 + $0xc] sm:$0xf] %v3004
                %v3006 = vld [vmem:[%s2996 + $0x10] sm:$0xf]
                %3007 = vst [vmem:[%s2997 + $0x10] sm:$0xf] %v3006
                %v3008 = vld [vmem:[%s2996 + $0x14] sm:$0xf]
                %3009 = vst [vmem:[%s2997 + $0x14] sm:$0xf] %v3008
                %v3010 = vld [vmem:[%s2996 + $0x18] sm:$0xf]
                %3011 = vst [vmem:[%s2997 + $0x18] sm:$0xf] %v3010
                %v3012 = vld [vmem:[%s2996 + $0x1c] sm:$0xf]
                %3013 = vst [vmem:[%s2997 + $0x1c] sm:$0xf] %v3012
                %v3014 = vld [vmem:[%s2996 + $0x20] sm:$0xf]
                %3015 = vst [vmem:[%s2997 + $0x20] sm:$0xf] %v3014
                %v3016 = vld [vmem:[%s2996 + $0x24] sm:$0xf]
                %3017 = vst [vmem:[%s2997 + $0x24] sm:$0xf] %v3016
                %v3018 = vld [vmem:[%s2996 + $0x28] sm:$0xf]
                %3019 = vst [vmem:[%s2997 + $0x28] sm:$0xf] %v3018
                %v3020 = vld [vmem:[%s2996 + $0x2c] sm:$0xf]
                %3021 = vst [vmem:[%s2997 + $0x2c] sm:$0xf] %v3020
                %v3022 = vld [vmem:[%s2996 + $0x30] sm:$0xf]
                %3023 = vst [vmem:[%s2997 + $0x30] sm:$0xf] %v3022
                %v3024 = vld [vmem:[%s2996 + $0x34] sm:$0xf]
                %3025 = vst [vmem:[%s2997 + $0x34] sm:$0xf] %v3024
                %v3026 = vld [vmem:[%s2996 + $0x38] sm:$0xf]
                %3027 = vst [vmem:[%s2997 + $0x38] sm:$0xf] %v3026
                %v3028 = vld [vmem:[%s2996 + $0x3c] sm:$0xf]
                %3029 = vst [vmem:[%s2997 + $0x3c] sm:$0xf] %v3028
                %v3030 = vld [vmem:[%s2996 + $0x40] sm:$0xf]
                %3031 = vst [vmem:[%s2997 + $0x40] sm:$0xf] %v3030
                %v3032 = vld [vmem:[%s2996 + $0x44] sm:$0xf]
                %3033 = vst [vmem:[%s2997 + $0x44] sm:$0xf] %v3032
                %v3034 = vld [vmem:[%s2996 + $0x48] sm:$0xf]
                %3035 = vst [vmem:[%s2997 + $0x48] sm:$0xf] %v3034
                %v3036 = vld [vmem:[%s2996 + $0x4c] sm:$0xf]
                %3037 = vst [vmem:[%s2997 + $0x4c] sm:$0xf] %v3036
                %v3038 = vld [vmem:[%s2996 + $0x50] sm:$0xf]
                %3039 = vst [vmem:[%s2997 + $0x50] sm:$0xf] %v3038
                %v3040 = vld [vmem:[%s2996 + $0x54] sm:$0xf]
                %3041 = vst [vmem:[%s2997 + $0x54] sm:$0xf] %v3040
                %v3042 = vld [vmem:[%s2996 + $0x58] sm:$0xf]
                %3043 = vst [vmem:[%s2997 + $0x58] sm:$0xf] %v3042
                %v3044 = vld [vmem:[%s2996 + $0x5c] sm:$0xf]
                %3045 = vst [vmem:[%s2997 + $0x5c] sm:$0xf] %v3044
                %v3046 = vld [vmem:[%s2996 + $0x60] sm:$0xf]
                %3047 = vst [vmem:[%s2997 + $0x60] sm:$0xf] %v3046
                %v3048 = vld [vmem:[%s2996 + $0x64] sm:$0xf]
                %3049 = vst [vmem:[%s2997 + $0x64] sm:$0xf] %v3048
                %v3050 = vld [vmem:[%s2996 + $0x68] sm:$0xf]
                %3051 = vst [vmem:[%s2997 + $0x68] sm:$0xf] %v3050
                %v3052 = vld [vmem:[%s2996 + $0x6c] sm:$0xf]
                %3053 = vst [vmem:[%s2997 + $0x6c] sm:$0xf] %v3052
                %v3054 = vld [vmem:[%s2996 + $0x70] sm:$0xf]
                %3055 = vst [vmem:[%s2997 + $0x70] sm:$0xf] %v3054
                %v3056 = vld [vmem:[%s2996 + $0x74] sm:$0xf]
                %3057 = vst [vmem:[%s2997 + $0x74] sm:$0xf] %v3056
                %v3058 = vld [vmem:[%s2996 + $0x78] sm:$0xf]
                %3059 = vst [vmem:[%s2997 + $0x78] sm:$0xf] %v3058
                %v3060 = vld [vmem:[%s2996 + $0x7c] sm:$0xf]
                %3061 = vst [vmem:[%s2997 + $0x7c] sm:$0xf] %v3060
                %s3062 = sadd.s32 1, %s2995
                %p3063 = scmp.ge.s32.totalorder %s3062, %s2988
                %s3064 = scalar_select %p3063, 0, %s3062
                %s3065 = smul.u32 %s3064, 128
                %s3066 = smul.u32 %s3064, 128
                %s3067 = scalar_lea.vmem %s2968, %s3065 [#allocation2]
                %s3068 = scalar_lea.vmem %s2979, %s3066
              $region77: #{forward.1} parent=71 // loop_footer
                %s2992 = sadd.s32 %s2990, 1
              $region78: #{forward.1} parent=71 // loop_footer_branch
                %2989 = sbr.rel target = $region74
              $region79: #{forward.1} parent=71 // loop_exit
                _
              %s3069 = sshrl.u32 %s2975, 5
              %s3070 = sand.u32 %s2975, 31
              %s3071 = smul.u32 %s3069, 32
              %s3072 = smul.u32 4, %s3071
              %s3073 = scalar_lea.vmem %s2968, %s3072 [#allocation2]
              %s3074 = smul.u32 4, %s3071
              %s3075 = scalar_lea.vmem %s2979, %s3074
              // While loop
              $region80: #{forward.1} parent=71 // loop_pre_header
                _
              $region81: #{forward.1} parent=71 // loop_header
                %s3077 = sphi 0, %s3079
                %p3078 = scmp.ge.s32.totalorder %s3077, %s3070
                %s3082 = sphi 0, %s3089
                %s3083 = sphi %s3073, %s3092
                %s3084 = sphi %s3075, %s3093
              $region82: #{forward.1} parent=71 // loop_header_branch
                %3081 = sbr.rel (%p3078) target = $region86
              $region83: #{forward.1} parent=71 // loop_body
                %v3085 = vld [vmem:[%s3083] sm:$0xf]
                %3086 = vst [vmem:[%s3084] sm:$0xf] %v3085
                %s3087 = sadd.s32 1, %s3082
                %p3088 = scmp.ge.s32.totalorder %s3087, %s3070
                %s3089 = scalar_select %p3088, 0, %s3087
                %s3090 = smul.u32 %s3089, 4
                %s3091 = smul.u32 %s3089, 4
                %s3092 = scalar_lea.vmem %s3073, %s3090 [#allocation2]
                %s3093 = scalar_lea.vmem %s3075, %s3091
              $region84: #{forward.1} parent=71 // loop_footer
                %s3079 = sadd.s32 %s3077, 1
              $region85: #{forward.1} parent=71 // loop_footer_branch
                %3076 = sbr.rel target = $region81
              $region86: #{forward.1} parent=71 // loop_exit
                _
            $region72: #{forward.1} parent=63 // pred_fallthru
              _
          $region64: #{forward.1} parent=59 // pred_fallthru
            _
          %3203 = vnop
        $region60: #{forward.1} parent=55 // pred_fallthru
          _
      $region56: #{forward.1} parent=5 // pred_fallthru
        _
      %p3204 = scmp.le.s32.totalorder 2, %s15
      // Predicated region
      $region105: #{forward.1} parent=5 // pred_check
        %p3205 = pneg %p3204
      $region106: #{forward.1} parent=5 // pred_check_branch
        %3207 = sbr.rel (%p3205) target = $region108
      $region107: #{forward.1} parent=5 // pred_region
        %s3208 = ssub.s32 %s15, 2
        // Predicated region
        $region109: #{forward.1} parent=107 // pred_check
          %p3209 = pneg %p248
        $region110: #{forward.1} parent=107 // pred_check_branch
          %3211 = sbr.rel (%p3209) target = $region112
        $region111: #{forward.1} parent=107 // pred_region
          %s3212 = sand.u32 %s233, 1
          %s3213 = sand.u32 %s233, 1
          %s3214 = smul.addr %s3213, 128
          %s3215 = scalar_lea.vmem [#allocation2], %s3214
        $region112: #{forward.1} parent=107 // pred_fallthru
          _
      $region108: #{forward.1} parent=5 // pred_fallthru
        _
    $region6: #{forward.1} parent=1 // loop_footer
      %s19 = sadd.s32 1, %s15
    $region7: #{forward.1} parent=1 // loop_footer_branch
      %14 = sbr.rel target = $region3
    $region8: #{forward.1} parent=1 // loop_exit
      _

</llo_original>
